<compile_context>
chip_gen: v7x
topology: tpu7x:2x2x1
jax: 0.10.0
libtpu: 0.0.40
codegen_flags: <defaults>
</compile_context>

<pallas_src>
import functools

import jax
import jax.numpy as jnp
from jax.experimental import pallas as pl
from jax.experimental.pallas import tpu as pltpu

# ----------------------- small synthetic DINOv2 config -----------------------
BATCH = 2
IN_CHANS = 3
IMG = 16
PATCH = 8
HIDDEN = 64                 # backbone.config.hidden_size (prev_chs)
NUM_HEADS = 2
HEAD_DIM = HIDDEN // NUM_HEADS
NUM_LAYERS = 2
MLP_DIM = 4 * HIDDEN
EMBED_DIM = 32              # adapter head output dim (embed_dim > 0 branch)
EMBED_PAD = 128             # lane-dense output store; wrapper slices to EMBED_DIM
LN_EPS = 1e-6               # dinov2 layer_norm_eps
DTYPE = jnp.float32
WDTYPE = jnp.bfloat16       # MXU operand dtype (f32 accumulation)


# --------------------------- single fused Pallas kernel ----------------------
def _dinov2_fused_kernel(
    patches_ref, pos_ref, patch_w_ref,
    wqkv_ref, bqkv_ref, wo_ref, w1_ref, b1_ref, w2_ref,
    lvec_ref, fvec_ref, head_w_ref,
    out_ref,
    *, seq, seq_pad,
):
    f32, bf16 = jnp.float32, jnp.bfloat16
    D, Dh = HIDDEN, HEAD_DIM

    def layer_norm(x, g, b):
        mean = jnp.mean(x, axis=-1, keepdims=True)
        xc = x - mean
        var = jnp.mean(xc * xc, axis=-1, keepdims=True)   # biased var, like nn.LayerNorm
        return xc * jax.lax.rsqrt(var + LN_EPS) * g + b

    def gelu_exact(x):
        # TODO(synk): lax.erf has no guaranteed Mosaic lowering; exact erf-GELU is
        # reproduced with the Abramowitz–Stegun 7.1.26 erf approximation
        # (|err| < 1.5e-7, f32-accurate), with its divide on the EUP via
        # pl.reciprocal(approx=True).
        z = x * f32(0.7071067811865476)                    # x / sqrt(2)
        az = jnp.abs(z)
        t = pl.reciprocal(1.0 + f32(0.3275911) * az, approx=True)
        poly = t * (f32(0.254829592) + t * (f32(-0.284496736) + t * (f32(1.421413741)
               + t * (f32(-1.453152027) + t * f32(1.061405429)))))
        erf_abs = 1.0 - poly * jnp.exp(-az * az)
        erf_z = jnp.where(z >= 0, erf_abs, -erf_abs)
        return f32(0.5) * x * (1.0 + erf_z)

    # ---- Dinov2Embeddings: patch conv as one matmul.  cls_token and the patch
    # bias were folded (exactly) into pos_ref in the wrapper, so this is just
    # matmul + add.  dropout p=0.0 -> identity. ----
    hidden = jnp.dot(patches_ref[0].astype(bf16), patch_w_ref[...],
                     preferred_element_type=f32) + pos_ref[...]      # (seq_pad, D)

    # keys beyond the real sequence (row padding to seq_pad) are masked out
    key_valid = jax.lax.broadcasted_iota(jnp.int32, (seq_pad, seq_pad), 1) < seq
    scale = f32(1.0 / (Dh ** 0.5))

    # ---- Dinov2Encoder (layers unrolled; weights indexed statically) ----
    # TODO(synk): at real depth (12+ layers) move layers onto an 'arbitrary' grid
    # axis with Buffered(2) per-layer bf16 weight streaming and an explicit
    # vmem_limit_bytes budget per generation (64 MiB v7x vs 128 MiB v5e/v6e),
    # instead of a Python unroll with fully VMEM-resident weights.
    for l in range(NUM_LAYERS):
        lv = lvec_ref[l]                                   # (8, D) packed vectors
        ln1_g, ln1_b = lv[0:1], lv[1:2]
        bo, ls1 = lv[2:3], lv[3:4]
        ln2_g, ln2_b = lv[4:5], lv[5:6]
        b2, ls2 = lv[6:7], lv[7:8]

        resid = hidden
        h = layer_norm(hidden, ln1_g, ln1_b)

        # fused QKV projection: one (D, 3D) matmul per layer (bf16 in, f32 acc)
        qkv = jnp.dot(h.astype(bf16), wqkv_ref[l],
                      preferred_element_type=f32) + bqkv_ref[l]       # (seq_pad, 3D)

        ctx_heads = []
        # TODO(synk): at real head counts / head_dim, use a head grid axis or a
        # (H, S, Dh) batched einsum instead of 32-lane static slices.
        for hd in range(NUM_HEADS):
            lo = hd * Dh
            qh = qkv[:, lo:lo + Dh] * scale
            kh = qkv[:, D + lo:D + lo + Dh]
            vh = qkv[:, 2 * D + lo:2 * D + lo + Dh]
            s = jax.lax.dot_general(qh.astype(bf16), kh.astype(bf16),
                                    (((1,), (1,)), ((), ())),
                                    preferred_element_type=f32)       # (seq_pad, seq_pad)
            s = jnp.where(key_valid, s, f32(-1e30))
            m = jnp.max(s, axis=-1, keepdims=True)
            e = jnp.exp(s - m)
            p = e * pl.reciprocal(jnp.sum(e, axis=-1, keepdims=True), approx=True)
            ctx_heads.append(jnp.dot(p.astype(bf16), vh.astype(bf16),
                                     preferred_element_type=f32))
        ctx = jnp.concatenate(ctx_heads, axis=-1)          # (seq_pad, D)
        attn = jnp.dot(ctx.astype(bf16), wo_ref[l],
                       preferred_element_type=f32) + bo    # single out-projection
        hidden = attn * ls1 + resid                        # LayerScale1 + residual

        resid2 = hidden
        h2 = layer_norm(hidden, ln2_g, ln2_b)
        m1 = jnp.dot(h2.astype(bf16), w1_ref[l], preferred_element_type=f32) + b1_ref[l]
        m1 = gelu_exact(m1)                                # GELU fused in-kernel
        m2 = jnp.dot(m1.astype(bf16), w2_ref[l], preferred_element_type=f32) + b2
        hidden = m2 * ls2 + resid2                         # LayerScale2 + residual

    # ---- pooler_output: CLS row pooled BEFORE the final LayerNorm (exact, since
    # LN is row-wise), then the adapter head projection (lane-padded columns). ----
    fv = fvec_ref[...]                                     # (2, D): lnf gamma / beta
    pooled = layer_norm(hidden[0:1, :], fv[0:1], fv[1:2])  # (1, D)
    out = jnp.dot(pooled.astype(bf16), head_w_ref[...], preferred_element_type=f32)
    out_ref[0] = out.astype(out_ref.dtype)


# --------------------------- parameters (synthetic) ---------------------------
def init_params(key):
    keys = iter(jax.random.split(key, 64))

    def nrm(shape, std=0.02):
        return std * jax.random.normal(next(keys), shape, dtype=jnp.float32)

    D, L, F = HIDDEN, NUM_LAYERS, MLP_DIM
    n_patches = (IMG // PATCH) ** 2

    wqkv, bqkv, wo, w1, b1, w2, lvec = [], [], [], [], [], [], []
    ones, zeros = jnp.ones((D,), jnp.float32), jnp.zeros((D,), jnp.float32)
    for _ in range(L):
        wq, bq = nrm((D, D)), nrm((D,))
        wk, bk = nrm((D, D)), nrm((D,))
        wv, bv = nrm((D, D)), nrm((D,))
        wo_l, bo = nrm((D, D)), nrm((D,))
        w1_l, b1_l = nrm((D, F)), nrm((F,))
        w2_l, b2_l = nrm((F, D)), nrm((D,))
        ls1 = 1.0 + nrm((D,))                              # LayerScale lambda1
        ls2 = 1.0 + nrm((D,))                              # LayerScale lambda2
        wqkv.append(jnp.concatenate([wq, wk, wv], axis=1))           # (D, 3D) (in,out)
        bqkv.append(jnp.concatenate([bq, bk, bv]).reshape(1, 3 * D))
        wo.append(wo_l)
        w1.append(w1_l); b1.append(b1_l.reshape(1, F))
        w2.append(w2_l)
        # packed per-layer vectors: ln1_g, ln1_b, bo, ls1, ln2_g, ln2_b, b2, ls2
        lvec.append(jnp.stack([ones, zeros, bo, ls1, ones, zeros, b2_l, ls2], axis=0))

    head_w = jnp.zeros((D, EMBED_PAD), jnp.float32).at[:, :EMBED_DIM].set(
        nrm((D, EMBED_DIM)))                               # head.proj (bias=False)

    return {
        "wqkv": jnp.stack(wqkv).astype(WDTYPE),            # (L, D, 3D)  bf16
        "bqkv": jnp.stack(bqkv),                           # (L, 1, 3D)  f32
        "wo":   jnp.stack(wo).astype(WDTYPE),              # (L, D, D)   bf16
        "w1":   jnp.stack(w1).astype(WDTYPE),              # (L, D, F)   bf16
        "b1":   jnp.stack(b1),                             # (L, 1, F)   f32
        "w2":   jnp.stack(w2).astype(WDTYPE),              # (L, F, D)   bf16
        "lvec": jnp.stack(lvec),                           # (L, 8, D)   f32
        "cls_token": nrm((1, D)),                          # Dinov2Embeddings.cls_token
        "pos_emb": nrm((n_patches + 1, D)),                # position_embeddings
        # conv weight stored as (C*P*P, D) == torch (D, C, P, P).reshape(D, -1).T
        "patch_w": nrm((IN_CHANS * PATCH * PATCH, D)).astype(WDTYPE),
        "patch_b": nrm((1, D)),
        # mask_token exists in the torch module but is unused in forward
        "fvec": jnp.stack([ones, zeros], axis=0),          # final-LN gamma / beta
        "head_w": head_w.astype(WDTYPE),                   # (D, EMBED_PAD) bf16
    }


# --------------------------------- forward -----------------------------------
def dinov2_forward(params, x):
    """Equivalent of DINOv2Model.forward: backbone pooler_output (CLS after LN) -> head."""
    B, C, Hh, Ww = x.shape
    nh, nw = Hh // PATCH, Ww // PATCH
    n_patches = nh * nw
    S = n_patches + 1
    SP = ((S + 15) // 16) * 16      # token rows padded: f32 sublane(8) + bf16 pack(16)
    CPP = C * PATCH * PATCH

    # Layout plumbing / exact parameter folding only (plain JAX): im2col for the
    # stride-P patch conv; token rows padded to SP; cls_token and patch-embed bias
    # folded into the per-position additive term (row 0 of the padded patches is
    # zero, so row 0 of the kernel matmul contributes nothing).
    patches = (x.reshape(B, C, nh, PATCH, nw, PATCH)
                 .transpose(0, 2, 4, 1, 3, 5)
                 .reshape(B, n_patches, CPP))
    patches_pad = jnp.zeros((B, SP, CPP), x.dtype).at[:, 1:S, :].set(patches)
    pos_add = jnp.zeros((SP, HIDDEN), jnp.float32)
    pos_add = pos_add.at[0].set(params["pos_emb"][0] + params["cls_token"][0])
    pos_add = pos_add.at[1:S].set(params["pos_emb"][1:] + params["patch_b"][0])

    inputs = [patches_pad, pos_add, params["patch_w"],
              params["wqkv"], params["bqkv"], params["wo"],
              params["w1"], params["b1"], params["w2"],
              params["lvec"], params["fvec"], params["head_w"]]

    def rep_spec(a):
        return pl.BlockSpec(a.shape, lambda b, _nd=a.ndim: (0,) * _nd)

    in_specs = [pl.BlockSpec((1, SP, CPP), lambda b: (b, 0, 0))]      # per-image patches
    in_specs += [rep_spec(a) for a in inputs[1:]]                     # weights: resident

    # TODO(synk): at real DINOv2-base sizes (HIDDEN=768, S=257, 12 layers) the
    # weights no longer fit VMEM-resident on v7x (64 MiB): add an 'arbitrary'
    # layer grid axis streaming per-layer bf16 weights (Buffered(2)) and set
    # vmem_limit_bytes per generation; the per-image 'parallel' axis stays.
    out = pl.pallas_call(
        functools.partial(_dinov2_fused_kernel, seq=S, seq_pad=SP),
        out_shape=jax.ShapeDtypeStruct((B, 1, EMBED_PAD), x.dtype),
        grid=(B,),
        in_specs=in_specs,
        out_specs=pl.BlockSpec((1, 1, EMBED_PAD), lambda b: (b, 0, 0)),
        compiler_params=pltpu.CompilerParams(
            dimension_semantics=("parallel",)),
    )(*inputs)
    return out[:, 0, :EMBED_DIM]


# ----------------------------------- main -------------------------------------
if __name__ == "__main__":
    key = jax.random.PRNGKey(0)
    pkey, xkey = jax.random.split(key)
    params = init_params(pkey)
    x = jax.random.normal(xkey, (BATCH, IN_CHANS, IMG, IMG), dtype=DTYPE)

    fwd = jax.jit(dinov2_forward)
    out = jax.block_until_ready(fwd(params, x))
    assert out.shape == (BATCH, EMBED_DIM), out.shape
    assert bool(jnp.all(jnp.isfinite(out)))
    print("KERNEL_OK")
</pallas_src>

<mosaic_0001>
module attributes {stable_mosaic.version = 11 : i64} {
  func.func @_dinov2_fused_kernel(%arg0: i32, %arg1: memref<1x16x192xf32, #tpu.memory_space<vmem>>, %arg2: memref<16x64xf32, #tpu.memory_space<vmem>>, %arg3: memref<192x64xbf16, #tpu.memory_space<vmem>>, %arg4: memref<2x64x192xbf16, #tpu.memory_space<vmem>>, %arg5: memref<2x1x192xf32, #tpu.memory_space<vmem>>, %arg6: memref<2x64x64xbf16, #tpu.memory_space<vmem>>, %arg7: memref<2x64x256xbf16, #tpu.memory_space<vmem>>, %arg8: memref<2x1x256xf32, #tpu.memory_space<vmem>>, %arg9: memref<2x256x64xbf16, #tpu.memory_space<vmem>>, %arg10: memref<2x8x64xf32, #tpu.memory_space<vmem>>, %arg11: memref<2x64xf32, #tpu.memory_space<vmem>>, %arg12: memref<64x128xbf16, #tpu.memory_space<vmem>>, %arg13: memref<1x1x128xf32, #tpu.memory_space<vmem>>) attributes {dimension_semantics = [#tpu.dimension_semantics<parallel>], iteration_bounds = array<i64: 2>, scalar_prefetch = 0 : i64, scratch_operands = 0 : i64, tpu.core_type = #tpu.core_type<tc>, window_params = [{transform_indices = @transform_0, window_bounds = array<i64: 1, 16, 192>}, {pipeline_mode = #tpu.pipeline_mode<synchronous>, transform_indices = @transform_1, window_bounds = array<i64: 16, 64>}, {pipeline_mode = #tpu.pipeline_mode<synchronous>, transform_indices = @transform_2, window_bounds = array<i64: 192, 64>}, {pipeline_mode = #tpu.pipeline_mode<synchronous>, transform_indices = @transform_3, window_bounds = array<i64: 2, 64, 192>}, {pipeline_mode = #tpu.pipeline_mode<synchronous>, transform_indices = @transform_4, window_bounds = array<i64: 2, 1, 192>}, {pipeline_mode = #tpu.pipeline_mode<synchronous>, transform_indices = @transform_5, window_bounds = array<i64: 2, 64, 64>}, {pipeline_mode = #tpu.pipeline_mode<synchronous>, transform_indices = @transform_6, window_bounds = array<i64: 2, 64, 256>}, {pipeline_mode = #tpu.pipeline_mode<synchronous>, transform_indices = @transform_7, window_bounds = array<i64: 2, 1, 256>}, {pipeline_mode = #tpu.pipeline_mode<synchronous>, transform_indices = @transform_8, window_bounds = array<i64: 2, 256, 64>}, {pipeline_mode = #tpu.pipeline_mode<synchronous>, transform_indices = @transform_9, window_bounds = array<i64: 2, 8, 64>}, {pipeline_mode = #tpu.pipeline_mode<synchronous>, transform_indices = @transform_10, window_bounds = array<i64: 2, 64>}, {pipeline_mode = #tpu.pipeline_mode<synchronous>, transform_indices = @transform_11, window_bounds = array<i64: 64, 128>}, {transform_indices = @transform_12, window_bounds = array<i64: 1, 1, 128>}]} {
    %c0 = arith.constant 0 : index
    %c0_0 = arith.constant 0 : index
    %c0_1 = arith.constant 0 : index
    %0 = vector.load %arg1[%c0, %c0_0, %c0_1] : memref<1x16x192xf32, #tpu.memory_space<vmem>>, vector<1x16x192xf32>
    %1 = vector.shape_cast %0 : vector<1x16x192xf32> to vector<16x192xf32>
    %2 = arith.truncf %1 : vector<16x192xf32> to vector<16x192xbf16>
    %c0_2 = arith.constant 0 : index
    %c0_3 = arith.constant 0 : index
    %3 = vector.load %arg3[%c0_2, %c0_3] : memref<192x64xbf16, #tpu.memory_space<vmem>>, vector<192x64xbf16>
    %cst = arith.constant dense<0.000000e+00> : vector<16x64xf32>
    %4 = tpu.matmul %2, %3, %cst {dimension_numbers = #tpu.dot_dimension_numbers<[1], [0], [0], [1], [0, 0, 1, 1], [], []>} : vector<16x192xbf16>, vector<192x64xbf16>, vector<16x64xf32> -> vector<16x64xf32>
    %c0_4 = arith.constant 0 : index
    %c0_5 = arith.constant 0 : index
    %5 = vector.load %arg2[%c0_4, %c0_5] : memref<16x64xf32, #tpu.memory_space<vmem>>, vector<16x64xf32>
    %6 = arith.addf %4, %5 : vector<16x64xf32>
    %7 = tpu.iota {dimensions = array<i32: 1>} : vector<16x16xi32>
    %c5_i32 = arith.constant 5 : i32
    %8 = vector.broadcast %c5_i32 : i32 to vector<16x16xi32>
    %9 = arith.cmpi slt, %7, %8 : vector<16x16xi32>
    %c0_6 = arith.constant 0 : index
    %c0_7 = arith.constant 0 : index
    %c0_8 = arith.constant 0 : index
    %10 = vector.load %arg10[%c0_6, %c0_7, %c0_8] : memref<2x8x64xf32, #tpu.memory_space<vmem>>, vector<1x8x64xf32>
    %11 = vector.shape_cast %10 : vector<1x8x64xf32> to vector<8x64xf32>
    %12 = vector.extract_strided_slice %11 {offsets = [0, 0], sizes = [1, 64], strides = [1, 1]} : vector<8x64xf32> to vector<1x64xf32>
    %13 = vector.extract_strided_slice %11 {offsets = [1, 0], sizes = [1, 64], strides = [1, 1]} : vector<8x64xf32> to vector<1x64xf32>
    %14 = vector.extract_strided_slice %11 {offsets = [2, 0], sizes = [1, 64], strides = [1, 1]} : vector<8x64xf32> to vector<1x64xf32>
    %15 = vector.extract_strided_slice %11 {offsets = [3, 0], sizes = [1, 64], strides = [1, 1]} : vector<8x64xf32> to vector<1x64xf32>
    %16 = vector.extract_strided_slice %11 {offsets = [4, 0], sizes = [1, 64], strides = [1, 1]} : vector<8x64xf32> to vector<1x64xf32>
    %17 = vector.extract_strided_slice %11 {offsets = [5, 0], sizes = [1, 64], strides = [1, 1]} : vector<8x64xf32> to vector<1x64xf32>
    %18 = vector.extract_strided_slice %11 {offsets = [6, 0], sizes = [1, 64], strides = [1, 1]} : vector<8x64xf32> to vector<1x64xf32>
    %19 = vector.extract_strided_slice %11 {offsets = [7, 0], sizes = [1, 64], strides = [1, 1]} : vector<8x64xf32> to vector<1x64xf32>
    %cst_9 = arith.constant dense<0.000000e+00> : vector<16xf32>
    %20 = vector.multi_reduction <add>, %6, %cst_9 [1] : vector<16x64xf32> to vector<16xf32>
    %21 = vector.shape_cast %20 : vector<16xf32> to vector<16x1xf32>
    %cst_10 = arith.constant 6.400000e+01 : f32
    %22 = vector.broadcast %cst_10 : f32 to vector<16x1xf32>
    %23 = arith.divf %21, %22 : vector<16x1xf32>
    %24 = vector.broadcast %23 : vector<16x1xf32> to vector<16x64xf32>
    %25 = arith.subf %6, %24 : vector<16x64xf32>
    %26 = arith.mulf %25, %25 : vector<16x64xf32>
    %cst_11 = arith.constant dense<0.000000e+00> : vector<16xf32>
    %27 = vector.multi_reduction <add>, %26, %cst_11 [1] : vector<16x64xf32> to vector<16xf32>
    %28 = vector.shape_cast %27 : vector<16xf32> to vector<16x1xf32>
    %cst_12 = arith.constant 6.400000e+01 : f32
    %29 = vector.broadcast %cst_12 : f32 to vector<16x1xf32>
    %30 = arith.divf %28, %29 : vector<16x1xf32>
    %cst_13 = arith.constant 9.99999997E-7 : f32
    %31 = vector.broadcast %cst_13 : f32 to vector<16x1xf32>
    %32 = arith.addf %30, %31 : vector<16x1xf32>
    %33 = math.rsqrt %32 : vector<16x1xf32>
    %34 = vector.broadcast %33 : vector<16x1xf32> to vector<16x64xf32>
    %35 = arith.mulf %25, %34 : vector<16x64xf32>
    %36 = vector.broadcast %12 : vector<1x64xf32> to vector<16x64xf32>
    %37 = arith.mulf %35, %36 : vector<16x64xf32>
    %38 = vector.broadcast %13 : vector<1x64xf32> to vector<16x64xf32>
    %39 = arith.addf %37, %38 : vector<16x64xf32>
    %40 = arith.truncf %39 : vector<16x64xf32> to vector<16x64xbf16>
    %c0_14 = arith.constant 0 : index
    %c0_15 = arith.constant 0 : index
    %c0_16 = arith.constant 0 : index
    %41 = vector.load %arg4[%c0_14, %c0_15, %c0_16] : memref<2x64x192xbf16, #tpu.memory_space<vmem>>, vector<1x64x192xbf16>
    %42 = vector.shape_cast %41 : vector<1x64x192xbf16> to vector<64x192xbf16>
    %cst_17 = arith.constant dense<0.000000e+00> : vector<16x192xf32>
    %43 = tpu.matmul %40, %42, %cst_17 {dimension_numbers = #tpu.dot_dimension_numbers<[1], [0], [0], [1], [0, 0, 1, 1], [], []>} : vector<16x64xbf16>, vector<64x192xbf16>, vector<16x192xf32> -> vector<16x192xf32>
    %c0_18 = arith.constant 0 : index
    %c0_19 = arith.constant 0 : index
    %c0_20 = arith.constant 0 : index
    %44 = vector.load %arg5[%c0_18, %c0_19, %c0_20] : memref<2x1x192xf32, #tpu.memory_space<vmem>>, vector<1x1x192xf32>
    %45 = vector.shape_cast %44 : vector<1x1x192xf32> to vector<1x192xf32>
    %46 = vector.broadcast %45 : vector<1x192xf32> to vector<16x192xf32>
    %47 = arith.addf %43, %46 : vector<16x192xf32>
    %48 = vector.extract_strided_slice %47 {offsets = [0, 0], sizes = [16, 32], strides = [1, 1]} : vector<16x192xf32> to vector<16x32xf32>
    %cst_21 = arith.constant 0.176776692 : f32
    %49 = vector.broadcast %cst_21 : f32 to vector<16x32xf32>
    %50 = arith.mulf %48, %49 : vector<16x32xf32>
    %51 = vector.extract_strided_slice %47 {offsets = [0, 64], sizes = [16, 32], strides = [1, 1]} : vector<16x192xf32> to vector<16x32xf32>
    %52 = vector.extract_strided_slice %47 {offsets = [0, 128], sizes = [16, 32], strides = [1, 1]} : vector<16x192xf32> to vector<16x32xf32>
    %53 = arith.truncf %50 : vector<16x32xf32> to vector<16x32xbf16>
    %54 = arith.truncf %51 : vector<16x32xf32> to vector<16x32xbf16>
    %cst_22 = arith.constant dense<0.000000e+00> : vector<16x16xf32>
    %55 = tpu.matmul %53, %54, %cst_22 {dimension_numbers = #tpu.dot_dimension_numbers<[1], [1], [0], [0], [0, 0, 1, 0], [], []>} : vector<16x32xbf16>, vector<16x32xbf16>, vector<16x16xf32> -> vector<16x16xf32>
    %cst_23 = arith.constant -1.000000e+30 : f32
    %56 = vector.broadcast %cst_23 : f32 to vector<16x16xf32>
    %57 = arith.select %9, %55, %56 : vector<16x16xi1>, vector<16x16xf32>
    %cst_24 = arith.constant dense<0xFF800000> : vector<16xf32>
    %58 = vector.multi_reduction <maximumf>, %57, %cst_24 [1] : vector<16x16xf32> to vector<16xf32>
    %59 = vector.shape_cast %58 : vector<16xf32> to vector<16x1xf32>
    %60 = vector.broadcast %59 : vector<16x1xf32> to vector<16x16xf32>
    %61 = arith.subf %57, %60 : vector<16x16xf32>
    %62 = math.exp %61 : vector<16x16xf32>
    %cst_25 = arith.constant dense<0.000000e+00> : vector<16xf32>
    %63 = vector.multi_reduction <add>, %62, %cst_25 [1] : vector<16x16xf32> to vector<16xf32>
    %64 = vector.shape_cast %63 : vector<16xf32> to vector<16x1xf32>
    %65 = tpu.reciprocal %64 {approx = true} : vector<16x1xf32> -> vector<16x1xf32>
    %66 = vector.broadcast %65 : vector<16x1xf32> to vector<16x16xf32>
    %67 = arith.mulf %62, %66 : vector<16x16xf32>
    %68 = arith.truncf %67 : vector<16x16xf32> to vector<16x16xbf16>
    %69 = arith.truncf %52 : vector<16x32xf32> to vector<16x32xbf16>
    %cst_26 = arith.constant dense<0.000000e+00> : vector<16x32xf32>
    %70 = tpu.matmul %68, %69, %cst_26 {dimension_numbers = #tpu.dot_dimension_numbers<[1], [0], [0], [1], [0, 0, 1, 1], [], []>} : vector<16x16xbf16>, vector<16x32xbf16>, vector<16x32xf32> -> vector<16x32xf32>
    %71 = vector.extract_strided_slice %47 {offsets = [0, 32], sizes = [16, 32], strides = [1, 1]} : vector<16x192xf32> to vector<16x32xf32>
    %cst_27 = arith.constant 0.176776692 : f32
    %72 = vector.broadcast %cst_27 : f32 to vector<16x32xf32>
    %73 = arith.mulf %71, %72 : vector<16x32xf32>
    %74 = vector.extract_strided_slice %47 {offsets = [0, 96], sizes = [16, 32], strides = [1, 1]} : vector<16x192xf32> to vector<16x32xf32>
    %75 = vector.extract_strided_slice %47 {offsets = [0, 160], sizes = [16, 32], strides = [1, 1]} : vector<16x192xf32> to vector<16x32xf32>
    %76 = arith.truncf %73 : vector<16x32xf32> to vector<16x32xbf16>
    %77 = arith.truncf %74 : vector<16x32xf32> to vector<16x32xbf16>
    %cst_28 = arith.constant dense<0.000000e+00> : vector<16x16xf32>
    %78 = tpu.matmul %76, %77, %cst_28 {dimension_numbers = #tpu.dot_dimension_numbers<[1], [1], [0], [0], [0, 0, 1, 0], [], []>} : vector<16x32xbf16>, vector<16x32xbf16>, vector<16x16xf32> -> vector<16x16xf32>
    %cst_29 = arith.constant -1.000000e+30 : f32
    %79 = vector.broadcast %cst_29 : f32 to vector<16x16xf32>
    %80 = arith.select %9, %78, %79 : vector<16x16xi1>, vector<16x16xf32>
    %cst_30 = arith.constant dense<0xFF800000> : vector<16xf32>
    %81 = vector.multi_reduction <maximumf>, %80, %cst_30 [1] : vector<16x16xf32> to vector<16xf32>
    %82 = vector.shape_cast %81 : vector<16xf32> to vector<16x1xf32>
    %83 = vector.broadcast %82 : vector<16x1xf32> to vector<16x16xf32>
    %84 = arith.subf %80, %83 : vector<16x16xf32>
    %85 = math.exp %84 : vector<16x16xf32>
    %cst_31 = arith.constant dense<0.000000e+00> : vector<16xf32>
    %86 = vector.multi_reduction <add>, %85, %cst_31 [1] : vector<16x16xf32> to vector<16xf32>
    %87 = vector.shape_cast %86 : vector<16xf32> to vector<16x1xf32>
    %88 = tpu.reciprocal %87 {approx = true} : vector<16x1xf32> -> vector<16x1xf32>
    %89 = vector.broadcast %88 : vector<16x1xf32> to vector<16x16xf32>
    %90 = arith.mulf %85, %89 : vector<16x16xf32>
    %91 = arith.truncf %90 : vector<16x16xf32> to vector<16x16xbf16>
    %92 = arith.truncf %75 : vector<16x32xf32> to vector<16x32xbf16>
    %cst_32 = arith.constant dense<0.000000e+00> : vector<16x32xf32>
    %93 = tpu.matmul %91, %92, %cst_32 {dimension_numbers = #tpu.dot_dimension_numbers<[1], [0], [0], [1], [0, 0, 1, 1], [], []>} : vector<16x16xbf16>, vector<16x32xbf16>, vector<16x32xf32> -> vector<16x32xf32>
    %94 = tpu.concatenate %70, %93 in 1 : vector<16x32xf32>, vector<16x32xf32> -> vector<16x64xf32>
    %95 = arith.truncf %94 : vector<16x64xf32> to vector<16x64xbf16>
    %c0_33 = arith.constant 0 : index
    %c0_34 = arith.constant 0 : index
    %c0_35 = arith.constant 0 : index
    %96 = vector.load %arg6[%c0_33, %c0_34, %c0_35] : memref<2x64x64xbf16, #tpu.memory_space<vmem>>, vector<1x64x64xbf16>
    %97 = vector.shape_cast %96 : vector<1x64x64xbf16> to vector<64x64xbf16>
    %cst_36 = arith.constant dense<0.000000e+00> : vector<16x64xf32>
    %98 = tpu.matmul %95, %97, %cst_36 {dimension_numbers = #tpu.dot_dimension_numbers<[1], [0], [0], [1], [0, 0, 1, 1], [], []>} : vector<16x64xbf16>, vector<64x64xbf16>, vector<16x64xf32> -> vector<16x64xf32>
    %99 = vector.broadcast %14 : vector<1x64xf32> to vector<16x64xf32>
    %100 = arith.addf %98, %99 : vector<16x64xf32>
    %101 = vector.broadcast %15 : vector<1x64xf32> to vector<16x64xf32>
    %102 = arith.mulf %100, %101 : vector<16x64xf32>
    %103 = arith.addf %102, %6 : vector<16x64xf32>
    %cst_37 = arith.constant dense<0.000000e+00> : vector<16xf32>
    %104 = vector.multi_reduction <add>, %103, %cst_37 [1] : vector<16x64xf32> to vector<16xf32>
    %105 = vector.shape_cast %104 : vector<16xf32> to vector<16x1xf32>
    %cst_38 = arith.constant 6.400000e+01 : f32
    %106 = vector.broadcast %cst_38 : f32 to vector<16x1xf32>
    %107 = arith.divf %105, %106 : vector<16x1xf32>
    %108 = vector.broadcast %107 : vector<16x1xf32> to vector<16x64xf32>
    %109 = arith.subf %103, %108 : vector<16x64xf32>
    %110 = arith.mulf %109, %109 : vector<16x64xf32>
    %cst_39 = arith.constant dense<0.000000e+00> : vector<16xf32>
    %111 = vector.multi_reduction <add>, %110, %cst_39 [1] : vector<16x64xf32> to vector<16xf32>
    %112 = vector.shape_cast %111 : vector<16xf32> to vector<16x1xf32>
    %cst_40 = arith.constant 6.400000e+01 : f32
    %113 = vector.broadcast %cst_40 : f32 to vector<16x1xf32>
    %114 = arith.divf %112, %113 : vector<16x1xf32>
    %cst_41 = arith.constant 9.99999997E-7 : f32
    %115 = vector.broadcast %cst_41 : f32 to vector<16x1xf32>
    %116 = arith.addf %114, %115 : vector<16x1xf32>
    %117 = math.rsqrt %116 : vector<16x1xf32>
    %118 = vector.broadcast %117 : vector<16x1xf32> to vector<16x64xf32>
    %119 = arith.mulf %109, %118 : vector<16x64xf32>
    %120 = vector.broadcast %16 : vector<1x64xf32> to vector<16x64xf32>
    %121 = arith.mulf %119, %120 : vector<16x64xf32>
    %122 = vector.broadcast %17 : vector<1x64xf32> to vector<16x64xf32>
    %123 = arith.addf %121, %122 : vector<16x64xf32>
    %124 = arith.truncf %123 : vector<16x64xf32> to vector<16x64xbf16>
    %c0_42 = arith.constant 0 : index
    %c0_43 = arith.constant 0 : index
    %c0_44 = arith.constant 0 : index
    %125 = vector.load %arg7[%c0_42, %c0_43, %c0_44] : memref<2x64x256xbf16, #tpu.memory_space<vmem>>, vector<1x64x256xbf16>
    %126 = vector.shape_cast %125 : vector<1x64x256xbf16> to vector<64x256xbf16>
    %cst_45 = arith.constant dense<0.000000e+00> : vector<16x256xf32>
    %127 = tpu.matmul %124, %126, %cst_45 {dimension_numbers = #tpu.dot_dimension_numbers<[1], [0], [0], [1], [0, 0, 1, 1], [], []>} : vector<16x64xbf16>, vector<64x256xbf16>, vector<16x256xf32> -> vector<16x256xf32>
    %c0_46 = arith.constant 0 : index
    %c0_47 = arith.constant 0 : index
    %c0_48 = arith.constant 0 : index
    %128 = vector.load %arg8[%c0_46, %c0_47, %c0_48] : memref<2x1x256xf32, #tpu.memory_space<vmem>>, vector<1x1x256xf32>
    %129 = vector.shape_cast %128 : vector<1x1x256xf32> to vector<1x256xf32>
    %130 = vector.broadcast %129 : vector<1x256xf32> to vector<16x256xf32>
    %131 = arith.addf %127, %130 : vector<16x256xf32>
    %cst_49 = arith.constant 0.707106769 : f32
    %132 = vector.broadcast %cst_49 : f32 to vector<16x256xf32>
    %133 = arith.mulf %131, %132 : vector<16x256xf32>
    %134 = math.absf %133 : vector<16x256xf32>
    %cst_50 = arith.constant 0.327591091 : f32
    %135 = vector.broadcast %cst_50 : f32 to vector<16x256xf32>
    %136 = arith.mulf %135, %134 : vector<16x256xf32>
    %cst_51 = arith.constant 1.000000e+00 : f32
    %137 = vector.broadcast %cst_51 : f32 to vector<16x256xf32>
    %138 = arith.addf %137, %136 : vector<16x256xf32>
    %139 = tpu.reciprocal %138 {approx = true} : vector<16x256xf32> -> vector<16x256xf32>
    %cst_52 = arith.constant 1.06140542 : f32
    %140 = vector.broadcast %cst_52 : f32 to vector<16x256xf32>
    %141 = arith.mulf %139, %140 : vector<16x256xf32>
    %cst_53 = arith.constant -1.45315206 : f32
    %142 = vector.broadcast %cst_53 : f32 to vector<16x256xf32>
    %143 = arith.addf %142, %141 : vector<16x256xf32>
    %144 = arith.mulf %139, %143 : vector<16x256xf32>
    %cst_54 = arith.constant 1.42141378 : f32
    %145 = vector.broadcast %cst_54 : f32 to vector<16x256xf32>
    %146 = arith.addf %145, %144 : vector<16x256xf32>
    %147 = arith.mulf %139, %146 : vector<16x256xf32>
    %cst_55 = arith.constant -0.284496725 : f32
    %148 = vector.broadcast %cst_55 : f32 to vector<16x256xf32>
    %149 = arith.addf %148, %147 : vector<16x256xf32>
    %150 = arith.mulf %139, %149 : vector<16x256xf32>
    %cst_56 = arith.constant 0.254829586 : f32
    %151 = vector.broadcast %cst_56 : f32 to vector<16x256xf32>
    %152 = arith.addf %151, %150 : vector<16x256xf32>
    %153 = arith.mulf %139, %152 : vector<16x256xf32>
    %cst_57 = arith.constant 0.000000e+00 : f32
    %154 = vector.broadcast %cst_57 : f32 to vector<16x256xf32>
    %155 = arith.subf %154, %134 : vector<16x256xf32>
    %156 = arith.mulf %155, %134 : vector<16x256xf32>
    %157 = math.exp %156 : vector<16x256xf32>
    %158 = arith.mulf %153, %157 : vector<16x256xf32>
    %cst_58 = arith.constant 1.000000e+00 : f32
    %159 = vector.broadcast %cst_58 : f32 to vector<16x256xf32>
    %160 = arith.subf %159, %158 : vector<16x256xf32>
    %cst_59 = arith.constant 0.000000e+00 : f32
    %161 = vector.broadcast %cst_59 : f32 to vector<16x256xf32>
    %162 = arith.cmpf oge, %133, %161 : vector<16x256xf32>
    %cst_60 = arith.constant 0.000000e+00 : f32
    %163 = vector.broadcast %cst_60 : f32 to vector<16x256xf32>
    %164 = arith.subf %163, %160 : vector<16x256xf32>
    %165 = arith.select %162, %160, %164 : vector<16x256xi1>, vector<16x256xf32>
    %cst_61 = arith.constant 5.000000e-01 : f32
    %166 = vector.broadcast %cst_61 : f32 to vector<16x256xf32>
    %167 = arith.mulf %166, %131 : vector<16x256xf32>
    %cst_62 = arith.constant 1.000000e+00 : f32
    %168 = vector.broadcast %cst_62 : f32 to vector<16x256xf32>
    %169 = arith.addf %168, %165 : vector<16x256xf32>
    %170 = arith.mulf %167, %169 : vector<16x256xf32>
    %171 = arith.truncf %170 : vector<16x256xf32> to vector<16x256xbf16>
    %c0_63 = arith.constant 0 : index
    %c0_64 = arith.constant 0 : index
    %c0_65 = arith.constant 0 : index
    %172 = vector.load %arg9[%c0_63, %c0_64, %c0_65] : memref<2x256x64xbf16, #tpu.memory_space<vmem>>, vector<1x256x64xbf16>
    %173 = vector.shape_cast %172 : vector<1x256x64xbf16> to vector<256x64xbf16>
    %cst_66 = arith.constant dense<0.000000e+00> : vector<16x64xf32>
    %174 = tpu.matmul %171, %173, %cst_66 {dimension_numbers = #tpu.dot_dimension_numbers<[1], [0], [0], [1], [0, 0, 1, 1], [], []>} : vector<16x256xbf16>, vector<256x64xbf16>, vector<16x64xf32> -> vector<16x64xf32>
    %175 = vector.broadcast %18 : vector<1x64xf32> to vector<16x64xf32>
    %176 = arith.addf %174, %175 : vector<16x64xf32>
    %177 = vector.broadcast %19 : vector<1x64xf32> to vector<16x64xf32>
    %178 = arith.mulf %176, %177 : vector<16x64xf32>
    %179 = arith.addf %178, %103 : vector<16x64xf32>
    %c1 = arith.constant 1 : index
    %c0_67 = arith.constant 0 : index
    %c0_68 = arith.constant 0 : index
    %180 = vector.load %arg10[%c1, %c0_67, %c0_68] : memref<2x8x64xf32, #tpu.memory_space<vmem>>, vector<1x8x64xf32>
    %181 = vector.shape_cast %180 : vector<1x8x64xf32> to vector<8x64xf32>
    %182 = vector.extract_strided_slice %181 {offsets = [0, 0], sizes = [1, 64], strides = [1, 1]} : vector<8x64xf32> to vector<1x64xf32>
    %183 = vector.extract_strided_slice %181 {offsets = [1, 0], sizes = [1, 64], strides = [1, 1]} : vector<8x64xf32> to vector<1x64xf32>
    %184 = vector.extract_strided_slice %181 {offsets = [2, 0], sizes = [1, 64], strides = [1, 1]} : vector<8x64xf32> to vector<1x64xf32>
    %185 = vector.extract_strided_slice %181 {offsets = [3, 0], sizes = [1, 64], strides = [1, 1]} : vector<8x64xf32> to vector<1x64xf32>
    %186 = vector.extract_strided_slice %181 {offsets = [4, 0], sizes = [1, 64], strides = [1, 1]} : vector<8x64xf32> to vector<1x64xf32>
    %187 = vector.extract_strided_slice %181 {offsets = [5, 0], sizes = [1, 64], strides = [1, 1]} : vector<8x64xf32> to vector<1x64xf32>
    %188 = vector.extract_strided_slice %181 {offsets = [6, 0], sizes = [1, 64], strides = [1, 1]} : vector<8x64xf32> to vector<1x64xf32>
    %189 = vector.extract_strided_slice %181 {offsets = [7, 0], sizes = [1, 64], strides = [1, 1]} : vector<8x64xf32> to vector<1x64xf32>
    %cst_69 = arith.constant dense<0.000000e+00> : vector<16xf32>
    %190 = vector.multi_reduction <add>, %179, %cst_69 [1] : vector<16x64xf32> to vector<16xf32>
    %191 = vector.shape_cast %190 : vector<16xf32> to vector<16x1xf32>
    %cst_70 = arith.constant 6.400000e+01 : f32
    %192 = vector.broadcast %cst_70 : f32 to vector<16x1xf32>
    %193 = arith.divf %191, %192 : vector<16x1xf32>
    %194 = vector.broadcast %193 : vector<16x1xf32> to vector<16x64xf32>
    %195 = arith.subf %179, %194 : vector<16x64xf32>
    %196 = arith.mulf %195, %195 : vector<16x64xf32>
    %cst_71 = arith.constant dense<0.000000e+00> : vector<16xf32>
    %197 = vector.multi_reduction <add>, %196, %cst_71 [1] : vector<16x64xf32> to vector<16xf32>
    %198 = vector.shape_cast %197 : vector<16xf32> to vector<16x1xf32>
    %cst_72 = arith.constant 6.400000e+01 : f32
    %199 = vector.broadcast %cst_72 : f32 to vector<16x1xf32>
    %200 = arith.divf %198, %199 : vector<16x1xf32>
    %cst_73 = arith.constant 9.99999997E-7 : f32
    %201 = vector.broadcast %cst_73 : f32 to vector<16x1xf32>
    %202 = arith.addf %200, %201 : vector<16x1xf32>
    %203 = math.rsqrt %202 : vector<16x1xf32>
    %204 = vector.broadcast %203 : vector<16x1xf32> to vector<16x64xf32>
    %205 = arith.mulf %195, %204 : vector<16x64xf32>
    %206 = vector.broadcast %182 : vector<1x64xf32> to vector<16x64xf32>
    %207 = arith.mulf %205, %206 : vector<16x64xf32>
    %208 = vector.broadcast %183 : vector<1x64xf32> to vector<16x64xf32>
    %209 = arith.addf %207, %208 : vector<16x64xf32>
    %210 = arith.truncf %209 : vector<16x64xf32> to vector<16x64xbf16>
    %c1_74 = arith.constant 1 : index
    %c0_75 = arith.constant 0 : index
    %c0_76 = arith.constant 0 : index
    %211 = vector.load %arg4[%c1_74, %c0_75, %c0_76] : memref<2x64x192xbf16, #tpu.memory_space<vmem>>, vector<1x64x192xbf16>
    %212 = vector.shape_cast %211 : vector<1x64x192xbf16> to vector<64x192xbf16>
    %cst_77 = arith.constant dense<0.000000e+00> : vector<16x192xf32>
    %213 = tpu.matmul %210, %212, %cst_77 {dimension_numbers = #tpu.dot_dimension_numbers<[1], [0], [0], [1], [0, 0, 1, 1], [], []>} : vector<16x64xbf16>, vector<64x192xbf16>, vector<16x192xf32> -> vector<16x192xf32>
    %c1_78 = arith.constant 1 : index
    %c0_79 = arith.constant 0 : index
    %c0_80 = arith.constant 0 : index
    %214 = vector.load %arg5[%c1_78, %c0_79, %c0_80] : memref<2x1x192xf32, #tpu.memory_space<vmem>>, vector<1x1x192xf32>
    %215 = vector.shape_cast %214 : vector<1x1x192xf32> to vector<1x192xf32>
    %216 = vector.broadcast %215 : vector<1x192xf32> to vector<16x192xf32>
    %217 = arith.addf %213, %216 : vector<16x192xf32>
    %218 = vector.extract_strided_slice %217 {offsets = [0, 0], sizes = [16, 32], strides = [1, 1]} : vector<16x192xf32> to vector<16x32xf32>
    %cst_81 = arith.constant 0.176776692 : f32
    %219 = vector.broadcast %cst_81 : f32 to vector<16x32xf32>
    %220 = arith.mulf %218, %219 : vector<16x32xf32>
    %221 = vector.extract_strided_slice %217 {offsets = [0, 64], sizes = [16, 32], strides = [1, 1]} : vector<16x192xf32> to vector<16x32xf32>
    %222 = vector.extract_strided_slice %217 {offsets = [0, 128], sizes = [16, 32], strides = [1, 1]} : vector<16x192xf32> to vector<16x32xf32>
    %223 = arith.truncf %220 : vector<16x32xf32> to vector<16x32xbf16>
    %224 = arith.truncf %221 : vector<16x32xf32> to vector<16x32xbf16>
    %cst_82 = arith.constant dense<0.000000e+00> : vector<16x16xf32>
    %225 = tpu.matmul %223, %224, %cst_82 {dimension_numbers = #tpu.dot_dimension_numbers<[1], [1], [0], [0], [0, 0, 1, 0], [], []>} : vector<16x32xbf16>, vector<16x32xbf16>, vector<16x16xf32> -> vector<16x16xf32>
    %cst_83 = arith.constant -1.000000e+30 : f32
    %226 = vector.broadcast %cst_83 : f32 to vector<16x16xf32>
    %227 = arith.select %9, %225, %226 : vector<16x16xi1>, vector<16x16xf32>
    %cst_84 = arith.constant dense<0xFF800000> : vector<16xf32>
    %228 = vector.multi_reduction <maximumf>, %227, %cst_84 [1] : vector<16x16xf32> to vector<16xf32>
    %229 = vector.shape_cast %228 : vector<16xf32> to vector<16x1xf32>
    %230 = vector.broadcast %229 : vector<16x1xf32> to vector<16x16xf32>
    %231 = arith.subf %227, %230 : vector<16x16xf32>
    %232 = math.exp %231 : vector<16x16xf32>
    %cst_85 = arith.constant dense<0.000000e+00> : vector<16xf32>
    %233 = vector.multi_reduction <add>, %232, %cst_85 [1] : vector<16x16xf32> to vector<16xf32>
    %234 = vector.shape_cast %233 : vector<16xf32> to vector<16x1xf32>
    %235 = tpu.reciprocal %234 {approx = true} : vector<16x1xf32> -> vector<16x1xf32>
    %236 = vector.broadcast %235 : vector<16x1xf32> to vector<16x16xf32>
    %237 = arith.mulf %232, %236 : vector<16x16xf32>
    %238 = arith.truncf %237 : vector<16x16xf32> to vector<16x16xbf16>
    %239 = arith.truncf %222 : vector<16x32xf32> to vector<16x32xbf16>
    %cst_86 = arith.constant dense<0.000000e+00> : vector<16x32xf32>
    %240 = tpu.matmul %238, %239, %cst_86 {dimension_numbers = #tpu.dot_dimension_numbers<[1], [0], [0], [1], [0, 0, 1, 1], [], []>} : vector<16x16xbf16>, vector<16x32xbf16>, vector<16x32xf32> -> vector<16x32xf32>
    %241 = vector.extract_strided_slice %217 {offsets = [0, 32], sizes = [16, 32], strides = [1, 1]} : vector<16x192xf32> to vector<16x32xf32>
    %cst_87 = arith.constant 0.176776692 : f32
    %242 = vector.broadcast %cst_87 : f32 to vector<16x32xf32>
    %243 = arith.mulf %241, %242 : vector<16x32xf32>
    %244 = vector.extract_strided_slice %217 {offsets = [0, 96], sizes = [16, 32], strides = [1, 1]} : vector<16x192xf32> to vector<16x32xf32>
    %245 = vector.extract_strided_slice %217 {offsets = [0, 160], sizes = [16, 32], strides = [1, 1]} : vector<16x192xf32> to vector<16x32xf32>
    %246 = arith.truncf %243 : vector<16x32xf32> to vector<16x32xbf16>
    %247 = arith.truncf %244 : vector<16x32xf32> to vector<16x32xbf16>
    %cst_88 = arith.constant dense<0.000000e+00> : vector<16x16xf32>
    %248 = tpu.matmul %246, %247, %cst_88 {dimension_numbers = #tpu.dot_dimension_numbers<[1], [1], [0], [0], [0, 0, 1, 0], [], []>} : vector<16x32xbf16>, vector<16x32xbf16>, vector<16x16xf32> -> vector<16x16xf32>
    %cst_89 = arith.constant -1.000000e+30 : f32
    %249 = vector.broadcast %cst_89 : f32 to vector<16x16xf32>
    %250 = arith.select %9, %248, %249 : vector<16x16xi1>, vector<16x16xf32>
    %cst_90 = arith.constant dense<0xFF800000> : vector<16xf32>
    %251 = vector.multi_reduction <maximumf>, %250, %cst_90 [1] : vector<16x16xf32> to vector<16xf32>
    %252 = vector.shape_cast %251 : vector<16xf32> to vector<16x1xf32>
    %253 = vector.broadcast %252 : vector<16x1xf32> to vector<16x16xf32>
    %254 = arith.subf %250, %253 : vector<16x16xf32>
    %255 = math.exp %254 : vector<16x16xf32>
    %cst_91 = arith.constant dense<0.000000e+00> : vector<16xf32>
    %256 = vector.multi_reduction <add>, %255, %cst_91 [1] : vector<16x16xf32> to vector<16xf32>
    %257 = vector.shape_cast %256 : vector<16xf32> to vector<16x1xf32>
    %258 = tpu.reciprocal %257 {approx = true} : vector<16x1xf32> -> vector<16x1xf32>
    %259 = vector.broadcast %258 : vector<16x1xf32> to vector<16x16xf32>
    %260 = arith.mulf %255, %259 : vector<16x16xf32>
    %261 = arith.truncf %260 : vector<16x16xf32> to vector<16x16xbf16>
    %262 = arith.truncf %245 : vector<16x32xf32> to vector<16x32xbf16>
    %cst_92 = arith.constant dense<0.000000e+00> : vector<16x32xf32>
    %263 = tpu.matmul %261, %262, %cst_92 {dimension_numbers = #tpu.dot_dimension_numbers<[1], [0], [0], [1], [0, 0, 1, 1], [], []>} : vector<16x16xbf16>, vector<16x32xbf16>, vector<16x32xf32> -> vector<16x32xf32>
    %264 = tpu.concatenate %240, %263 in 1 : vector<16x32xf32>, vector<16x32xf32> -> vector<16x64xf32>
    %265 = arith.truncf %264 : vector<16x64xf32> to vector<16x64xbf16>
    %c1_93 = arith.constant 1 : index
    %c0_94 = arith.constant 0 : index
    %c0_95 = arith.constant 0 : index
    %266 = vector.load %arg6[%c1_93, %c0_94, %c0_95] : memref<2x64x64xbf16, #tpu.memory_space<vmem>>, vector<1x64x64xbf16>
    %267 = vector.shape_cast %266 : vector<1x64x64xbf16> to vector<64x64xbf16>
    %cst_96 = arith.constant dense<0.000000e+00> : vector<16x64xf32>
    %268 = tpu.matmul %265, %267, %cst_96 {dimension_numbers = #tpu.dot_dimension_numbers<[1], [0], [0], [1], [0, 0, 1, 1], [], []>} : vector<16x64xbf16>, vector<64x64xbf16>, vector<16x64xf32> -> vector<16x64xf32>
    %269 = vector.broadcast %184 : vector<1x64xf32> to vector<16x64xf32>
    %270 = arith.addf %268, %269 : vector<16x64xf32>
    %271 = vector.broadcast %185 : vector<1x64xf32> to vector<16x64xf32>
    %272 = arith.mulf %270, %271 : vector<16x64xf32>
    %273 = arith.addf %272, %179 : vector<16x64xf32>
    %cst_97 = arith.constant dense<0.000000e+00> : vector<16xf32>
    %274 = vector.multi_reduction <add>, %273, %cst_97 [1] : vector<16x64xf32> to vector<16xf32>
    %275 = vector.shape_cast %274 : vector<16xf32> to vector<16x1xf32>
    %cst_98 = arith.constant 6.400000e+01 : f32
    %276 = vector.broadcast %cst_98 : f32 to vector<16x1xf32>
    %277 = arith.divf %275, %276 : vector<16x1xf32>
    %278 = vector.broadcast %277 : vector<16x1xf32> to vector<16x64xf32>
    %279 = arith.subf %273, %278 : vector<16x64xf32>
    %280 = arith.mulf %279, %279 : vector<16x64xf32>
    %cst_99 = arith.constant dense<0.000000e+00> : vector<16xf32>
    %281 = vector.multi_reduction <add>, %280, %cst_99 [1] : vector<16x64xf32> to vector<16xf32>
    %282 = vector.shape_cast %281 : vector<16xf32> to vector<16x1xf32>
    %cst_100 = arith.constant 6.400000e+01 : f32
    %283 = vector.broadcast %cst_100 : f32 to vector<16x1xf32>
    %284 = arith.divf %282, %283 : vector<16x1xf32>
    %cst_101 = arith.constant 9.99999997E-7 : f32
    %285 = vector.broadcast %cst_101 : f32 to vector<16x1xf32>
    %286 = arith.addf %284, %285 : vector<16x1xf32>
    %287 = math.rsqrt %286 : vector<16x1xf32>
    %288 = vector.broadcast %287 : vector<16x1xf32> to vector<16x64xf32>
    %289 = arith.mulf %279, %288 : vector<16x64xf32>
    %290 = vector.broadcast %186 : vector<1x64xf32> to vector<16x64xf32>
    %291 = arith.mulf %289, %290 : vector<16x64xf32>
    %292 = vector.broadcast %187 : vector<1x64xf32> to vector<16x64xf32>
    %293 = arith.addf %291, %292 : vector<16x64xf32>
    %294 = arith.truncf %293 : vector<16x64xf32> to vector<16x64xbf16>
    %c1_102 = arith.constant 1 : index
    %c0_103 = arith.constant 0 : index
    %c0_104 = arith.constant 0 : index
    %295 = vector.load %arg7[%c1_102, %c0_103, %c0_104] : memref<2x64x256xbf16, #tpu.memory_space<vmem>>, vector<1x64x256xbf16>
    %296 = vector.shape_cast %295 : vector<1x64x256xbf16> to vector<64x256xbf16>
    %cst_105 = arith.constant dense<0.000000e+00> : vector<16x256xf32>
    %297 = tpu.matmul %294, %296, %cst_105 {dimension_numbers = #tpu.dot_dimension_numbers<[1], [0], [0], [1], [0, 0, 1, 1], [], []>} : vector<16x64xbf16>, vector<64x256xbf16>, vector<16x256xf32> -> vector<16x256xf32>
    %c1_106 = arith.constant 1 : index
    %c0_107 = arith.constant 0 : index
    %c0_108 = arith.constant 0 : index
    %298 = vector.load %arg8[%c1_106, %c0_107, %c0_108] : memref<2x1x256xf32, #tpu.memory_space<vmem>>, vector<1x1x256xf32>
    %299 = vector.shape_cast %298 : vector<1x1x256xf32> to vector<1x256xf32>
    %300 = vector.broadcast %299 : vector<1x256xf32> to vector<16x256xf32>
    %301 = arith.addf %297, %300 : vector<16x256xf32>
    %cst_109 = arith.constant 0.707106769 : f32
    %302 = vector.broadcast %cst_109 : f32 to vector<16x256xf32>
    %303 = arith.mulf %301, %302 : vector<16x256xf32>
    %304 = math.absf %303 : vector<16x256xf32>
    %cst_110 = arith.constant 0.327591091 : f32
    %305 = vector.broadcast %cst_110 : f32 to vector<16x256xf32>
    %306 = arith.mulf %305, %304 : vector<16x256xf32>
    %cst_111 = arith.constant 1.000000e+00 : f32
    %307 = vector.broadcast %cst_111 : f32 to vector<16x256xf32>
    %308 = arith.addf %307, %306 : vector<16x256xf32>
    %309 = tpu.reciprocal %308 {approx = true} : vector<16x256xf32> -> vector<16x256xf32>
    %cst_112 = arith.constant 1.06140542 : f32
    %310 = vector.broadcast %cst_112 : f32 to vector<16x256xf32>
    %311 = arith.mulf %309, %310 : vector<16x256xf32>
    %cst_113 = arith.constant -1.45315206 : f32
    %312 = vector.broadcast %cst_113 : f32 to vector<16x256xf32>
    %313 = arith.addf %312, %311 : vector<16x256xf32>
    %314 = arith.mulf %309, %313 : vector<16x256xf32>
    %cst_114 = arith.constant 1.42141378 : f32
    %315 = vector.broadcast %cst_114 : f32 to vector<16x256xf32>
    %316 = arith.addf %315, %314 : vector<16x256xf32>
    %317 = arith.mulf %309, %316 : vector<16x256xf32>
    %cst_115 = arith.constant -0.284496725 : f32
    %318 = vector.broadcast %cst_115 : f32 to vector<16x256xf32>
    %319 = arith.addf %318, %317 : vector<16x256xf32>
    %320 = arith.mulf %309, %319 : vector<16x256xf32>
    %cst_116 = arith.constant 0.254829586 : f32
    %321 = vector.broadcast %cst_116 : f32 to vector<16x256xf32>
    %322 = arith.addf %321, %320 : vector<16x256xf32>
    %323 = arith.mulf %309, %322 : vector<16x256xf32>
    %cst_117 = arith.constant 0.000000e+00 : f32
    %324 = vector.broadcast %cst_117 : f32 to vector<16x256xf32>
    %325 = arith.subf %324, %304 : vector<16x256xf32>
    %326 = arith.mulf %325, %304 : vector<16x256xf32>
    %327 = math.exp %326 : vector<16x256xf32>
    %328 = arith.mulf %323, %327 : vector<16x256xf32>
    %cst_118 = arith.constant 1.000000e+00 : f32
    %329 = vector.broadcast %cst_118 : f32 to vector<16x256xf32>
    %330 = arith.subf %329, %328 : vector<16x256xf32>
    %cst_119 = arith.constant 0.000000e+00 : f32
    %331 = vector.broadcast %cst_119 : f32 to vector<16x256xf32>
    %332 = arith.cmpf oge, %303, %331 : vector<16x256xf32>
    %cst_120 = arith.constant 0.000000e+00 : f32
    %333 = vector.broadcast %cst_120 : f32 to vector<16x256xf32>
    %334 = arith.subf %333, %330 : vector<16x256xf32>
    %335 = arith.select %332, %330, %334 : vector<16x256xi1>, vector<16x256xf32>
    %cst_121 = arith.constant 5.000000e-01 : f32
    %336 = vector.broadcast %cst_121 : f32 to vector<16x256xf32>
    %337 = arith.mulf %336, %301 : vector<16x256xf32>
    %cst_122 = arith.constant 1.000000e+00 : f32
    %338 = vector.broadcast %cst_122 : f32 to vector<16x256xf32>
    %339 = arith.addf %338, %335 : vector<16x256xf32>
    %340 = arith.mulf %337, %339 : vector<16x256xf32>
    %341 = arith.truncf %340 : vector<16x256xf32> to vector<16x256xbf16>
    %c1_123 = arith.constant 1 : index
    %c0_124 = arith.constant 0 : index
    %c0_125 = arith.constant 0 : index
    %342 = vector.load %arg9[%c1_123, %c0_124, %c0_125] : memref<2x256x64xbf16, #tpu.memory_space<vmem>>, vector<1x256x64xbf16>
    %343 = vector.shape_cast %342 : vector<1x256x64xbf16> to vector<256x64xbf16>
    %cst_126 = arith.constant dense<0.000000e+00> : vector<16x64xf32>
    %344 = tpu.matmul %341, %343, %cst_126 {dimension_numbers = #tpu.dot_dimension_numbers<[1], [0], [0], [1], [0, 0, 1, 1], [], []>} : vector<16x256xbf16>, vector<256x64xbf16>, vector<16x64xf32> -> vector<16x64xf32>
    %345 = vector.broadcast %188 : vector<1x64xf32> to vector<16x64xf32>
    %346 = arith.addf %344, %345 : vector<16x64xf32>
    %347 = vector.broadcast %189 : vector<1x64xf32> to vector<16x64xf32>
    %348 = arith.mulf %346, %347 : vector<16x64xf32>
    %349 = arith.addf %348, %273 : vector<16x64xf32>
    %c0_127 = arith.constant 0 : index
    %c0_128 = arith.constant 0 : index
    %350 = vector.load %arg11[%c0_127, %c0_128] : memref<2x64xf32, #tpu.memory_space<vmem>>, vector<2x64xf32>
    %351 = vector.extract_strided_slice %349 {offsets = [0, 0], sizes = [1, 64], strides = [1, 1]} : vector<16x64xf32> to vector<1x64xf32>
    %352 = vector.extract_strided_slice %350 {offsets = [0, 0], sizes = [1, 64], strides = [1, 1]} : vector<2x64xf32> to vector<1x64xf32>
    %353 = vector.extract_strided_slice %350 {offsets = [1, 0], sizes = [1, 64], strides = [1, 1]} : vector<2x64xf32> to vector<1x64xf32>
    %cst_129 = arith.constant dense<0.000000e+00> : vector<1xf32>
    %354 = vector.multi_reduction <add>, %351, %cst_129 [1] : vector<1x64xf32> to vector<1xf32>
    %355 = vector.shape_cast %354 : vector<1xf32> to vector<1x1xf32>
    %cst_130 = arith.constant 6.400000e+01 : f32
    %356 = vector.broadcast %cst_130 : f32 to vector<1x1xf32>
    %357 = arith.divf %355, %356 : vector<1x1xf32>
    %358 = vector.broadcast %357 : vector<1x1xf32> to vector<1x64xf32>
    %359 = arith.subf %351, %358 : vector<1x64xf32>
    %360 = arith.mulf %359, %359 : vector<1x64xf32>
    %cst_131 = arith.constant dense<0.000000e+00> : vector<1xf32>
    %361 = vector.multi_reduction <add>, %360, %cst_131 [1] : vector<1x64xf32> to vector<1xf32>
    %362 = vector.shape_cast %361 : vector<1xf32> to vector<1x1xf32>
    %cst_132 = arith.constant 6.400000e+01 : f32
    %363 = vector.broadcast %cst_132 : f32 to vector<1x1xf32>
    %364 = arith.divf %362, %363 : vector<1x1xf32>
    %cst_133 = arith.constant 9.99999997E-7 : f32
    %365 = vector.broadcast %cst_133 : f32 to vector<1x1xf32>
    %366 = arith.addf %364, %365 : vector<1x1xf32>
    %367 = math.rsqrt %366 : vector<1x1xf32>
    %368 = vector.broadcast %367 : vector<1x1xf32> to vector<1x64xf32>
    %369 = arith.mulf %359, %368 : vector<1x64xf32>
    %370 = arith.mulf %369, %352 : vector<1x64xf32>
    %371 = arith.addf %370, %353 : vector<1x64xf32>
    %372 = arith.truncf %371 : vector<1x64xf32> to vector<1x64xbf16>
    %c0_134 = arith.constant 0 : index
    %c0_135 = arith.constant 0 : index
    %373 = vector.load %arg12[%c0_134, %c0_135] : memref<64x128xbf16, #tpu.memory_space<vmem>>, vector<64x128xbf16>
    %cst_136 = arith.constant dense<0.000000e+00> : vector<1x128xf32>
    %374 = tpu.matmul %372, %373, %cst_136 {dimension_numbers = #tpu.dot_dimension_numbers<[1], [0], [0], [1], [0, 0, 1, 1], [], []>} : vector<1x64xbf16>, vector<64x128xbf16>, vector<1x128xf32> -> vector<1x128xf32>
    %c0_137 = arith.constant 0 : index
    %c0_138 = arith.constant 0 : index
    %c0_139 = arith.constant 0 : index
    %375 = vector.load %arg13[%c0_137, %c0_138, %c0_139] : memref<1x1x128xf32, #tpu.memory_space<vmem>>, vector<1x1x128xf32>
    %376 = vector.shape_cast %375 : vector<1x1x128xf32> to vector<1x128xf32>
    %377 = vector.shape_cast %374 : vector<1x128xf32> to vector<1x1x128xf32>
    tpu.vector_store %arg13[%c0_137, %c0_138, %c0_139], %377 {strides = array<i32>} : memref<1x1x128xf32, #tpu.memory_space<vmem>>, vector<1x1x128xf32>,
    return
  }
  func.func @transform_0(%arg0: i32) -> (i32, i32, i32) {
    %c0_i32 = arith.constant 0 : i32
    %c0_i32_0 = arith.constant 0 : i32
    %c0_i32_1 = arith.constant 0 : i32
    return %arg0, %c0_i32, %c0_i32_0 : i32, i32, i32
  }
  func.func @transform_1(%arg0: i32) -> (i32, i32) {
    %c0_i32 = arith.constant 0 : i32
    %c0_i32_0 = arith.constant 0 : i32
    %c0_i32_1 = arith.constant 0 : i32
    return %c0_i32, %c0_i32_0 : i32, i32
  }
  func.func @transform_2(%arg0: i32) -> (i32, i32) {
    %c0_i32 = arith.constant 0 : i32
    %c0_i32_0 = arith.constant 0 : i32
    %c0_i32_1 = arith.constant 0 : i32
    return %c0_i32, %c0_i32_0 : i32, i32
  }
  func.func @transform_3(%arg0: i32) -> (i32, i32, i32) {
    %c0_i32 = arith.constant 0 : i32
    %c0_i32_0 = arith.constant 0 : i32
    %c0_i32_1 = arith.constant 0 : i32
    %c0_i32_2 = arith.constant 0 : i32
    return %c0_i32, %c0_i32_0, %c0_i32_1 : i32, i32, i32
  }
  func.func @transform_4(%arg0: i32) -> (i32, i32, i32) {
    %c0_i32 = arith.constant 0 : i32
    %c0_i32_0 = arith.constant 0 : i32
    %c0_i32_1 = arith.constant 0 : i32
    %c0_i32_2 = arith.constant 0 : i32
    return %c0_i32, %c0_i32_0, %c0_i32_1 : i32, i32, i32
  }
  func.func @transform_5(%arg0: i32) -> (i32, i32, i32) {
    %c0_i32 = arith.constant 0 : i32
    %c0_i32_0 = arith.constant 0 : i32
    %c0_i32_1 = arith.constant 0 : i32
    %c0_i32_2 = arith.constant 0 : i32
    return %c0_i32, %c0_i32_0, %c0_i32_1 : i32, i32, i32
  }
  func.func @transform_6(%arg0: i32) -> (i32, i32, i32) {
    %c0_i32 = arith.constant 0 : i32
    %c0_i32_0 = arith.constant 0 : i32
    %c0_i32_1 = arith.constant 0 : i32
    %c0_i32_2 = arith.constant 0 : i32
    return %c0_i32, %c0_i32_0, %c0_i32_1 : i32, i32, i32
  }
  func.func @transform_7(%arg0: i32) -> (i32, i32, i32) {
    %c0_i32 = arith.constant 0 : i32
    %c0_i32_0 = arith.constant 0 : i32
    %c0_i32_1 = arith.constant 0 : i32
    %c0_i32_2 = arith.constant 0 : i32
    return %c0_i32, %c0_i32_0, %c0_i32_1 : i32, i32, i32
  }
  func.func @transform_8(%arg0: i32) -> (i32, i32, i32) {
    %c0_i32 = arith.constant 0 : i32
    %c0_i32_0 = arith.constant 0 : i32
    %c0_i32_1 = arith.constant 0 : i32
    %c0_i32_2 = arith.constant 0 : i32
    return %c0_i32, %c0_i32_0, %c0_i32_1 : i32, i32, i32
  }
  func.func @transform_9(%arg0: i32) -> (i32, i32, i32) {
    %c0_i32 = arith.constant 0 : i32
    %c0_i32_0 = arith.constant 0 : i32
    %c0_i32_1 = arith.constant 0 : i32
    %c0_i32_2 = arith.constant 0 : i32
    return %c0_i32, %c0_i32_0, %c0_i32_1 : i32, i32, i32
  }
  func.func @transform_10(%arg0: i32) -> (i32, i32) {
    %c0_i32 = arith.constant 0 : i32
    %c0_i32_0 = arith.constant 0 : i32
    %c0_i32_1 = arith.constant 0 : i32
    return %c0_i32, %c0_i32_0 : i32, i32
  }
  func.func @transform_11(%arg0: i32) -> (i32, i32) {
    %c0_i32 = arith.constant 0 : i32
    %c0_i32_0 = arith.constant 0 : i32
    %c0_i32_1 = arith.constant 0 : i32
    return %c0_i32, %c0_i32_0 : i32, i32
  }
  func.func @transform_12(%arg0: i32) -> (i32, i32, i32) {
    %c0_i32 = arith.constant 0 : i32
    %c0_i32_0 = arith.constant 0 : i32
    %c0_i32_1 = arith.constant 0 : i32
    return %arg0, %c0_i32, %c0_i32_0 : i32, i32, i32
  }
}

</mosaic_0001>

<llo_original>
// kernel: dinov2_forward.1
$region0: #{dinov2_forward.1}
  #allocation0 [shape = 'u32[]', space=smem, size = 0x4, offset = 0x4, fixed_abs, tag = 'smem constant byte address 0x4 - core index']
  #allocation1 [shape = 'u32[144,128]{1,0:T(1,128)}', space=vmem, size = 0x12000, scoped, tag = 'internal scratch']
  %s0 = inlined_call_operand.vmem [shape: f32[2,16,192], index: 0, kind: input, shape index: {}]
  %s1 = inlined_call_operand.vmem [shape: f32[16,64], index: 1, kind: input, shape index: {}]
  %s2 = inlined_call_operand.vmem [shape: bf16[192,64], index: 2, kind: input, shape index: {}]
  %s3 = inlined_call_operand.vmem [shape: bf16[2,64,192], index: 3, kind: input, shape index: {}]
  %s4 = inlined_call_operand.vmem [shape: f32[2,1,192], index: 4, kind: input, shape index: {}]
  %s5 = inlined_call_operand.vmem [shape: bf16[2,64,64], index: 5, kind: input, shape index: {}]
  %s6 = inlined_call_operand.vmem [shape: bf16[2,64,256], index: 6, kind: input, shape index: {}]
  %s7 = inlined_call_operand.vmem [shape: f32[2,1,256], index: 7, kind: input, shape index: {}]
  %s8 = inlined_call_operand.vmem [shape: bf16[2,256,64], index: 8, kind: input, shape index: {}]
  %s9 = inlined_call_operand.vmem [shape: f32[2,8,64], index: 9, kind: input, shape index: {}]
  %s10 = inlined_call_operand.vmem [shape: f32[2,64], index: 10, kind: input, shape index: {}]
  %s11 = inlined_call_operand.vmem [shape: bf16[64,128], index: 11, kind: input, shape index: {}]
  %s12 = inlined_call_operand.hbm [shape: f32[2,1,128], index: 12, kind: output, shape index: {}]
  %s13 = sld [smem:[#allocation0]]
  $region81: #{dinov2_forward.1} parent=0
    _
  %s15 = ssub.s32 1, %s13
  %s16 = scalar_select 0, %s15, %s13
  $region1: #{dinov2_forward.1} parent=0
    #allocation2 [shape = 'u8[1024]{0}', space=vmem, size = 0x400, scoped, tag = 'output window, operand 0']
    #allocation3 [shape = 's32[2]{0}', space=sflag, size = 0x8, scoped, tag = 'scoped memory for dinov2_forward.1']
    %17 = vsyncpa [#allocation3], 0
    %s18 = scalar_lea.sflag [#allocation3], 1
    %19 = vsyncpa %s18, 0
    loop: start=0, step=1, limit=4
    $region2: #{dinov2_forward.1} parent=1 // loop_pre_header
      _
    $region3: #{dinov2_forward.1} parent=1 // loop_header
      %s21 = sphi 0, %s25
      %p22 = scmp.ge.s32.totalorder %s21, 4
      %s31 = sphi 0, %s33
      %s34 = sphi 0, %s31
      %s35 = sphi 0, %s34
      %s51 = sphi 0, %s35
      %s55 = sphi 0, %s55
      %s57 = sphi 0, %s55
      %s58 = sphi 0, %s57
      %s72 = sphi 0, %s58
      %s76 = sphi 0, %s76
      %s78 = sphi 0, %s76
      %s79 = sphi 0, %s78
      %s93 = sphi 0, %s79
      %s97 = sphi 0, %s97
      %s99 = sphi 0, %s97
      %s100 = sphi 0, %s99
      %s114 = sphi 0, %s100
      %s118 = sphi 0, %s118
      %s120 = sphi 0, %s118
      %s121 = sphi 0, %s120
      %s135 = sphi 0, %s121
      %s139 = sphi 0, %s139
      %s141 = sphi 0, %s139
      %s142 = sphi 0, %s141
      %s156 = sphi 0, %s142
      %s160 = sphi 0, %s160
      %s162 = sphi 0, %s160
      %s163 = sphi 0, %s162
      %s177 = sphi 0, %s163
      %s181 = sphi 0, %s181
      %s183 = sphi 0, %s181
      %s184 = sphi 0, %s183
      %s198 = sphi 0, %s184
      %s202 = sphi 0, %s202
      %s204 = sphi 0, %s202
      %s205 = sphi 0, %s204
      %s219 = sphi 0, %s205
      %s223 = sphi 0, %s223
      %s225 = sphi 0, %s223
      %s226 = sphi 0, %s225
      %s240 = sphi 0, %s226
      %s244 = sphi 0, %s244
      %s246 = sphi 0, %s244
      %s247 = sphi 0, %s246
      %s261 = sphi 0, %s247
      %s265 = sphi 0, %s265
      %s267 = sphi 0, %s265
      %s268 = sphi 0, %s267
      %s282 = sphi 0, %s268
      %s288 = sphi 0, %s290
      %s291 = sphi 0, %s288
      %s292 = sphi 0, %s291
      %s308 = sphi 0, %s292
    $region4: #{dinov2_forward.1} parent=1 // loop_header_branch
      %24 = sbr.rel (%p22) target = $region8
    $region5: #{dinov2_forward.1} parent=1 // loop_body
      %s26 = ssub.s32 %s21, 1
      %s27 = ssub.s32 %s21, 2
      %s28 = sadd.s32 %s21, 1
      %s29 = ssub.s32 %s21, %s28
      %p30 = scmp.eq.s32.totalorder %s29, 0
      %s32 = sadd.s32 %s31, 1
      %s33 = scalar_select %p30, %s31, %s32
      %p36 = pneg %p30
      %p37 = scmp.eq.s32.totalorder %s21, 1
      %p38 = por %p36, %p37
      %p39 = scmp.ne.s32.totalorder %s31, %s34
      %p40 = scmp.eq.s32.totalorder %s21, 0
      %p41 = por %p39, %p40
      %p42 = scmp.ne.s32.totalorder %s31, %s34
      %p43 = scmp.eq.s32.totalorder %s26, 1
      %p44 = por %p42, %p43
      %p45 = scmp.ne.s32.totalorder %s34, %s35
      %p46 = scmp.eq.s32.totalorder %s26, 0
      %p47 = por %p45, %p46
      %p48 = scmp.ne.s32.totalorder %s34, %s35
      %p49 = scmp.eq.s32.totalorder %s27, 1
      %p50 = por %p48, %p49
      %p52 = scmp.ne.s32.totalorder %s35, %s51
      %p53 = scmp.eq.s32.totalorder %s27, 0
      %p54 = por %p52, %p53
      %s56 = sadd.s32 %s55, 1
      %p59 = scmp.eq.s32.totalorder %s21, 1
      %p60 = scmp.ne.s32.totalorder %s55, %s57
      %p61 = scmp.eq.s32.totalorder %s21, 0
      %p62 = por %p60, %p61
      %p63 = scmp.ne.s32.totalorder %s55, %s57
      %p64 = scmp.eq.s32.totalorder %s26, 1
      %p65 = por %p63, %p64
      %p66 = scmp.ne.s32.totalorder %s57, %s58
      %p67 = scmp.eq.s32.totalorder %s26, 0
      %p68 = por %p66, %p67
      %p69 = scmp.ne.s32.totalorder %s57, %s58
      %p70 = scmp.eq.s32.totalorder %s27, 1
      %p71 = por %p69, %p70
      %p73 = scmp.ne.s32.totalorder %s58, %s72
      %p74 = scmp.eq.s32.totalorder %s27, 0
      %p75 = por %p73, %p74
      %s77 = sadd.s32 %s76, 1
      %p80 = scmp.eq.s32.totalorder %s21, 1
      %p81 = scmp.ne.s32.totalorder %s76, %s78
      %p82 = scmp.eq.s32.totalorder %s21, 0
      %p83 = por %p81, %p82
      %p84 = scmp.ne.s32.totalorder %s76, %s78
      %p85 = scmp.eq.s32.totalorder %s26, 1
      %p86 = por %p84, %p85
      %p87 = scmp.ne.s32.totalorder %s78, %s79
      %p88 = scmp.eq.s32.totalorder %s26, 0
      %p89 = por %p87, %p88
      %p90 = scmp.ne.s32.totalorder %s78, %s79
      %p91 = scmp.eq.s32.totalorder %s27, 1
      %p92 = por %p90, %p91
      %p94 = scmp.ne.s32.totalorder %s79, %s93
      %p95 = scmp.eq.s32.totalorder %s27, 0
      %p96 = por %p94, %p95
      %s98 = sadd.s32 %s97, 1
      %p101 = scmp.eq.s32.totalorder %s21, 1
      %p102 = scmp.ne.s32.totalorder %s97, %s99
      %p103 = scmp.eq.s32.totalorder %s21, 0
      %p104 = por %p102, %p103
      %p105 = scmp.ne.s32.totalorder %s97, %s99
      %p106 = scmp.eq.s32.totalorder %s26, 1
      %p107 = por %p105, %p106
      %p108 = scmp.ne.s32.totalorder %s99, %s100
      %p109 = scmp.eq.s32.totalorder %s26, 0
      %p110 = por %p108, %p109
      %p111 = scmp.ne.s32.totalorder %s99, %s100
      %p112 = scmp.eq.s32.totalorder %s27, 1
      %p113 = por %p111, %p112
      %p115 = scmp.ne.s32.totalorder %s100, %s114
      %p116 = scmp.eq.s32.totalorder %s27, 0
      %p117 = por %p115, %p116
      %s119 = sadd.s32 %s118, 1
      %p122 = scmp.eq.s32.totalorder %s21, 1
      %p123 = scmp.ne.s32.totalorder %s118, %s120
      %p124 = scmp.eq.s32.totalorder %s21, 0
      %p125 = por %p123, %p124
      %p126 = scmp.ne.s32.totalorder %s118, %s120
      %p127 = scmp.eq.s32.totalorder %s26, 1
      %p128 = por %p126, %p127
      %p129 = scmp.ne.s32.totalorder %s120, %s121
      %p130 = scmp.eq.s32.totalorder %s26, 0
      %p131 = por %p129, %p130
      %p132 = scmp.ne.s32.totalorder %s120, %s121
      %p133 = scmp.eq.s32.totalorder %s27, 1
      %p134 = por %p132, %p133
      %p136 = scmp.ne.s32.totalorder %s121, %s135
      %p137 = scmp.eq.s32.totalorder %s27, 0
      %p138 = por %p136, %p137
      %s140 = sadd.s32 %s139, 1
      %p143 = scmp.eq.s32.totalorder %s21, 1
      %p144 = scmp.ne.s32.totalorder %s139, %s141
      %p145 = scmp.eq.s32.totalorder %s21, 0
      %p146 = por %p144, %p145
      %p147 = scmp.ne.s32.totalorder %s139, %s141
      %p148 = scmp.eq.s32.totalorder %s26, 1
      %p149 = por %p147, %p148
      %p150 = scmp.ne.s32.totalorder %s141, %s142
      %p151 = scmp.eq.s32.totalorder %s26, 0
      %p152 = por %p150, %p151
      %p153 = scmp.ne.s32.totalorder %s141, %s142
      %p154 = scmp.eq.s32.totalorder %s27, 1
      %p155 = por %p153, %p154
      %p157 = scmp.ne.s32.totalorder %s142, %s156
      %p158 = scmp.eq.s32.totalorder %s27, 0
      %p159 = por %p157, %p158
      %s161 = sadd.s32 %s160, 1
      %p164 = scmp.eq.s32.totalorder %s21, 1
      %p165 = scmp.ne.s32.totalorder %s160, %s162
      %p166 = scmp.eq.s32.totalorder %s21, 0
      %p167 = por %p165, %p166
      %p168 = scmp.ne.s32.totalorder %s160, %s162
      %p169 = scmp.eq.s32.totalorder %s26, 1
      %p170 = por %p168, %p169
      %p171 = scmp.ne.s32.totalorder %s162, %s163
      %p172 = scmp.eq.s32.totalorder %s26, 0
      %p173 = por %p171, %p172
      %p174 = scmp.ne.s32.totalorder %s162, %s163
      %p175 = scmp.eq.s32.totalorder %s27, 1
      %p176 = por %p174, %p175
      %p178 = scmp.ne.s32.totalorder %s163, %s177
      %p179 = scmp.eq.s32.totalorder %s27, 0
      %p180 = por %p178, %p179
      %s182 = sadd.s32 %s181, 1
      %p185 = scmp.eq.s32.totalorder %s21, 1
      %p186 = scmp.ne.s32.totalorder %s181, %s183
      %p187 = scmp.eq.s32.totalorder %s21, 0
      %p188 = por %p186, %p187
      %p189 = scmp.ne.s32.totalorder %s181, %s183
      %p190 = scmp.eq.s32.totalorder %s26, 1
      %p191 = por %p189, %p190
      %p192 = scmp.ne.s32.totalorder %s183, %s184
      %p193 = scmp.eq.s32.totalorder %s26, 0
      %p194 = por %p192, %p193
      %p195 = scmp.ne.s32.totalorder %s183, %s184
      %p196 = scmp.eq.s32.totalorder %s27, 1
      %p197 = por %p195, %p196
      %p199 = scmp.ne.s32.totalorder %s184, %s198
      %p200 = scmp.eq.s32.totalorder %s27, 0
      %p201 = por %p199, %p200
      %s203 = sadd.s32 %s202, 1
      %p206 = scmp.eq.s32.totalorder %s21, 1
      %p207 = scmp.ne.s32.totalorder %s202, %s204
      %p208 = scmp.eq.s32.totalorder %s21, 0
      %p209 = por %p207, %p208
      %p210 = scmp.ne.s32.totalorder %s202, %s204
      %p211 = scmp.eq.s32.totalorder %s26, 1
      %p212 = por %p210, %p211
      %p213 = scmp.ne.s32.totalorder %s204, %s205
      %p214 = scmp.eq.s32.totalorder %s26, 0
      %p215 = por %p213, %p214
      %p216 = scmp.ne.s32.totalorder %s204, %s205
      %p217 = scmp.eq.s32.totalorder %s27, 1
      %p218 = por %p216, %p217
      %p220 = scmp.ne.s32.totalorder %s205, %s219
      %p221 = scmp.eq.s32.totalorder %s27, 0
      %p222 = por %p220, %p221
      %s224 = sadd.s32 %s223, 1
      %p227 = scmp.eq.s32.totalorder %s21, 1
      %p228 = scmp.ne.s32.totalorder %s223, %s225
      %p229 = scmp.eq.s32.totalorder %s21, 0
      %p230 = por %p228, %p229
      %p231 = scmp.ne.s32.totalorder %s223, %s225
      %p232 = scmp.eq.s32.totalorder %s26, 1
      %p233 = por %p231, %p232
      %p234 = scmp.ne.s32.totalorder %s225, %s226
      %p235 = scmp.eq.s32.totalorder %s26, 0
      %p236 = por %p234, %p235
      %p237 = scmp.ne.s32.totalorder %s225, %s226
      %p238 = scmp.eq.s32.totalorder %s27, 1
      %p239 = por %p237, %p238
      %p241 = scmp.ne.s32.totalorder %s226, %s240
      %p242 = scmp.eq.s32.totalorder %s27, 0
      %p243 = por %p241, %p242
      %s245 = sadd.s32 %s244, 1
      %p248 = scmp.eq.s32.totalorder %s21, 1
      %p249 = scmp.ne.s32.totalorder %s244, %s246
      %p250 = scmp.eq.s32.totalorder %s21, 0
      %p251 = por %p249, %p250
      %p252 = scmp.ne.s32.totalorder %s244, %s246
      %p253 = scmp.eq.s32.totalorder %s26, 1
      %p254 = por %p252, %p253
      %p255 = scmp.ne.s32.totalorder %s246, %s247
      %p256 = scmp.eq.s32.totalorder %s26, 0
      %p257 = por %p255, %p256
      %p258 = scmp.ne.s32.totalorder %s246, %s247
      %p259 = scmp.eq.s32.totalorder %s27, 1
      %p260 = por %p258, %p259
      %p262 = scmp.ne.s32.totalorder %s247, %s261
      %p263 = scmp.eq.s32.totalorder %s27, 0
      %p264 = por %p262, %p263
      %s266 = sadd.s32 %s265, 1
      %p269 = scmp.eq.s32.totalorder %s21, 1
      %p270 = scmp.ne.s32.totalorder %s265, %s267
      %p271 = scmp.eq.s32.totalorder %s21, 0
      %p272 = por %p270, %p271
      %p273 = scmp.ne.s32.totalorder %s265, %s267
      %p274 = scmp.eq.s32.totalorder %s26, 1
      %p275 = por %p273, %p274
      %p276 = scmp.ne.s32.totalorder %s267, %s268
      %p277 = scmp.eq.s32.totalorder %s26, 0
      %p278 = por %p276, %p277
      %p279 = scmp.ne.s32.totalorder %s267, %s268
      %p280 = scmp.eq.s32.totalorder %s27, 1
      %p281 = por %p279, %p280
      %p283 = scmp.ne.s32.totalorder %s268, %s282
      %p284 = scmp.eq.s32.totalorder %s27, 0
      %p285 = por %p283, %p284
      %s286 = ssub.s32 %s21, %s28
      %p287 = scmp.eq.s32.totalorder %s286, 0
      %s289 = sadd.s32 %s288, 1
      %s290 = scalar_select %p287, %s288, %s289
      %p293 = pneg %p287
      %p294 = scmp.eq.s32.totalorder %s21, 1
      %p295 = por %p293, %p294
      %p296 = scmp.ne.s32.totalorder %s288, %s291
      %p297 = scmp.eq.s32.totalorder %s21, 0
      %p298 = por %p296, %p297
      %p299 = scmp.ne.s32.totalorder %s288, %s291
      %p300 = scmp.eq.s32.totalorder %s26, 1
      %p301 = por %p299, %p300
      %p302 = scmp.ne.s32.totalorder %s291, %s292
      %p303 = scmp.eq.s32.totalorder %s26, 0
      %p304 = por %p302, %p303
      %p305 = scmp.ne.s32.totalorder %s291, %s292
      %p306 = scmp.eq.s32.totalorder %s27, 1
      %p307 = por %p305, %p306
      %p309 = scmp.ne.s32.totalorder %s292, %s308
      %p310 = scmp.eq.s32.totalorder %s27, 0
      %p311 = por %p309, %p310
      %p312 = scmp.le.s32.totalorder 1, %s21
      %p313 = scmp.lt.s32.totalorder %s21, 3
      %p314 = pnand %p312, %p313
      %p315 = pneg %p314
      // Predicated region
      $region9: #{dinov2_forward.1} parent=5 // pred_check
        _
      $region10: #{dinov2_forward.1} parent=5 // pred_check_branch
        %317 = sbr.rel (%p314) target = $region12
      $region11: #{dinov2_forward.1} parent=5 // pred_region
        %s318 = ssub.s32 %s21, 1
        // Predicated region
        $region13: #{dinov2_forward.1} parent=11 // pred_check
          %p319 = pneg %p68
        $region14: #{dinov2_forward.1} parent=11 // pred_check_branch
          %321 = sbr.rel (%p319) target = $region16
        $region15: #{dinov2_forward.1} parent=11 // pred_region
          _
        $region16: #{dinov2_forward.1} parent=11 // pred_fallthru
          _
        // Predicated region
        $region17: #{dinov2_forward.1} parent=11 // pred_check
          %p322 = pneg %p89
        $region18: #{dinov2_forward.1} parent=11 // pred_check_branch
          %324 = sbr.rel (%p322) target = $region20
        $region19: #{dinov2_forward.1} parent=11 // pred_region
          _
        $region20: #{dinov2_forward.1} parent=11 // pred_fallthru
          _
        // Predicated region
        $region21: #{dinov2_forward.1} parent=11 // pred_check
          %p325 = pneg %p110
        $region22: #{dinov2_forward.1} parent=11 // pred_check_branch
          %327 = sbr.rel (%p325) target = $region24
        $region23: #{dinov2_forward.1} parent=11 // pred_region
          _
        $region24: #{dinov2_forward.1} parent=11 // pred_fallthru
          _
        // Predicated region
        $region25: #{dinov2_forward.1} parent=11 // pred_check
          %p328 = pneg %p131
        $region26: #{dinov2_forward.1} parent=11 // pred_check_branch
          %330 = sbr.rel (%p328) target = $region28
        $region27: #{dinov2_forward.1} parent=11 // pred_region
          _
        $region28: #{dinov2_forward.1} parent=11 // pred_fallthru
          _
        // Predicated region
        $region29: #{dinov2_forward.1} parent=11 // pred_check
          %p331 = pneg %p152
        $region30: #{dinov2_forward.1} parent=11 // pred_check_branch
          %333 = sbr.rel (%p331) target = $region32
        $region31: #{dinov2_forward.1} parent=11 // pred_region
          _
        $region32: #{dinov2_forward.1} parent=11 // pred_fallthru
          _
        // Predicated region
        $region33: #{dinov2_forward.1} parent=11 // pred_check
          %p334 = pneg %p173
        $region34: #{dinov2_forward.1} parent=11 // pred_check_branch
          %336 = sbr.rel (%p334) target = $region36
        $region35: #{dinov2_forward.1} parent=11 // pred_region
          _
        $region36: #{dinov2_forward.1} parent=11 // pred_fallthru
          _
        // Predicated region
        $region37: #{dinov2_forward.1} parent=11 // pred_check
          %p337 = pneg %p194
        $region38: #{dinov2_forward.1} parent=11 // pred_check_branch
          %339 = sbr.rel (%p337) target = $region40
        $region39: #{dinov2_forward.1} parent=11 // pred_region
          _
        $region40: #{dinov2_forward.1} parent=11 // pred_fallthru
          _
        // Predicated region
        $region41: #{dinov2_forward.1} parent=11 // pred_check
          %p340 = pneg %p215
        $region42: #{dinov2_forward.1} parent=11 // pred_check_branch
          %342 = sbr.rel (%p340) target = $region44
        $region43: #{dinov2_forward.1} parent=11 // pred_region
          _
        $region44: #{dinov2_forward.1} parent=11 // pred_fallthru
          _
        // Predicated region
        $region45: #{dinov2_forward.1} parent=11 // pred_check
          %p343 = pneg %p236
        $region46: #{dinov2_forward.1} parent=11 // pred_check_branch
          %345 = sbr.rel (%p343) target = $region48
        $region47: #{dinov2_forward.1} parent=11 // pred_region
          _
        $region48: #{dinov2_forward.1} parent=11 // pred_fallthru
          _
        // Predicated region
        $region49: #{dinov2_forward.1} parent=11 // pred_check
          %p346 = pneg %p257
        $region50: #{dinov2_forward.1} parent=11 // pred_check_branch
          %348 = sbr.rel (%p346) target = $region52
        $region51: #{dinov2_forward.1} parent=11 // pred_region
          _
        $region52: #{dinov2_forward.1} parent=11 // pred_fallthru
          _
        // Predicated region
        $region53: #{dinov2_forward.1} parent=11 // pred_check
          %p349 = pneg %p278
        $region54: #{dinov2_forward.1} parent=11 // pred_check_branch
          %351 = sbr.rel (%p349) target = $region56
        $region55: #{dinov2_forward.1} parent=11 // pred_region
          _
        $region56: #{dinov2_forward.1} parent=11 // pred_fallthru
          _
      $region12: #{dinov2_forward.1} parent=5 // pred_fallthru
        _
      %p352 = scmp.lt.s32.totalorder %s21, 2
      // Predicated region
      $region57: #{dinov2_forward.1} parent=5 // pred_check
        %p353 = pneg %p352
      $region58: #{dinov2_forward.1} parent=5 // pred_check_branch
        %355 = sbr.rel (%p353) target = $region60
      $region59: #{dinov2_forward.1} parent=5 // pred_region
        // Predicated region
        $region61: #{dinov2_forward.1} parent=59 // pred_check
          %p356 = pneg %p41
        $region62: #{dinov2_forward.1} parent=59 // pred_check_branch
          %358 = sbr.rel (%p356) target = $region64
        $region63: #{dinov2_forward.1} parent=59 // pred_region
          %p359 = scmp.lt.s32.totalorder %s21, 1
          %s360 = scalar_select %p359, %s21, 1
          %s361 = smul.addr %s360, 4
          %s362 = smul.addr %s361, 8
          %s363 = scalar_lea.vmem %s0, %s362
        $region64: #{dinov2_forward.1} parent=59 // pred_fallthru
          _
      $region60: #{dinov2_forward.1} parent=5 // pred_fallthru
        _
      %p364 = scmp.le.s32.totalorder 1, %s21
      %p365 = scmp.lt.s32.totalorder %s21, 3
      %p366 = pnand %p364, %p365
      %p367 = pneg %p366
      // Predicated region
      $region65: #{dinov2_forward.1} parent=5 // pred_check
        _
      $region66: #{dinov2_forward.1} parent=5 // pred_check_branch
        %369 = sbr.rel (%p366) target = $region68
      $region67: #{dinov2_forward.1} parent=5 // pred_region
        %s370 = ssub.s32 %s21, 1
        %p371 = scmp.lt.s32.totalorder %s26, 1
        %s372 = scalar_select %p371, %s26, 1
        %s373 = smul.addr %s372, 4
        %s374 = smul.addr %s373, 8
        %s375 = scalar_lea.vmem %s0, %s374
        %p376 = pneg %p47
        %p377 = pneg %p44
        %p378 = pneg %p68
        %p379 = pneg %p65
        %p380 = pneg %p89
        %p381 = pneg %p86
        %p382 = pneg %p110
        %p383 = pneg %p107
        %p384 = pneg %p131
        %p385 = pneg %p128
        %p386 = pneg %p152
        %p387 = pneg %p149
        %p388 = pneg %p173
        %p389 = pneg %p170
        %p390 = pneg %p194
        %p391 = pneg %p191
        %p392 = pneg %p215
        %p393 = pneg %p212
        %p394 = pneg %p236
        %p395 = pneg %p233
        %p396 = pneg %p257
        %p397 = pneg %p254
        %p398 = pneg %p278
        %p399 = pneg %p275
        %p400 = pneg %p304
        %p401 = pneg %p301
        %s402 = sand.u32 %s291, 1
        %s403 = scalar_lea.sflag [#allocation3], %s402
        %s404 = sand.u32 %s291, 1
        %s405 = scalar_lea.vmem [#allocation2], %s404
        %p406 = scmp.lt.s32.totalorder %s26, 1
        %s407 = scalar_select %p406, %s26, 1
        %s408 = smul.addr %s407, 4
        %s409 = smul.addr %s408, 8
        %s410 = scalar_lea.vmem %s0, %s409
        %v412 = vld [vmem:[%s410] sm:$0xff]
        %v413 = vld [vmem:[%s410 + $0x8] sm:$0xff]
        %v414 = vld [vmem:[%s410 + $0x10] sm:$0xff]
        %v415 = vld [vmem:[%s410 + $0x18] sm:$0xff]
        %v416 = vpack.c.bf16 %v414, %v412
        %v417 = vpack.c.bf16 %v415, %v413
        %v418 = vld [vmem:[%s2] sm:$0xf]
        %v419 = vld [vmem:[%s2 + $0x4] sm:$0xf]
        %v420 = vld [vmem:[%s2 + $0x8] sm:$0xf]
        %v421 = vld [vmem:[%s2 + $0xc] sm:$0xf]
        %v422 = vld [vmem:[%s2 + $0x10] sm:$0xf]
        %v423 = vld [vmem:[%s2 + $0x14] sm:$0xf]
        %v424 = vld [vmem:[%s2 + $0x18] sm:$0xf]
        %v425 = vld [vmem:[%s2 + $0x1c] sm:$0xf]
        %v426 = vld [vmem:[%s2 + $0x20] sm:$0xf]
        %v427 = vld [vmem:[%s2 + $0x24] sm:$0xf]
        %v428 = vld [vmem:[%s2 + $0x28] sm:$0xf]
        %v429 = vld [vmem:[%s2 + $0x2c] sm:$0xf]
        %v430 = vld [vmem:[%s2 + $0x30] sm:$0xf]
        %v431 = vld [vmem:[%s2 + $0x34] sm:$0xf]
        %v432 = vld [vmem:[%s2 + $0x38] sm:$0xf]
        %v433 = vld [vmem:[%s2 + $0x3c] sm:$0xf]
        %v434 = vld [vmem:[%s2 + $0x40] sm:$0xf]
        %v435 = vld [vmem:[%s2 + $0x44] sm:$0xf]
        %v436 = vld [vmem:[%s2 + $0x48] sm:$0xf]
        %v437 = vld [vmem:[%s2 + $0x4c] sm:$0xf]
        %v438 = vld [vmem:[%s2 + $0x50] sm:$0xf]
        %v439 = vld [vmem:[%s2 + $0x54] sm:$0xf]
        %v440 = vld [vmem:[%s2 + $0x58] sm:$0xf]
        %v441 = vld [vmem:[%s2 + $0x5c] sm:$0xf]
        %v442 = vld [vmem:[%s1] sm:$0xff]
        %v443 = vld [vmem:[%s1 + $0x8] sm:$0xff]
        %v468 = vunpack.c.l.b16 %v418
        %v469 = vunpack.c.l.b16 %v419
        %v470 = vunpack.c.l.b16 %v420
        %v471 = vunpack.c.l.b16 %v421
        %v472 = vunpack.c.l.b16 %v422
        %v473 = vunpack.c.l.b16 %v423
        %v474 = vunpack.c.l.b16 %v424
        %v475 = vunpack.c.l.b16 %v425
        %v476 = vunpack.c.l.b16 %v426
        %v477 = vunpack.c.l.b16 %v427
        %v478 = vunpack.c.l.b16 %v428
        %v479 = vunpack.c.l.b16 %v429
        %v480 = vunpack.c.l.b16 %v430
        %v481 = vunpack.c.l.b16 %v431
        %v482 = vunpack.c.l.b16 %v432
        %v483 = vunpack.c.l.b16 %v433
        %v484 = vunpack.c.l.b16 %v434
        %v485 = vunpack.c.l.b16 %v435
        %v486 = vunpack.c.l.b16 %v436
        %v487 = vunpack.c.l.b16 %v437
        %v488 = vunpack.c.l.b16 %v438
        %v489 = vunpack.c.l.b16 %v439
        %v490 = vunpack.c.l.b16 %v440
        %v491 = vunpack.c.l.b16 %v441
        %v492 = vpack.c.b16 %v469, %v468
        %v493 = vpack.c.b16 %v471, %v470
        %v494 = vpack.c.b16 %v473, %v472
        %v495 = vpack.c.b16 %v475, %v474
        %v496 = vpack.c.b16 %v477, %v476
        %v497 = vpack.c.b16 %v479, %v478
        %v498 = vpack.c.b16 %v481, %v480
        %v499 = vpack.c.b16 %v483, %v482
        %v500 = vpack.c.b16 %v485, %v484
        %v501 = vpack.c.b16 %v487, %v486
        %v502 = vpack.c.b16 %v489, %v488
        %v503 = vpack.c.b16 %v491, %v490
        %vm516 = vcmask 523264
        %v518 = vsel %vm516, %v417, 0
        %520 = vmatprep.subr.bf16.mxu0 0
        %521 = vmatpush1.bf16.msra.mxu0 %v492
        %522 = vmatprep.subr.bf16.mxu0 0
        %523 = vmatpush1.bf16.msra.mxu0 %v493
        %524 = vmatprep.subr.bf16.mxu0 0
        %525 = vmatpush1.bf16.msra.mxu0 %v494
        %526 = vmatprep.subr.bf16.mxu0 0
        %527 = vmatpush1.bf16.msra.mxu0 %v495
        %528 = vmatprep.subr.bf16.mxu0 0
        %529 = vmatpush1.bf16.msra.mxu0 %v496
        %530 = vmatprep.subr.bf16.mxu0 0
        %531 = vmatpush1.bf16.msra.mxu0 %v497
        %532 = vmatprep.subr.bf16.mxu0 0
        %533 = vmatpush1.bf16.msra.mxu0 %v498
        %534 = vmatprep.subr.bf16.mxu0 0
        %535 = vmatpush1.bf16.msra.mxu0 %v499
        %536 = vmatprep.subr.bf16.mxu0 0
        %537 = vmatpush1.bf16.msra.mxu0 %v500
        %538 = vmatprep.subr.bf16.mxu0 0
        %539 = vmatpush1.bf16.msra.mxu0 %v501
        %540 = vmatprep.subr.bf16.mxu0 0
        %541 = vmatpush1.bf16.msra.mxu0 %v502
        %542 = vmatprep.subr.bf16.mxu0 0
        %543 = vmatpush1.bf16.msra.mxu0 %v503
        %544 = vmatprep.subr.bf16.mxu0 0
        %545 = vmatpush1.bf16.msra.mxu0 0
        %546 = vmatprep.subr.bf16.mxu0 0
        %547 = vmatpush1.bf16.msra.mxu0 0
        %548 = vmatprep.subr.bf16.mxu0 0
        %549 = vmatpush1.bf16.msra.mxu0 0
        %550 = vmatprep.subr.bf16.mxu0 0
        %551 = vmatpush1.bf16.msra.mxu0 0
        %552 = vmatprep.mubr.bf16.mxu0 %v518
        %553 = vmatmul.mubr.bf16.gmra.mrb[0].mxu0 %v416
        %v554 = vpop.f32.mrb[0].mxu0
        %v555 = vadd.f32 %v442, %v554
        %v556 = vpop.f32.mrb[0].mxu0
        %v557 = vpop.f32.mrb[0].mxu0
        %v558 = vadd.f32 %v443, %v557
        %v559 = vpop.f32.mrb[0].mxu0
        %560 = vdwg.mxu0
        %v561 = vlaneseq
        %v562 = vand.u32 %v561, 127
        %vm563 = vcmp.lt.s32.totalorder %v562, 5
        %v564 = vld [vmem:[%s9] sm:$0xff]
        %v565 = vsel %vm516, %v555, 0.0
        %566 = vadd.xlane.f32.xlu0 %v565
        %v567 = vpop.xlane.xlu0 %566
        %v568 = vsel %vm516, %v558, 0.0
        %569 = vadd.xlane.f32.xlu0 %v568
        %v570 = vpop.xlane.xlu0 %569
        %v571 = vrcp.pop 64.0
        %v572 = vmul.f32 %v567, %v571
        %v573 = vmul.f32 %v570, %v571
        %v574 = vsub.f32 %v555, %v572
        %v575 = vsub.f32 %v558, %v573
        %v576 = vmul.f32 %v574, %v574
        %v577 = vmul.f32 %v575, %v575
        %v578 = vsel %vm516, %v576, 0.0
        %579 = vadd.xlane.f32.xlu0 %v578
        %v580 = vpop.xlane.xlu0 %579
        %v581 = vsel %vm516, %v577, 0.0
        %582 = vadd.xlane.f32.xlu0 %v581
        %v583 = vpop.xlane.xlu0 %582
        %v584 = vmul.f32 %v580, %v571
        %v585 = vmul.f32 %v583, %v571
        %v586 = vadd.f32 %v584, 1e-06
        %v587 = vadd.f32 %v585, 1e-06
        %v588 = vrsqrt.pop %v586
        %v589 = vrsqrt.pop %v587
        %v590 = vmul.f32 %v574, %v588
        %v591 = vmul.f32 %v575, %v589
        %v592 = vlaneseq
        %v593 = vshrl.u32 %v592, 7
        %v594 = vsub.s32 0, %v593
        %v595 = vrot.slane %v564, %v594
        %v596 = vmul.f32 %v590, %v595
        %v597 = vmul.f32 %v591, %v595
        %v598 = vlaneseq
        %v599 = vshrl.u32 %v598, 7
        %v600 = vsub.s32 1, %v599
        %v601 = vrot.slane %v564, %v600
        %v602 = vadd.f32 %v596, %v601
        %v603 = vadd.f32 %v597, %v601
        %v604 = vpack.c.bf16 %v603, %v602
        %v605 = vld [vmem:[%s3] sm:$0xff]
        %v606 = vld [vmem:[%s3 + $0x8] sm:$0xff]
        %v607 = vld [vmem:[%s3 + $0x10] sm:$0xff]
        %v608 = vld [vmem:[%s3 + $0x18] sm:$0xff]
        %v609 = vld [vmem:[%s3 + $0x20] sm:$0xff]
        %v610 = vld [vmem:[%s3 + $0x28] sm:$0xff]
        %v611 = vld [vmem:[%s3 + $0x30] sm:$0xff]
        %v612 = vld [vmem:[%s3 + $0x38] sm:$0xff]
        %v613 = vld [vmem:[%s4] sm:$0x3]
        %v615 = vlaneseq
        %v616 = vshrl.u32 %v615, 7
        %v617 = vsub.s32 0, %v616
        %v618 = vrot.slane %v613, %v617
        %v619 = vlaneseq
        %v620 = vshrl.u32 %v619, 7
        %v621 = vsub.s32 1, %v620
        %v622 = vrot.slane %v613, %v621
        %v633 = vunpack.c.l.b16 %v605
        %v634 = vunpack.c.h.b16 %v605
        %v635 = vunpack.c.l.b16 %v606
        %v636 = vunpack.c.h.b16 %v606
        %v637 = vunpack.c.l.b16 %v607
        %v638 = vunpack.c.h.b16 %v607
        %v639 = vunpack.c.l.b16 %v608
        %v640 = vunpack.c.h.b16 %v608
        %v641 = vunpack.c.l.b16 %v609
        %v642 = vunpack.c.h.b16 %v609
        %v643 = vunpack.c.l.b16 %v610
        %v644 = vunpack.c.h.b16 %v610
        %v645 = vunpack.c.l.b16 %v611
        %v646 = vunpack.c.h.b16 %v611
        %v647 = vunpack.c.l.b16 %v612
        %v648 = vunpack.c.h.b16 %v612
        %v649 = vpack.c.b16 %v635, %v633
        %v650 = vpack.c.b16 %v636, %v634
        %v651 = vpack.c.b16 %v639, %v637
        %v652 = vpack.c.b16 %v640, %v638
        %v653 = vpack.c.b16 %v643, %v641
        %v654 = vpack.c.b16 %v644, %v642
        %v655 = vpack.c.b16 %v647, %v645
        %v656 = vpack.c.b16 %v648, %v646
        %v666 = vsel %vm516, %v604, 0
        %668 = vmatprep.subr.bf16.mxu0 %v650
        %669 = vmatpush1.bf16.msra.mxu0 %v649
        %670 = vmatprep.subr.bf16.mxu0 %v652
        %671 = vmatpush1.bf16.msra.mxu0 %v651
        %672 = vmatprep.subr.bf16.mxu0 %v654
        %673 = vmatpush1.bf16.msra.mxu0 %v653
        %674 = vmatprep.subr.bf16.mxu0 %v656
        %675 = vmatpush1.bf16.msra.mxu0 %v655
        %676 = vmatprep.subr.bf16.mxu0 0
        %677 = vmatpush1.bf16.msra.mxu0 0
        %678 = vmatprep.subr.bf16.mxu0 0
        %679 = vmatpush1.bf16.msra.mxu0 0
        %680 = vmatprep.subr.bf16.mxu0 0
        %681 = vmatpush1.bf16.msra.mxu0 0
        %682 = vmatprep.subr.bf16.mxu0 0
        %683 = vmatpush1.bf16.msra.mxu0 0
        %684 = vmatprep.subr.bf16.mxu0 0
        %685 = vmatpush1.bf16.msra.mxu0 0
        %686 = vmatprep.subr.bf16.mxu0 0
        %687 = vmatpush1.bf16.msra.mxu0 0
        %688 = vmatprep.subr.bf16.mxu0 0
        %689 = vmatpush1.bf16.msra.mxu0 0
        %690 = vmatprep.subr.bf16.mxu0 0
        %691 = vmatpush1.bf16.msra.mxu0 0
        %692 = vmatprep.subr.bf16.mxu0 0
        %693 = vmatpush1.bf16.msra.mxu0 0
        %694 = vmatprep.subr.bf16.mxu0 0
        %695 = vmatpush1.bf16.msra.mxu0 0
        %696 = vmatprep.subr.bf16.mxu0 0
        %697 = vmatpush1.bf16.msra.mxu0 0
        %698 = vmatprep.subr.bf16.mxu0 0
        %699 = vmatpush1.bf16.msra.mxu0 0
        %700 = vmatprep.mubr.bf16.mxu0 0
        %701 = vmatmul.mubr.bf16.gmra.mrb[0].mxu0 %v666
        %v702 = vpop.f32.mrb[0].mxu0
        %v703 = vadd.f32 %v618, %v702
        %v704 = vpop.f32.mrb[0].mxu0
        %v705 = vadd.f32 %v622, %v704
        %v706 = vpop.f32.mrb[0].mxu0
        %v707 = vadd.f32 %v618, %v706
        %v708 = vpop.f32.mrb[0].mxu0
        %v709 = vadd.f32 %v622, %v708
        %710 = vdwg.mxu0
        %v711 = vmul.f32 %v703, 0.17677669
        %v712 = vmul.f32 %v707, 0.17677669
        %v713 = vpack.c.bf16 %v712, %v711
        %v714 = vpack.c.bf16 %v707, %v703
        %716 = vrot.lane.b32.xlu0 %v714, 64
        %v717 = vpop.permute.xlu0 %716
        %vm718 = vcmask 261120
        %v720 = vsel %vm718, %v713, 0
        %v723 = vsel %vm718, %v717, 0
        %725 = vmatprep.subr.bf16.mxu0 0
        %726 = vmatpush1.bf16.xpose.msra.mxu0 %v723
        %727 = vmatprep.subr.bf16.mxu0 0
        %728 = vmatpush1.bf16.xpose.msra.mxu0 0
        %729 = vmatprep.subr.bf16.mxu0 0
        %730 = vmatpush1.bf16.xpose.msra.mxu0 0
        %731 = vmatprep.subr.bf16.mxu0 0
        %732 = vmatpush1.bf16.xpose.msra.mxu0 0
        %733 = vmatprep.subr.bf16.mxu0 0
        %734 = vmatpush1.bf16.xpose.msra.mxu0 0
        %735 = vmatprep.subr.bf16.mxu0 0
        %736 = vmatpush1.bf16.xpose.msra.mxu0 0
        %737 = vmatprep.subr.bf16.mxu0 0
        %738 = vmatpush1.bf16.xpose.msra.mxu0 0
        %739 = vmatprep.subr.bf16.mxu0 0
        %740 = vmatpush1.bf16.xpose.msra.mxu0 0
        %741 = vmatprep.subr.bf16.mxu0 0
        %742 = vmatpush1.bf16.xpose.msra.mxu0 0
        %743 = vmatprep.subr.bf16.mxu0 0
        %744 = vmatpush1.bf16.xpose.msra.mxu0 0
        %745 = vmatprep.subr.bf16.mxu0 0
        %746 = vmatpush1.bf16.xpose.msra.mxu0 0
        %747 = vmatprep.subr.bf16.mxu0 0
        %748 = vmatpush1.bf16.xpose.msra.mxu0 0
        %749 = vmatprep.subr.bf16.mxu0 0
        %750 = vmatpush1.bf16.xpose.msra.mxu0 0
        %751 = vmatprep.subr.bf16.mxu0 0
        %752 = vmatpush1.bf16.xpose.msra.mxu0 0
        %753 = vmatprep.subr.bf16.mxu0 0
        %754 = vmatpush1.bf16.xpose.msra.mxu0 0
        %755 = vmatprep.subr.bf16.mxu0 0
        %756 = vmatpush1.bf16.xpose.msra.mxu0 0
        %757 = vmatprep.mubr.bf16.mxu0 0
        %758 = vmatmul.mubr.bf16.gmra.mrb[0].mxu0 %v720
        %v759 = vpop.f32.mrb[0].mxu0
        %v760 = vadd.f32 0.0, %v759
        %v761 = vpop.f32.mrb[0].mxu0
        %v762 = vpop.f32.mrb[0].mxu0
        %v763 = vadd.f32 0.0, %v762
        %v764 = vpop.f32.mrb[0].mxu0
        %765 = vdwg.mxu0
        %v766 = vsel %vm563, %v760, -1e+30
        %v767 = vsel %vm563, %v763, -1e+30
        %vm768 = vcmask 130048
        %v769 = vsel %vm768, %v766, -inf
        %770 = vmax.xlane.f32.xlu0 %v769
        %v771 = vpop.xlane.xlu0 %770
        %v772 = vsel %vm768, %v767, -inf
        %773 = vmax.xlane.f32.xlu0 %v772
        %v774 = vpop.xlane.xlu0 %773
        %v775 = vsub.f32 %v766, %v771
        %v776 = vsub.f32 %v767, %v774
        %v777 = vmul.f32 %v775, 1.442695
        %v778 = vpow.pop %v777
        %v779 = vmul.f32 %v776, 1.442695
        %v780 = vpow.pop %v779
        %v781 = vsel %vm768, %v778, 0.0
        %782 = vadd.xlane.f32.xlu0 %v781
        %v783 = vpop.xlane.xlu0 %782
        %v784 = vsel %vm768, %v780, 0.0
        %785 = vadd.xlane.f32.xlu0 %v784
        %v786 = vpop.xlane.xlu0 %785
        %v787 = vrcp.pop %v783
        %v788 = vrcp.pop %v786
        %v789 = vmul.f32 %v778, %v787
        %v790 = vmul.f32 %v780, %v788
        %v791 = vpack.c.bf16 %v790, %v789
        %v792 = vpack.c.bf16 %v709, %v705
        %v794 = vsel %vm768, %v791, 0
        %796 = vmatprep.subr.bf16.mxu0 0
        %797 = vmatpush1.bf16.msra.mxu0 %v792
        %798 = vmatprep.subr.bf16.mxu0 0
        %799 = vmatpush1.bf16.msra.mxu0 0
        %800 = vmatprep.subr.bf16.mxu0 0
        %801 = vmatpush1.bf16.msra.mxu0 0
        %802 = vmatprep.subr.bf16.mxu0 0
        %803 = vmatpush1.bf16.msra.mxu0 0
        %804 = vmatprep.subr.bf16.mxu0 0
        %805 = vmatpush1.bf16.msra.mxu0 0
        %806 = vmatprep.subr.bf16.mxu0 0
        %807 = vmatpush1.bf16.msra.mxu0 0
        %808 = vmatprep.subr.bf16.mxu0 0
        %809 = vmatpush1.bf16.msra.mxu0 0
        %810 = vmatprep.subr.bf16.mxu0 0
        %811 = vmatpush1.bf16.msra.mxu0 0
        %812 = vmatprep.subr.bf16.mxu0 0
        %813 = vmatpush1.bf16.msra.mxu0 0
        %814 = vmatprep.subr.bf16.mxu0 0
        %815 = vmatpush1.bf16.msra.mxu0 0
        %816 = vmatprep.subr.bf16.mxu0 0
        %817 = vmatpush1.bf16.msra.mxu0 0
        %818 = vmatprep.subr.bf16.mxu0 0
        %819 = vmatpush1.bf16.msra.mxu0 0
        %820 = vmatprep.subr.bf16.mxu0 0
        %821 = vmatpush1.bf16.msra.mxu0 0
        %822 = vmatprep.subr.bf16.mxu0 0
        %823 = vmatpush1.bf16.msra.mxu0 0
        %824 = vmatprep.subr.bf16.mxu0 0
        %825 = vmatpush1.bf16.msra.mxu0 0
        %826 = vmatprep.subr.bf16.mxu0 0
        %827 = vmatpush1.bf16.msra.mxu0 0
        %828 = vmatprep.mubr.bf16.mxu0 0
        %829 = vmatmul.mubr.bf16.gmra.mrb[0].mxu0 %v794
        %v830 = vpop.f32.mrb[0].mxu0
        %v831 = vadd.f32 0.0, %v830
        %v832 = vpop.f32.mrb[0].mxu0
        %v833 = vpop.f32.mrb[0].mxu0
        %v834 = vadd.f32 0.0, %v833
        %v835 = vpop.f32.mrb[0].mxu0
        %836 = vdwg.mxu0
        %838 = vrot.lane.b32.xlu0 %v713, 96
        %v839 = vpop.permute.xlu0 %838
        %840 = vrot.lane.b32.xlu0 %v714, 32
        %v841 = vpop.permute.xlu0 %840
        %v843 = vsel %vm718, %v839, 0
        %v846 = vsel %vm718, %v841, 0
        %848 = vmatprep.subr.bf16.mxu0 0
        %849 = vmatpush1.bf16.xpose.msra.mxu0 %v846
        %850 = vmatprep.subr.bf16.mxu0 0
        %851 = vmatpush1.bf16.xpose.msra.mxu0 0
        %852 = vmatprep.subr.bf16.mxu0 0
        %853 = vmatpush1.bf16.xpose.msra.mxu0 0
        %854 = vmatprep.subr.bf16.mxu0 0
        %855 = vmatpush1.bf16.xpose.msra.mxu0 0
        %856 = vmatprep.subr.bf16.mxu0 0
        %857 = vmatpush1.bf16.xpose.msra.mxu0 0
        %858 = vmatprep.subr.bf16.mxu0 0
        %859 = vmatpush1.bf16.xpose.msra.mxu0 0
        %860 = vmatprep.subr.bf16.mxu0 0
        %861 = vmatpush1.bf16.xpose.msra.mxu0 0
        %862 = vmatprep.subr.bf16.mxu0 0
        %863 = vmatpush1.bf16.xpose.msra.mxu0 0
        %864 = vmatprep.subr.bf16.mxu0 0
        %865 = vmatpush1.bf16.xpose.msra.mxu0 0
        %866 = vmatprep.subr.bf16.mxu0 0
        %867 = vmatpush1.bf16.xpose.msra.mxu0 0
        %868 = vmatprep.subr.bf16.mxu0 0
        %869 = vmatpush1.bf16.xpose.msra.mxu0 0
        %870 = vmatprep.subr.bf16.mxu0 0
        %871 = vmatpush1.bf16.xpose.msra.mxu0 0
        %872 = vmatprep.subr.bf16.mxu0 0
        %873 = vmatpush1.bf16.xpose.msra.mxu0 0
        %874 = vmatprep.subr.bf16.mxu0 0
        %875 = vmatpush1.bf16.xpose.msra.mxu0 0
        %876 = vmatprep.subr.bf16.mxu0 0
        %877 = vmatpush1.bf16.xpose.msra.mxu0 0
        %878 = vmatprep.subr.bf16.mxu0 0
        %879 = vmatpush1.bf16.xpose.msra.mxu0 0
        %880 = vmatprep.mubr.bf16.mxu0 0
        %881 = vmatmul.mubr.bf16.gmra.mrb[0].mxu0 %v843
        %v882 = vpop.f32.mrb[0].mxu0
        %v883 = vadd.f32 0.0, %v882
        %v884 = vpop.f32.mrb[0].mxu0
        %v885 = vpop.f32.mrb[0].mxu0
        %v886 = vadd.f32 0.0, %v885
        %v887 = vpop.f32.mrb[0].mxu0
        %888 = vdwg.mxu0
        %v889 = vsel %vm563, %v883, -1e+30
        %v890 = vsel %vm563, %v886, -1e+30
        %v891 = vsel %vm768, %v889, -inf
        %892 = vmax.xlane.f32.xlu0 %v891
        %v893 = vpop.xlane.xlu0 %892
        %v894 = vsel %vm768, %v890, -inf
        %895 = vmax.xlane.f32.xlu0 %v894
        %v896 = vpop.xlane.xlu0 %895
        %v897 = vsub.f32 %v889, %v893
        %v898 = vsub.f32 %v890, %v896
        %v899 = vmul.f32 %v897, 1.442695
        %v900 = vpow.pop %v899
        %v901 = vmul.f32 %v898, 1.442695
        %v902 = vpow.pop %v901
        %v903 = vsel %vm768, %v900, 0.0
        %904 = vadd.xlane.f32.xlu0 %v903
        %v905 = vpop.xlane.xlu0 %904
        %v906 = vsel %vm768, %v902, 0.0
        %907 = vadd.xlane.f32.xlu0 %v906
        %v908 = vpop.xlane.xlu0 %907
        %v909 = vrcp.pop %v905
        %v910 = vrcp.pop %v908
        %v911 = vmul.f32 %v900, %v909
        %v912 = vmul.f32 %v902, %v910
        %v913 = vpack.c.bf16 %v912, %v911
        %915 = vrot.lane.b32.xlu0 %v792, 96
        %v916 = vpop.permute.xlu0 %915
        %v919 = vsel %vm768, %v913, 0
        %921 = vmatprep.subr.bf16.mxu0 0
        %922 = vmatpush1.bf16.msra.mxu0 %v916
        %923 = vmatprep.subr.bf16.mxu0 0
        %924 = vmatpush1.bf16.msra.mxu0 0
        %925 = vmatprep.subr.bf16.mxu0 0
        %926 = vmatpush1.bf16.msra.mxu0 0
        %927 = vmatprep.subr.bf16.mxu0 0
        %928 = vmatpush1.bf16.msra.mxu0 0
        %929 = vmatprep.subr.bf16.mxu0 0
        %930 = vmatpush1.bf16.msra.mxu0 0
        %931 = vmatprep.subr.bf16.mxu0 0
        %932 = vmatpush1.bf16.msra.mxu0 0
        %933 = vmatprep.subr.bf16.mxu0 0
        %934 = vmatpush1.bf16.msra.mxu0 0
        %935 = vmatprep.subr.bf16.mxu0 0
        %936 = vmatpush1.bf16.msra.mxu0 0
        %937 = vmatprep.subr.bf16.mxu0 0
        %938 = vmatpush1.bf16.msra.mxu0 0
        %939 = vmatprep.subr.bf16.mxu0 0
        %940 = vmatpush1.bf16.msra.mxu0 0
        %941 = vmatprep.subr.bf16.mxu0 0
        %942 = vmatpush1.bf16.msra.mxu0 0
        %943 = vmatprep.subr.bf16.mxu0 0
        %944 = vmatpush1.bf16.msra.mxu0 0
        %945 = vmatprep.subr.bf16.mxu0 0
        %946 = vmatpush1.bf16.msra.mxu0 0
        %947 = vmatprep.subr.bf16.mxu0 0
        %948 = vmatpush1.bf16.msra.mxu0 0
        %949 = vmatprep.subr.bf16.mxu0 0
        %950 = vmatpush1.bf16.msra.mxu0 0
        %951 = vmatprep.subr.bf16.mxu0 0
        %952 = vmatpush1.bf16.msra.mxu0 0
        %953 = vmatprep.mubr.bf16.mxu0 0
        %954 = vmatmul.mubr.bf16.gmra.mrb[0].mxu0 %v919
        %v955 = vpop.f32.mrb[0].mxu0
        %v956 = vadd.f32 0.0, %v955
        %v957 = vpop.f32.mrb[0].mxu0
        %v958 = vpop.f32.mrb[0].mxu0
        %v959 = vadd.f32 0.0, %v958
        %v960 = vpop.f32.mrb[0].mxu0
        %961 = vdwg.mxu0
        %964 = vrot.lane.b32.xlu0 %v956, 32
        %v965 = vpop.permute.xlu0 %964
        %966 = vrot.lane.b32.xlu0 %v959, 32
        %v967 = vpop.permute.xlu0 %966
        %v970 = vsel %vm718, %v831, %v965
        %v971 = vsel %vm718, %v834, %v967
        %v972 = vpack.c.bf16 %v971, %v970
        %v973 = vld [vmem:[%s5] sm:$0xf]
        %v974 = vld [vmem:[%s5 + $0x4] sm:$0xf]
        %v975 = vld [vmem:[%s5 + $0x8] sm:$0xf]
        %v976 = vld [vmem:[%s5 + $0xc] sm:$0xf]
        %v977 = vld [vmem:[%s5 + $0x10] sm:$0xf]
        %v978 = vld [vmem:[%s5 + $0x14] sm:$0xf]
        %v979 = vld [vmem:[%s5 + $0x18] sm:$0xf]
        %v980 = vld [vmem:[%s5 + $0x1c] sm:$0xf]
        %v981 = vlaneseq
        %v982 = vshrl.u32 %v981, 7
        %v983 = vsub.s32 2, %v982
        %v984 = vrot.slane %v564, %v983
        %v993 = vunpack.c.l.b16 %v973
        %v994 = vunpack.c.l.b16 %v974
        %v995 = vunpack.c.l.b16 %v975
        %v996 = vunpack.c.l.b16 %v976
        %v997 = vunpack.c.l.b16 %v977
        %v998 = vunpack.c.l.b16 %v978
        %v999 = vunpack.c.l.b16 %v979
        %v1000 = vunpack.c.l.b16 %v980
        %v1001 = vpack.c.b16 %v994, %v993
        %v1002 = vpack.c.b16 %v996, %v995
        %v1003 = vpack.c.b16 %v998, %v997
        %v1004 = vpack.c.b16 %v1000, %v999
        %v1010 = vsel %vm516, %v972, 0
        %1012 = vmatprep.subr.bf16.mxu0 0
        %1013 = vmatpush1.bf16.msra.mxu0 %v1001
        %1014 = vmatprep.subr.bf16.mxu0 0
        %1015 = vmatpush1.bf16.msra.mxu0 %v1002
        %1016 = vmatprep.subr.bf16.mxu0 0
        %1017 = vmatpush1.bf16.msra.mxu0 %v1003
        %1018 = vmatprep.subr.bf16.mxu0 0
        %1019 = vmatpush1.bf16.msra.mxu0 %v1004
        %1020 = vmatprep.subr.bf16.mxu0 0
        %1021 = vmatpush1.bf16.msra.mxu0 0
        %1022 = vmatprep.subr.bf16.mxu0 0
        %1023 = vmatpush1.bf16.msra.mxu0 0
        %1024 = vmatprep.subr.bf16.mxu0 0
        %1025 = vmatpush1.bf16.msra.mxu0 0
        %1026 = vmatprep.subr.bf16.mxu0 0
        %1027 = vmatpush1.bf16.msra.mxu0 0
        %1028 = vmatprep.subr.bf16.mxu0 0
        %1029 = vmatpush1.bf16.msra.mxu0 0
        %1030 = vmatprep.subr.bf16.mxu0 0
        %1031 = vmatpush1.bf16.msra.mxu0 0
        %1032 = vmatprep.subr.bf16.mxu0 0
        %1033 = vmatpush1.bf16.msra.mxu0 0
        %1034 = vmatprep.subr.bf16.mxu0 0
        %1035 = vmatpush1.bf16.msra.mxu0 0
        %1036 = vmatprep.subr.bf16.mxu0 0
        %1037 = vmatpush1.bf16.msra.mxu0 0
        %1038 = vmatprep.subr.bf16.mxu0 0
        %1039 = vmatpush1.bf16.msra.mxu0 0
        %1040 = vmatprep.subr.bf16.mxu0 0
        %1041 = vmatpush1.bf16.msra.mxu0 0
        %1042 = vmatprep.subr.bf16.mxu0 0
        %1043 = vmatpush1.bf16.msra.mxu0 0
        %1044 = vmatprep.mubr.bf16.mxu0 0
        %1045 = vmatmul.mubr.bf16.gmra.mrb[0].mxu0 %v1010
        %v1046 = vpop.f32.mrb[0].mxu0
        %v1047 = vadd.f32 %v984, %v1046
        %v1048 = vpop.f32.mrb[0].mxu0
        %v1049 = vpop.f32.mrb[0].mxu0
        %v1050 = vadd.f32 %v984, %v1049
        %v1051 = vpop.f32.mrb[0].mxu0
        %1052 = vdwg.mxu0
        %v1053 = vlaneseq
        %v1054 = vshrl.u32 %v1053, 7
        %v1055 = vsub.s32 3, %v1054
        %v1056 = vrot.slane %v564, %v1055
        %v1057 = vmul.f32 %v1047, %v1056
        %v1058 = vmul.f32 %v1050, %v1056
        %v1059 = vadd.f32 %v1057, %v555
        %v1060 = vadd.f32 %v1058, %v558
        %v1061 = vsel %vm516, %v1059, 0.0
        %1062 = vadd.xlane.f32.xlu0 %v1061
        %v1063 = vpop.xlane.xlu0 %1062
        %v1064 = vsel %vm516, %v1060, 0.0
        %1065 = vadd.xlane.f32.xlu0 %v1064
        %v1066 = vpop.xlane.xlu0 %1065
        %v1067 = vmul.f32 %v1063, %v571
        %v1068 = vmul.f32 %v1066, %v571
        %v1069 = vsub.f32 %v1059, %v1067
        %v1070 = vsub.f32 %v1060, %v1068
        %v1071 = vmul.f32 %v1069, %v1069
        %v1072 = vmul.f32 %v1070, %v1070
        %v1073 = vsel %vm516, %v1071, 0.0
        %1074 = vadd.xlane.f32.xlu0 %v1073
        %v1075 = vpop.xlane.xlu0 %1074
        %v1076 = vsel %vm516, %v1072, 0.0
        %1077 = vadd.xlane.f32.xlu0 %v1076
        %v1078 = vpop.xlane.xlu0 %1077
        %v1079 = vmul.f32 %v1075, %v571
        %v1080 = vmul.f32 %v1078, %v571
        %v1081 = vadd.f32 %v1079, 1e-06
        %v1082 = vadd.f32 %v1080, 1e-06
        %v1083 = vrsqrt.pop %v1081
        %v1084 = vrsqrt.pop %v1082
        %v1085 = vmul.f32 %v1069, %v1083
        %v1086 = vmul.f32 %v1070, %v1084
        %v1087 = vlaneseq
        %v1088 = vshrl.u32 %v1087, 7
        %v1089 = vsub.s32 4, %v1088
        %v1090 = vrot.slane %v564, %v1089
        %v1091 = vmul.f32 %v1085, %v1090
        %v1092 = vmul.f32 %v1086, %v1090
        %v1093 = vlaneseq
        %v1094 = vshrl.u32 %v1093, 7
        %v1095 = vsub.s32 5, %v1094
        %v1096 = vrot.slane %v564, %v1095
        %v1097 = vadd.f32 %v1091, %v1096
        %v1098 = vadd.f32 %v1092, %v1096
        %v1099 = vpack.c.bf16 %v1098, %v1097
        %v1100 = vld [vmem:[%s6] sm:$0xff]
        %v1101 = vld [vmem:[%s6 + $0x8] sm:$0xff]
        %v1102 = vld [vmem:[%s6 + $0x10] sm:$0xff]
        %v1103 = vld [vmem:[%s6 + $0x18] sm:$0xff]
        %v1104 = vld [vmem:[%s6 + $0x20] sm:$0xff]
        %v1105 = vld [vmem:[%s6 + $0x28] sm:$0xff]
        %v1106 = vld [vmem:[%s6 + $0x30] sm:$0xff]
        %v1107 = vld [vmem:[%s6 + $0x38] sm:$0xff]
        %v1108 = vld [vmem:[%s7] sm:$0x3]
        %v1110 = vlaneseq
        %v1111 = vshrl.u32 %v1110, 7
        %v1112 = vsub.s32 0, %v1111
        %v1113 = vrot.slane %v1108, %v1112
        %v1114 = vlaneseq
        %v1115 = vshrl.u32 %v1114, 7
        %v1116 = vsub.s32 1, %v1115
        %v1117 = vrot.slane %v1108, %v1116
        %v1128 = vunpack.c.l.b16 %v1100
        %v1129 = vunpack.c.h.b16 %v1100
        %v1130 = vunpack.c.l.b16 %v1101
        %v1131 = vunpack.c.h.b16 %v1101
        %v1132 = vunpack.c.l.b16 %v1102
        %v1133 = vunpack.c.h.b16 %v1102
        %v1134 = vunpack.c.l.b16 %v1103
        %v1135 = vunpack.c.h.b16 %v1103
        %v1136 = vunpack.c.l.b16 %v1104
        %v1137 = vunpack.c.h.b16 %v1104
        %v1138 = vunpack.c.l.b16 %v1105
        %v1139 = vunpack.c.h.b16 %v1105
        %v1140 = vunpack.c.l.b16 %v1106
        %v1141 = vunpack.c.h.b16 %v1106
        %v1142 = vunpack.c.l.b16 %v1107
        %v1143 = vunpack.c.h.b16 %v1107
        %v1144 = vpack.c.b16 %v1130, %v1128
        %v1145 = vpack.c.b16 %v1131, %v1129
        %v1146 = vpack.c.b16 %v1134, %v1132
        %v1147 = vpack.c.b16 %v1135, %v1133
        %v1148 = vpack.c.b16 %v1138, %v1136
        %v1149 = vpack.c.b16 %v1139, %v1137
        %v1150 = vpack.c.b16 %v1142, %v1140
        %v1151 = vpack.c.b16 %v1143, %v1141
        %v1161 = vsel %vm516, %v1099, 0
        %1163 = vmatprep.subr.bf16.mxu0 %v1145
        %1164 = vmatpush1.bf16.msra.mxu0 %v1144
        %1165 = vmatprep.subr.bf16.mxu0 %v1147
        %1166 = vmatpush1.bf16.msra.mxu0 %v1146
        %1167 = vmatprep.subr.bf16.mxu0 %v1149
        %1168 = vmatpush1.bf16.msra.mxu0 %v1148
        %1169 = vmatprep.subr.bf16.mxu0 %v1151
        %1170 = vmatpush1.bf16.msra.mxu0 %v1150
        %1171 = vmatprep.subr.bf16.mxu0 0
        %1172 = vmatpush1.bf16.msra.mxu0 0
        %1173 = vmatprep.subr.bf16.mxu0 0
        %1174 = vmatpush1.bf16.msra.mxu0 0
        %1175 = vmatprep.subr.bf16.mxu0 0
        %1176 = vmatpush1.bf16.msra.mxu0 0
        %1177 = vmatprep.subr.bf16.mxu0 0
        %1178 = vmatpush1.bf16.msra.mxu0 0
        %1179 = vmatprep.subr.bf16.mxu0 0
        %1180 = vmatpush1.bf16.msra.mxu0 0
        %1181 = vmatprep.subr.bf16.mxu0 0
        %1182 = vmatpush1.bf16.msra.mxu0 0
        %1183 = vmatprep.subr.bf16.mxu0 0
        %1184 = vmatpush1.bf16.msra.mxu0 0
        %1185 = vmatprep.subr.bf16.mxu0 0
        %1186 = vmatpush1.bf16.msra.mxu0 0
        %1187 = vmatprep.subr.bf16.mxu0 0
        %1188 = vmatpush1.bf16.msra.mxu0 0
        %1189 = vmatprep.subr.bf16.mxu0 0
        %1190 = vmatpush1.bf16.msra.mxu0 0
        %1191 = vmatprep.subr.bf16.mxu0 0
        %1192 = vmatpush1.bf16.msra.mxu0 0
        %1193 = vmatprep.subr.bf16.mxu0 0
        %1194 = vmatpush1.bf16.msra.mxu0 0
        %1195 = vmatprep.mubr.bf16.mxu0 0
        %1196 = vmatmul.mubr.bf16.gmra.mrb[0].mxu0 %v1161
        %v1197 = vpop.f32.mrb[0].mxu0
        %v1198 = vadd.f32 %v1113, %v1197
        %v1199 = vpop.f32.mrb[0].mxu0
        %v1200 = vadd.f32 %v1117, %v1199
        %v1201 = vpop.f32.mrb[0].mxu0
        %v1202 = vadd.f32 %v1113, %v1201
        %v1203 = vpop.f32.mrb[0].mxu0
        %v1204 = vadd.f32 %v1117, %v1203
        %1205 = vdwg.mxu0
        %v1206 = vmul.f32 %v1198, 0.70710677
        %v1207 = vmul.f32 %v1200, 0.70710677
        %v1208 = vmul.f32 %v1202, 0.70710677
        %v1209 = vmul.f32 %v1204, 0.70710677
        %v1210 = vand.u32 2147483647, %v1206
        %v1211 = vand.u32 2147483647, %v1207
        %v1212 = vand.u32 2147483647, %v1208
        %v1213 = vand.u32 2147483647, %v1209
        %v1214 = vmul.f32 %v1210, 0.3275911
        %v1215 = vmul.f32 %v1211, 0.3275911
        %v1216 = vmul.f32 %v1212, 0.3275911
        %v1217 = vmul.f32 %v1213, 0.3275911
        %v1218 = vadd.f32 %v1214, 1.0
        %v1219 = vadd.f32 %v1215, 1.0
        %v1220 = vadd.f32 %v1216, 1.0
        %v1221 = vadd.f32 %v1217, 1.0
        %v1222 = vrcp.pop %v1218
        %v1223 = vrcp.pop %v1219
        %v1224 = vrcp.pop %v1220
        %v1225 = vrcp.pop %v1221
        %v1226 = vmul.f32 %v1222, 1.0614054
        %v1227 = vmul.f32 %v1223, 1.0614054
        %v1228 = vmul.f32 %v1224, 1.0614054
        %v1229 = vmul.f32 %v1225, 1.0614054
        %v1230 = vadd.f32 %v1226, -1.4531521
        %v1231 = vadd.f32 %v1227, -1.4531521
        %v1232 = vadd.f32 %v1228, -1.4531521
        %v1233 = vadd.f32 %v1229, -1.4531521
        %v1234 = vmul.f32 %v1222, %v1230
        %v1235 = vmul.f32 %v1223, %v1231
        %v1236 = vmul.f32 %v1224, %v1232
        %v1237 = vmul.f32 %v1225, %v1233
        %v1238 = vadd.f32 %v1234, 1.4214138
        %v1239 = vadd.f32 %v1235, 1.4214138
        %v1240 = vadd.f32 %v1236, 1.4214138
        %v1241 = vadd.f32 %v1237, 1.4214138
        %v1242 = vmul.f32 %v1222, %v1238
        %v1243 = vmul.f32 %v1223, %v1239
        %v1244 = vmul.f32 %v1224, %v1240
        %v1245 = vmul.f32 %v1225, %v1241
        %v1246 = vadd.f32 %v1242, -0.28449672
        %v1247 = vadd.f32 %v1243, -0.28449672
        %v1248 = vadd.f32 %v1244, -0.28449672
        %v1249 = vadd.f32 %v1245, -0.28449672
        %v1250 = vmul.f32 %v1222, %v1246
        %v1251 = vmul.f32 %v1223, %v1247
        %v1252 = vmul.f32 %v1224, %v1248
        %v1253 = vmul.f32 %v1225, %v1249
        %v1254 = vadd.f32 %v1250, 0.2548296
        %v1255 = vadd.f32 %v1251, 0.2548296
        %v1256 = vadd.f32 %v1252, 0.2548296
        %v1257 = vadd.f32 %v1253, 0.2548296
        %v1258 = vmul.f32 %v1222, %v1254
        %v1259 = vmul.f32 %v1223, %v1255
        %v1260 = vmul.f32 %v1224, %v1256
        %v1261 = vmul.f32 %v1225, %v1257
        %v1262 = vsub.f32 0.0, %v1210
        %v1263 = vsub.f32 0.0, %v1211
        %v1264 = vsub.f32 0.0, %v1212
        %v1265 = vsub.f32 0.0, %v1213
        %v1266 = vmul.f32 %v1262, %v1210
        %v1267 = vmul.f32 %v1263, %v1211
        %v1268 = vmul.f32 %v1264, %v1212
        %v1269 = vmul.f32 %v1265, %v1213
        %v1270 = vmul.f32 %v1266, 1.442695
        %v1271 = vpow.pop %v1270
        %v1272 = vmul.f32 %v1267, 1.442695
        %v1273 = vpow.pop %v1272
        %v1274 = vmul.f32 %v1268, 1.442695
        %v1275 = vpow.pop %v1274
        %v1276 = vmul.f32 %v1269, 1.442695
        %v1277 = vpow.pop %v1276
        %v1278 = vmul.f32 %v1258, %v1271
        %v1279 = vmul.f32 %v1259, %v1273
        %v1280 = vmul.f32 %v1260, %v1275
        %v1281 = vmul.f32 %v1261, %v1277
        %v1282 = vsub.f32 1.0, %v1278
        %v1283 = vsub.f32 1.0, %v1279
        %v1284 = vsub.f32 1.0, %v1280
        %v1285 = vsub.f32 1.0, %v1281
        %vm1286 = vcmp.ge.f32.partialorder %v1206, 0.0
        %vm1287 = vcmp.ge.f32.partialorder %v1207, 0.0
        %vm1288 = vcmp.ge.f32.partialorder %v1208, 0.0
        %vm1289 = vcmp.ge.f32.partialorder %v1209, 0.0
        %v1290 = vsub.f32 0.0, %v1282
        %v1291 = vsub.f32 0.0, %v1283
        %v1292 = vsub.f32 0.0, %v1284
        %v1293 = vsub.f32 0.0, %v1285
        %v1294 = vsel %vm1286, %v1282, %v1290
        %v1295 = vsel %vm1287, %v1283, %v1291
        %v1296 = vsel %vm1288, %v1284, %v1292
        %v1297 = vsel %vm1289, %v1285, %v1293
        %v1298 = vmul.f32 %v1198, 0.5
        %v1299 = vmul.f32 %v1200, 0.5
        %v1300 = vmul.f32 %v1202, 0.5
        %v1301 = vmul.f32 %v1204, 0.5
        %v1302 = vadd.f32 %v1294, 1.0
        %v1303 = vadd.f32 %v1295, 1.0
        %v1304 = vadd.f32 %v1296, 1.0
        %v1305 = vadd.f32 %v1297, 1.0
        %v1306 = vmul.f32 %v1298, %v1302
        %v1307 = vmul.f32 %v1299, %v1303
        %v1308 = vmul.f32 %v1300, %v1304
        %v1309 = vmul.f32 %v1301, %v1305
        %v1310 = vpack.c.bf16 %v1308, %v1306
        %v1311 = vpack.c.bf16 %v1309, %v1307
        %v1312 = vld [vmem:[%s8] sm:$0xf]
        %v1313 = vld [vmem:[%s8 + $0x4] sm:$0xf]
        %v1314 = vld [vmem:[%s8 + $0x8] sm:$0xf]
        %v1315 = vld [vmem:[%s8 + $0xc] sm:$0xf]
        %v1316 = vld [vmem:[%s8 + $0x10] sm:$0xf]
        %v1317 = vld [vmem:[%s8 + $0x14] sm:$0xf]
        %v1318 = vld [vmem:[%s8 + $0x18] sm:$0xf]
        %v1319 = vld [vmem:[%s8 + $0x1c] sm:$0xf]
        %v1320 = vld [vmem:[%s8 + $0x20] sm:$0xf]
        %v1321 = vld [vmem:[%s8 + $0x24] sm:$0xf]
        %v1322 = vld [vmem:[%s8 + $0x28] sm:$0xf]
        %v1323 = vld [vmem:[%s8 + $0x2c] sm:$0xf]
        %v1324 = vld [vmem:[%s8 + $0x30] sm:$0xf]
        %v1325 = vld [vmem:[%s8 + $0x34] sm:$0xf]
        %v1326 = vld [vmem:[%s8 + $0x38] sm:$0xf]
        %v1327 = vld [vmem:[%s8 + $0x3c] sm:$0xf]
        %v1328 = vld [vmem:[%s8 + $0x40] sm:$0xf]
        %v1329 = vld [vmem:[%s8 + $0x44] sm:$0xf]
        %v1330 = vld [vmem:[%s8 + $0x48] sm:$0xf]
        %v1331 = vld [vmem:[%s8 + $0x4c] sm:$0xf]
        %v1332 = vld [vmem:[%s8 + $0x50] sm:$0xf]
        %v1333 = vld [vmem:[%s8 + $0x54] sm:$0xf]
        %v1334 = vld [vmem:[%s8 + $0x58] sm:$0xf]
        %v1335 = vld [vmem:[%s8 + $0x5c] sm:$0xf]
        %v1336 = vld [vmem:[%s8 + $0x60] sm:$0xf]
        %v1337 = vld [vmem:[%s8 + $0x64] sm:$0xf]
        %v1338 = vld [vmem:[%s8 + $0x68] sm:$0xf]
        %v1339 = vld [vmem:[%s8 + $0x6c] sm:$0xf]
        %v1340 = vld [vmem:[%s8 + $0x70] sm:$0xf]
        %v1341 = vld [vmem:[%s8 + $0x74] sm:$0xf]
        %v1342 = vld [vmem:[%s8 + $0x78] sm:$0xf]
        %v1343 = vld [vmem:[%s8 + $0x7c] sm:$0xf]
        %v1344 = vlaneseq
        %v1345 = vshrl.u32 %v1344, 7
        %v1346 = vsub.s32 6, %v1345
        %v1347 = vrot.slane %v564, %v1346
        %v1380 = vunpack.c.l.b16 %v1312
        %v1381 = vunpack.c.l.b16 %v1313
        %v1382 = vunpack.c.l.b16 %v1314
        %v1383 = vunpack.c.l.b16 %v1315
        %v1384 = vunpack.c.l.b16 %v1316
        %v1385 = vunpack.c.l.b16 %v1317
        %v1386 = vunpack.c.l.b16 %v1318
        %v1387 = vunpack.c.l.b16 %v1319
        %v1388 = vunpack.c.l.b16 %v1320
        %v1389 = vunpack.c.l.b16 %v1321
        %v1390 = vunpack.c.l.b16 %v1322
        %v1391 = vunpack.c.l.b16 %v1323
        %v1392 = vunpack.c.l.b16 %v1324
        %v1393 = vunpack.c.l.b16 %v1325
        %v1394 = vunpack.c.l.b16 %v1326
        %v1395 = vunpack.c.l.b16 %v1327
        %v1396 = vunpack.c.l.b16 %v1328
        %v1397 = vunpack.c.l.b16 %v1329
        %v1398 = vunpack.c.l.b16 %v1330
        %v1399 = vunpack.c.l.b16 %v1331
        %v1400 = vunpack.c.l.b16 %v1332
        %v1401 = vunpack.c.l.b16 %v1333
        %v1402 = vunpack.c.l.b16 %v1334
        %v1403 = vunpack.c.l.b16 %v1335
        %v1404 = vunpack.c.l.b16 %v1336
        %v1405 = vunpack.c.l.b16 %v1337
        %v1406 = vunpack.c.l.b16 %v1338
        %v1407 = vunpack.c.l.b16 %v1339
        %v1408 = vunpack.c.l.b16 %v1340
        %v1409 = vunpack.c.l.b16 %v1341
        %v1410 = vunpack.c.l.b16 %v1342
        %v1411 = vunpack.c.l.b16 %v1343
        %v1412 = vpack.c.b16 %v1381, %v1380
        %v1413 = vpack.c.b16 %v1383, %v1382
        %v1414 = vpack.c.b16 %v1385, %v1384
        %v1415 = vpack.c.b16 %v1387, %v1386
        %v1416 = vpack.c.b16 %v1389, %v1388
        %v1417 = vpack.c.b16 %v1391, %v1390
        %v1418 = vpack.c.b16 %v1393, %v1392
        %v1419 = vpack.c.b16 %v1395, %v1394
        %v1420 = vpack.c.b16 %v1397, %v1396
        %v1421 = vpack.c.b16 %v1399, %v1398
        %v1422 = vpack.c.b16 %v1401, %v1400
        %v1423 = vpack.c.b16 %v1403, %v1402
        %v1424 = vpack.c.b16 %v1405, %v1404
        %v1425 = vpack.c.b16 %v1407, %v1406
        %v1426 = vpack.c.b16 %v1409, %v1408
        %v1427 = vpack.c.b16 %v1411, %v1410
        %1444 = vmatprep.subr.bf16.mxu0 0
        %1445 = vmatpush1.bf16.msra.mxu0 %v1412
        %1446 = vmatprep.subr.bf16.mxu0 0
        %1447 = vmatpush1.bf16.msra.mxu0 %v1413
        %1448 = vmatprep.subr.bf16.mxu0 0
        %1449 = vmatpush1.bf16.msra.mxu0 %v1414
        %1450 = vmatprep.subr.bf16.mxu0 0
        %1451 = vmatpush1.bf16.msra.mxu0 %v1415
        %1452 = vmatprep.subr.bf16.mxu0 0
        %1453 = vmatpush1.bf16.msra.mxu0 %v1416
        %1454 = vmatprep.subr.bf16.mxu0 0
        %1455 = vmatpush1.bf16.msra.mxu0 %v1417
        %1456 = vmatprep.subr.bf16.mxu0 0
        %1457 = vmatpush1.bf16.msra.mxu0 %v1418
        %1458 = vmatprep.subr.bf16.mxu0 0
        %1459 = vmatpush1.bf16.msra.mxu0 %v1419
        %1460 = vmatprep.subr.bf16.mxu0 0
        %1461 = vmatpush1.bf16.msra.mxu0 %v1420
        %1462 = vmatprep.subr.bf16.mxu0 0
        %1463 = vmatpush1.bf16.msra.mxu0 %v1421
        %1464 = vmatprep.subr.bf16.mxu0 0
        %1465 = vmatpush1.bf16.msra.mxu0 %v1422
        %1466 = vmatprep.subr.bf16.mxu0 0
        %1467 = vmatpush1.bf16.msra.mxu0 %v1423
        %1468 = vmatprep.subr.bf16.mxu0 0
        %1469 = vmatpush1.bf16.msra.mxu0 %v1424
        %1470 = vmatprep.subr.bf16.mxu0 0
        %1471 = vmatpush1.bf16.msra.mxu0 %v1425
        %1472 = vmatprep.subr.bf16.mxu0 0
        %1473 = vmatpush1.bf16.msra.mxu0 %v1426
        %1474 = vmatprep.subr.bf16.mxu0 0
        %1475 = vmatpush1.bf16.msra.mxu0 %v1427
        %1476 = vmatprep.mubr.bf16.mxu0 %v1311
        %1477 = vmatmul.mubr.bf16.gmra.mrb[0].mxu0 %v1310
        %v1478 = vpop.f32.mrb[0].mxu0
        %v1479 = vadd.f32 %v1347, %v1478
        %v1480 = vpop.f32.mrb[0].mxu0
        %v1481 = vpop.f32.mrb[0].mxu0
        %v1482 = vadd.f32 %v1347, %v1481
        %v1483 = vpop.f32.mrb[0].mxu0
        %1484 = vdwg.mxu0
        %v1485 = vlaneseq
        %v1486 = vshrl.u32 %v1485, 7
        %v1487 = vsub.s32 7, %v1486
        %v1488 = vrot.slane %v564, %v1487
        %v1489 = vmul.f32 %v1479, %v1488
        %v1490 = vmul.f32 %v1482, %v1488
        %v1491 = vadd.f32 %v1489, %v1059
        %v1492 = vadd.f32 %v1490, %v1060
        %s1493 = scalar_lea.vmem %s9, 8
        %v1494 = vld [vmem:[%s1493] sm:$0xff]
        %v1495 = vsel %vm516, %v1491, 0.0
        %1496 = vadd.xlane.f32.xlu0 %v1495
        %v1497 = vpop.xlane.xlu0 %1496
        %v1498 = vsel %vm516, %v1492, 0.0
        %1499 = vadd.xlane.f32.xlu0 %v1498
        %v1500 = vpop.xlane.xlu0 %1499
        %v1501 = vmul.f32 %v1497, %v571
        %v1502 = vmul.f32 %v1500, %v571
        %v1503 = vsub.f32 %v1491, %v1501
        %v1504 = vsub.f32 %v1492, %v1502
        %v1505 = vmul.f32 %v1503, %v1503
        %v1506 = vmul.f32 %v1504, %v1504
        %v1507 = vsel %vm516, %v1505, 0.0
        %1508 = vadd.xlane.f32.xlu0 %v1507
        %v1509 = vpop.xlane.xlu0 %1508
        %v1510 = vsel %vm516, %v1506, 0.0
        %1511 = vadd.xlane.f32.xlu0 %v1510
        %v1512 = vpop.xlane.xlu0 %1511
        %v1513 = vmul.f32 %v1509, %v571
        %v1514 = vmul.f32 %v1512, %v571
        %v1515 = vadd.f32 %v1513, 1e-06
        %v1516 = vadd.f32 %v1514, 1e-06
        %v1517 = vrsqrt.pop %v1515
        %v1518 = vrsqrt.pop %v1516
        %v1519 = vmul.f32 %v1503, %v1517
        %v1520 = vmul.f32 %v1504, %v1518
        %v1521 = vlaneseq
        %v1522 = vshrl.u32 %v1521, 7
        %v1523 = vsub.s32 0, %v1522
        %v1524 = vrot.slane %v1494, %v1523
        %v1525 = vmul.f32 %v1519, %v1524
        %v1526 = vmul.f32 %v1520, %v1524
        %v1527 = vlaneseq
        %v1528 = vshrl.u32 %v1527, 7
        %v1529 = vsub.s32 1, %v1528
        %v1530 = vrot.slane %v1494, %v1529
        %v1531 = vadd.f32 %v1525, %v1530
        %v1532 = vadd.f32 %v1526, %v1530
        %v1533 = vpack.c.bf16 %v1532, %v1531
        %s1534 = scalar_lea.vmem %s3, 64
        %v1535 = vld [vmem:[%s1534] sm:$0xff]
        %v1536 = vld [vmem:[%s1534 + $0x8] sm:$0xff]
        %v1537 = vld [vmem:[%s1534 + $0x10] sm:$0xff]
        %v1538 = vld [vmem:[%s1534 + $0x18] sm:$0xff]
        %v1539 = vld [vmem:[%s1534 + $0x20] sm:$0xff]
        %v1540 = vld [vmem:[%s1534 + $0x28] sm:$0xff]
        %v1541 = vld [vmem:[%s1534 + $0x30] sm:$0xff]
        %v1542 = vld [vmem:[%s1534 + $0x38] sm:$0xff]
        %s1543 = scalar_lea.vmem %s4, 2
        %v1544 = vld [vmem:[%s1543] sm:$0x3]
        %v1546 = vlaneseq
        %v1547 = vshrl.u32 %v1546, 7
        %v1548 = vsub.s32 0, %v1547
        %v1549 = vrot.slane %v1544, %v1548
        %v1550 = vlaneseq
        %v1551 = vshrl.u32 %v1550, 7
        %v1552 = vsub.s32 1, %v1551
        %v1553 = vrot.slane %v1544, %v1552
        %v1564 = vunpack.c.l.b16 %v1535
        %v1565 = vunpack.c.h.b16 %v1535
        %v1566 = vunpack.c.l.b16 %v1536
        %v1567 = vunpack.c.h.b16 %v1536
        %v1568 = vunpack.c.l.b16 %v1537
        %v1569 = vunpack.c.h.b16 %v1537
        %v1570 = vunpack.c.l.b16 %v1538
        %v1571 = vunpack.c.h.b16 %v1538
        %v1572 = vunpack.c.l.b16 %v1539
        %v1573 = vunpack.c.h.b16 %v1539
        %v1574 = vunpack.c.l.b16 %v1540
        %v1575 = vunpack.c.h.b16 %v1540
        %v1576 = vunpack.c.l.b16 %v1541
        %v1577 = vunpack.c.h.b16 %v1541
        %v1578 = vunpack.c.l.b16 %v1542
        %v1579 = vunpack.c.h.b16 %v1542
        %v1580 = vpack.c.b16 %v1566, %v1564
        %v1581 = vpack.c.b16 %v1567, %v1565
        %v1582 = vpack.c.b16 %v1570, %v1568
        %v1583 = vpack.c.b16 %v1571, %v1569
        %v1584 = vpack.c.b16 %v1574, %v1572
        %v1585 = vpack.c.b16 %v1575, %v1573
        %v1586 = vpack.c.b16 %v1578, %v1576
        %v1587 = vpack.c.b16 %v1579, %v1577
        %v1597 = vsel %vm516, %v1533, 0
        %1599 = vmatprep.subr.bf16.mxu0 %v1581
        %1600 = vmatpush1.bf16.msra.mxu0 %v1580
        %1601 = vmatprep.subr.bf16.mxu0 %v1583
        %1602 = vmatpush1.bf16.msra.mxu0 %v1582
        %1603 = vmatprep.subr.bf16.mxu0 %v1585
        %1604 = vmatpush1.bf16.msra.mxu0 %v1584
        %1605 = vmatprep.subr.bf16.mxu0 %v1587
        %1606 = vmatpush1.bf16.msra.mxu0 %v1586
        %1607 = vmatprep.subr.bf16.mxu0 0
        %1608 = vmatpush1.bf16.msra.mxu0 0
        %1609 = vmatprep.subr.bf16.mxu0 0
        %1610 = vmatpush1.bf16.msra.mxu0 0
        %1611 = vmatprep.subr.bf16.mxu0 0
        %1612 = vmatpush1.bf16.msra.mxu0 0
        %1613 = vmatprep.subr.bf16.mxu0 0
        %1614 = vmatpush1.bf16.msra.mxu0 0
        %1615 = vmatprep.subr.bf16.mxu0 0
        %1616 = vmatpush1.bf16.msra.mxu0 0
        %1617 = vmatprep.subr.bf16.mxu0 0
        %1618 = vmatpush1.bf16.msra.mxu0 0
        %1619 = vmatprep.subr.bf16.mxu0 0
        %1620 = vmatpush1.bf16.msra.mxu0 0
        %1621 = vmatprep.subr.bf16.mxu0 0
        %1622 = vmatpush1.bf16.msra.mxu0 0
        %1623 = vmatprep.subr.bf16.mxu0 0
        %1624 = vmatpush1.bf16.msra.mxu0 0
        %1625 = vmatprep.subr.bf16.mxu0 0
        %1626 = vmatpush1.bf16.msra.mxu0 0
        %1627 = vmatprep.subr.bf16.mxu0 0
        %1628 = vmatpush1.bf16.msra.mxu0 0
        %1629 = vmatprep.subr.bf16.mxu0 0
        %1630 = vmatpush1.bf16.msra.mxu0 0
        %1631 = vmatprep.mubr.bf16.mxu0 0
        %1632 = vmatmul.mubr.bf16.gmra.mrb[0].mxu0 %v1597
        %v1633 = vpop.f32.mrb[0].mxu0
        %v1634 = vadd.f32 %v1549, %v1633
        %v1635 = vpop.f32.mrb[0].mxu0
        %v1636 = vadd.f32 %v1553, %v1635
        %v1637 = vpop.f32.mrb[0].mxu0
        %v1638 = vadd.f32 %v1549, %v1637
        %v1639 = vpop.f32.mrb[0].mxu0
        %v1640 = vadd.f32 %v1553, %v1639
        %1641 = vdwg.mxu0
        %v1642 = vmul.f32 %v1634, 0.17677669
        %v1643 = vmul.f32 %v1638, 0.17677669
        %v1644 = vpack.c.bf16 %v1643, %v1642
        %v1645 = vpack.c.bf16 %v1638, %v1634
        %1647 = vrot.lane.b32.xlu0 %v1645, 64
        %v1648 = vpop.permute.xlu0 %1647
        %v1650 = vsel %vm718, %v1644, 0
        %v1653 = vsel %vm718, %v1648, 0
        %1655 = vmatprep.subr.bf16.mxu0 0
        %1656 = vmatpush1.bf16.xpose.msra.mxu0 %v1653
        %1657 = vmatprep.subr.bf16.mxu0 0
        %1658 = vmatpush1.bf16.xpose.msra.mxu0 0
        %1659 = vmatprep.subr.bf16.mxu0 0
        %1660 = vmatpush1.bf16.xpose.msra.mxu0 0
        %1661 = vmatprep.subr.bf16.mxu0 0
        %1662 = vmatpush1.bf16.xpose.msra.mxu0 0
        %1663 = vmatprep.subr.bf16.mxu0 0
        %1664 = vmatpush1.bf16.xpose.msra.mxu0 0
        %1665 = vmatprep.subr.bf16.mxu0 0
        %1666 = vmatpush1.bf16.xpose.msra.mxu0 0
        %1667 = vmatprep.subr.bf16.mxu0 0
        %1668 = vmatpush1.bf16.xpose.msra.mxu0 0
        %1669 = vmatprep.subr.bf16.mxu0 0
        %1670 = vmatpush1.bf16.xpose.msra.mxu0 0
        %1671 = vmatprep.subr.bf16.mxu0 0
        %1672 = vmatpush1.bf16.xpose.msra.mxu0 0
        %1673 = vmatprep.subr.bf16.mxu0 0
        %1674 = vmatpush1.bf16.xpose.msra.mxu0 0
        %1675 = vmatprep.subr.bf16.mxu0 0
        %1676 = vmatpush1.bf16.xpose.msra.mxu0 0
        %1677 = vmatprep.subr.bf16.mxu0 0
        %1678 = vmatpush1.bf16.xpose.msra.mxu0 0
        %1679 = vmatprep.subr.bf16.mxu0 0
        %1680 = vmatpush1.bf16.xpose.msra.mxu0 0
        %1681 = vmatprep.subr.bf16.mxu0 0
        %1682 = vmatpush1.bf16.xpose.msra.mxu0 0
        %1683 = vmatprep.subr.bf16.mxu0 0
        %1684 = vmatpush1.bf16.xpose.msra.mxu0 0
        %1685 = vmatprep.subr.bf16.mxu0 0
        %1686 = vmatpush1.bf16.xpose.msra.mxu0 0
        %1687 = vmatprep.mubr.bf16.mxu0 0
        %1688 = vmatmul.mubr.bf16.gmra.mrb[0].mxu0 %v1650
        %v1689 = vpop.f32.mrb[0].mxu0
        %v1690 = vadd.f32 0.0, %v1689
        %v1691 = vpop.f32.mrb[0].mxu0
        %v1692 = vpop.f32.mrb[0].mxu0
        %v1693 = vadd.f32 0.0, %v1692
        %v1694 = vpop.f32.mrb[0].mxu0
        %1695 = vdwg.mxu0
        %v1696 = vsel %vm563, %v1690, -1e+30
        %v1697 = vsel %vm563, %v1693, -1e+30
        %v1698 = vsel %vm768, %v1696, -inf
        %1699 = vmax.xlane.f32.xlu0 %v1698
        %v1700 = vpop.xlane.xlu0 %1699
        %v1701 = vsel %vm768, %v1697, -inf
        %1702 = vmax.xlane.f32.xlu0 %v1701
        %v1703 = vpop.xlane.xlu0 %1702
        %v1704 = vsub.f32 %v1696, %v1700
        %v1705 = vsub.f32 %v1697, %v1703
        %v1706 = vmul.f32 %v1704, 1.442695
        %v1707 = vpow.pop %v1706
        %v1708 = vmul.f32 %v1705, 1.442695
        %v1709 = vpow.pop %v1708
        %v1710 = vsel %vm768, %v1707, 0.0
        %1711 = vadd.xlane.f32.xlu0 %v1710
        %v1712 = vpop.xlane.xlu0 %1711
        %v1713 = vsel %vm768, %v1709, 0.0
        %1714 = vadd.xlane.f32.xlu0 %v1713
        %v1715 = vpop.xlane.xlu0 %1714
        %v1716 = vrcp.pop %v1712
        %v1717 = vrcp.pop %v1715
        %v1718 = vmul.f32 %v1707, %v1716
        %v1719 = vmul.f32 %v1709, %v1717
        %v1720 = vpack.c.bf16 %v1719, %v1718
        %v1721 = vpack.c.bf16 %v1640, %v1636
        %v1723 = vsel %vm768, %v1720, 0
        %1725 = vmatprep.subr.bf16.mxu0 0
        %1726 = vmatpush1.bf16.msra.mxu0 %v1721
        %1727 = vmatprep.subr.bf16.mxu0 0
        %1728 = vmatpush1.bf16.msra.mxu0 0
        %1729 = vmatprep.subr.bf16.mxu0 0
        %1730 = vmatpush1.bf16.msra.mxu0 0
        %1731 = vmatprep.subr.bf16.mxu0 0
        %1732 = vmatpush1.bf16.msra.mxu0 0
        %1733 = vmatprep.subr.bf16.mxu0 0
        %1734 = vmatpush1.bf16.msra.mxu0 0
        %1735 = vmatprep.subr.bf16.mxu0 0
        %1736 = vmatpush1.bf16.msra.mxu0 0
        %1737 = vmatprep.subr.bf16.mxu0 0
        %1738 = vmatpush1.bf16.msra.mxu0 0
        %1739 = vmatprep.subr.bf16.mxu0 0
        %1740 = vmatpush1.bf16.msra.mxu0 0
        %1741 = vmatprep.subr.bf16.mxu0 0
        %1742 = vmatpush1.bf16.msra.mxu0 0
        %1743 = vmatprep.subr.bf16.mxu0 0
        %1744 = vmatpush1.bf16.msra.mxu0 0
        %1745 = vmatprep.subr.bf16.mxu0 0
        %1746 = vmatpush1.bf16.msra.mxu0 0
        %1747 = vmatprep.subr.bf16.mxu0 0
        %1748 = vmatpush1.bf16.msra.mxu0 0
        %1749 = vmatprep.subr.bf16.mxu0 0
        %1750 = vmatpush1.bf16.msra.mxu0 0
        %1751 = vmatprep.subr.bf16.mxu0 0
        %1752 = vmatpush1.bf16.msra.mxu0 0
        %1753 = vmatprep.subr.bf16.mxu0 0
        %1754 = vmatpush1.bf16.msra.mxu0 0
        %1755 = vmatprep.subr.bf16.mxu0 0
        %1756 = vmatpush1.bf16.msra.mxu0 0
        %1757 = vmatprep.mubr.bf16.mxu0 0
        %1758 = vmatmul.mubr.bf16.gmra.mrb[0].mxu0 %v1723
        %v1759 = vpop.f32.mrb[0].mxu0
        %v1760 = vadd.f32 0.0, %v1759
        %v1761 = vpop.f32.mrb[0].mxu0
        %v1762 = vpop.f32.mrb[0].mxu0
        %v1763 = vadd.f32 0.0, %v1762
        %v1764 = vpop.f32.mrb[0].mxu0
        %1765 = vdwg.mxu0
        %1767 = vrot.lane.b32.xlu0 %v1644, 96
        %v1768 = vpop.permute.xlu0 %1767
        %1769 = vrot.lane.b32.xlu0 %v1645, 32
        %v1770 = vpop.permute.xlu0 %1769
        %v1772 = vsel %vm718, %v1768, 0
        %v1775 = vsel %vm718, %v1770, 0
        %1777 = vmatprep.subr.bf16.mxu0 0
        %1778 = vmatpush1.bf16.xpose.msra.mxu0 %v1775
        %1779 = vmatprep.subr.bf16.mxu0 0
        %1780 = vmatpush1.bf16.xpose.msra.mxu0 0
        %1781 = vmatprep.subr.bf16.mxu0 0
        %1782 = vmatpush1.bf16.xpose.msra.mxu0 0
        %1783 = vmatprep.subr.bf16.mxu0 0
        %1784 = vmatpush1.bf16.xpose.msra.mxu0 0
        %1785 = vmatprep.subr.bf16.mxu0 0
        %1786 = vmatpush1.bf16.xpose.msra.mxu0 0
        %1787 = vmatprep.subr.bf16.mxu0 0
        %1788 = vmatpush1.bf16.xpose.msra.mxu0 0
        %1789 = vmatprep.subr.bf16.mxu0 0
        %1790 = vmatpush1.bf16.xpose.msra.mxu0 0
        %1791 = vmatprep.subr.bf16.mxu0 0
        %1792 = vmatpush1.bf16.xpose.msra.mxu0 0
        %1793 = vmatprep.subr.bf16.mxu0 0
        %1794 = vmatpush1.bf16.xpose.msra.mxu0 0
        %1795 = vmatprep.subr.bf16.mxu0 0
        %1796 = vmatpush1.bf16.xpose.msra.mxu0 0
        %1797 = vmatprep.subr.bf16.mxu0 0
        %1798 = vmatpush1.bf16.xpose.msra.mxu0 0
        %1799 = vmatprep.subr.bf16.mxu0 0
        %1800 = vmatpush1.bf16.xpose.msra.mxu0 0
        %1801 = vmatprep.subr.bf16.mxu0 0
        %1802 = vmatpush1.bf16.xpose.msra.mxu0 0
        %1803 = vmatprep.subr.bf16.mxu0 0
        %1804 = vmatpush1.bf16.xpose.msra.mxu0 0
        %1805 = vmatprep.subr.bf16.mxu0 0
        %1806 = vmatpush1.bf16.xpose.msra.mxu0 0
        %1807 = vmatprep.subr.bf16.mxu0 0
        %1808 = vmatpush1.bf16.xpose.msra.mxu0 0
        %1809 = vmatprep.mubr.bf16.mxu0 0
        %1810 = vmatmul.mubr.bf16.gmra.mrb[0].mxu0 %v1772
        %v1811 = vpop.f32.mrb[0].mxu0
        %v1812 = vadd.f32 0.0, %v1811
        %v1813 = vpop.f32.mrb[0].mxu0
        %v1814 = vpop.f32.mrb[0].mxu0
        %v1815 = vadd.f32 0.0, %v1814
        %v1816 = vpop.f32.mrb[0].mxu0
        %1817 = vdwg.mxu0
        %v1818 = vsel %vm563, %v1812, -1e+30
        %v1819 = vsel %vm563, %v1815, -1e+30
        %v1820 = vsel %vm768, %v1818, -inf
        %1821 = vmax.xlane.f32.xlu0 %v1820
        %v1822 = vpop.xlane.xlu0 %1821
        %v1823 = vsel %vm768, %v1819, -inf
        %1824 = vmax.xlane.f32.xlu0 %v1823
        %v1825 = vpop.xlane.xlu0 %1824
        %v1826 = vsub.f32 %v1818, %v1822
        %v1827 = vsub.f32 %v1819, %v1825
        %v1828 = vmul.f32 %v1826, 1.442695
        %v1829 = vpow.pop %v1828
        %v1830 = vmul.f32 %v1827, 1.442695
        %v1831 = vpow.pop %v1830
        %v1832 = vsel %vm768, %v1829, 0.0
        %1833 = vadd.xlane.f32.xlu0 %v1832
        %v1834 = vpop.xlane.xlu0 %1833
        %v1835 = vsel %vm768, %v1831, 0.0
        %1836 = vadd.xlane.f32.xlu0 %v1835
        %v1837 = vpop.xlane.xlu0 %1836
        %v1838 = vrcp.pop %v1834
        %v1839 = vrcp.pop %v1837
        %v1840 = vmul.f32 %v1829, %v1838
        %v1841 = vmul.f32 %v1831, %v1839
        %v1842 = vpack.c.bf16 %v1841, %v1840
        %1844 = vrot.lane.b32.xlu0 %v1721, 96
        %v1845 = vpop.permute.xlu0 %1844
        %v1848 = vsel %vm768, %v1842, 0
        %1850 = vmatprep.subr.bf16.mxu0 0
        %1851 = vmatpush1.bf16.msra.mxu0 %v1845
        %1852 = vmatprep.subr.bf16.mxu0 0
        %1853 = vmatpush1.bf16.msra.mxu0 0
        %1854 = vmatprep.subr.bf16.mxu0 0
        %1855 = vmatpush1.bf16.msra.mxu0 0
        %1856 = vmatprep.subr.bf16.mxu0 0
        %1857 = vmatpush1.bf16.msra.mxu0 0
        %1858 = vmatprep.subr.bf16.mxu0 0
        %1859 = vmatpush1.bf16.msra.mxu0 0
        %1860 = vmatprep.subr.bf16.mxu0 0
        %1861 = vmatpush1.bf16.msra.mxu0 0
        %1862 = vmatprep.subr.bf16.mxu0 0
        %1863 = vmatpush1.bf16.msra.mxu0 0
        %1864 = vmatprep.subr.bf16.mxu0 0
        %1865 = vmatpush1.bf16.msra.mxu0 0
        %1866 = vmatprep.subr.bf16.mxu0 0
        %1867 = vmatpush1.bf16.msra.mxu0 0
        %1868 = vmatprep.subr.bf16.mxu0 0
        %1869 = vmatpush1.bf16.msra.mxu0 0
        %1870 = vmatprep.subr.bf16.mxu0 0
        %1871 = vmatpush1.bf16.msra.mxu0 0
        %1872 = vmatprep.subr.bf16.mxu0 0
        %1873 = vmatpush1.bf16.msra.mxu0 0
        %1874 = vmatprep.subr.bf16.mxu0 0
        %1875 = vmatpush1.bf16.msra.mxu0 0
        %1876 = vmatprep.subr.bf16.mxu0 0
        %1877 = vmatpush1.bf16.msra.mxu0 0
        %1878 = vmatprep.subr.bf16.mxu0 0
        %1879 = vmatpush1.bf16.msra.mxu0 0
        %1880 = vmatprep.subr.bf16.mxu0 0
        %1881 = vmatpush1.bf16.msra.mxu0 0
        %1882 = vmatprep.mubr.bf16.mxu0 0
        %1883 = vmatmul.mubr.bf16.gmra.mrb[0].mxu0 %v1848
        %v1884 = vpop.f32.mrb[0].mxu0
        %v1885 = vadd.f32 0.0, %v1884
        %v1886 = vpop.f32.mrb[0].mxu0
        %v1887 = vpop.f32.mrb[0].mxu0
        %v1888 = vadd.f32 0.0, %v1887
        %v1889 = vpop.f32.mrb[0].mxu0
        %1890 = vdwg.mxu0
        %1893 = vrot.lane.b32.xlu0 %v1885, 32
        %v1894 = vpop.permute.xlu0 %1893
        %1895 = vrot.lane.b32.xlu0 %v1888, 32
        %v1896 = vpop.permute.xlu0 %1895
        %v1899 = vsel %vm718, %v1760, %v1894
        %v1900 = vsel %vm718, %v1763, %v1896
        %v1901 = vpack.c.bf16 %v1900, %v1899
        %s1902 = scalar_lea.vmem %s5, 32
        %v1903 = vld [vmem:[%s1902] sm:$0xf]
        %v1904 = vld [vmem:[%s1902 + $0x4] sm:$0xf]
        %v1905 = vld [vmem:[%s1902 + $0x8] sm:$0xf]
        %v1906 = vld [vmem:[%s1902 + $0xc] sm:$0xf]
        %v1907 = vld [vmem:[%s1902 + $0x10] sm:$0xf]
        %v1908 = vld [vmem:[%s1902 + $0x14] sm:$0xf]
        %v1909 = vld [vmem:[%s1902 + $0x18] sm:$0xf]
        %v1910 = vld [vmem:[%s1902 + $0x1c] sm:$0xf]
        %v1911 = vlaneseq
        %v1912 = vshrl.u32 %v1911, 7
        %v1913 = vsub.s32 2, %v1912
        %v1914 = vrot.slane %v1494, %v1913
        %v1923 = vunpack.c.l.b16 %v1903
        %v1924 = vunpack.c.l.b16 %v1904
        %v1925 = vunpack.c.l.b16 %v1905
        %v1926 = vunpack.c.l.b16 %v1906
        %v1927 = vunpack.c.l.b16 %v1907
        %v1928 = vunpack.c.l.b16 %v1908
        %v1929 = vunpack.c.l.b16 %v1909
        %v1930 = vunpack.c.l.b16 %v1910
        %v1931 = vpack.c.b16 %v1924, %v1923
        %v1932 = vpack.c.b16 %v1926, %v1925
        %v1933 = vpack.c.b16 %v1928, %v1927
        %v1934 = vpack.c.b16 %v1930, %v1929
        %v1940 = vsel %vm516, %v1901, 0
        %1942 = vmatprep.subr.bf16.mxu0 0
        %1943 = vmatpush1.bf16.msra.mxu0 %v1931
        %1944 = vmatprep.subr.bf16.mxu0 0
        %1945 = vmatpush1.bf16.msra.mxu0 %v1932
        %1946 = vmatprep.subr.bf16.mxu0 0
        %1947 = vmatpush1.bf16.msra.mxu0 %v1933
        %1948 = vmatprep.subr.bf16.mxu0 0
        %1949 = vmatpush1.bf16.msra.mxu0 %v1934
        %1950 = vmatprep.subr.bf16.mxu0 0
        %1951 = vmatpush1.bf16.msra.mxu0 0
        %1952 = vmatprep.subr.bf16.mxu0 0
        %1953 = vmatpush1.bf16.msra.mxu0 0
        %1954 = vmatprep.subr.bf16.mxu0 0
        %1955 = vmatpush1.bf16.msra.mxu0 0
        %1956 = vmatprep.subr.bf16.mxu0 0
        %1957 = vmatpush1.bf16.msra.mxu0 0
        %1958 = vmatprep.subr.bf16.mxu0 0
        %1959 = vmatpush1.bf16.msra.mxu0 0
        %1960 = vmatprep.subr.bf16.mxu0 0
        %1961 = vmatpush1.bf16.msra.mxu0 0
        %1962 = vmatprep.subr.bf16.mxu0 0
        %1963 = vmatpush1.bf16.msra.mxu0 0
        %1964 = vmatprep.subr.bf16.mxu0 0
        %1965 = vmatpush1.bf16.msra.mxu0 0
        %1966 = vmatprep.subr.bf16.mxu0 0
        %1967 = vmatpush1.bf16.msra.mxu0 0
        %1968 = vmatprep.subr.bf16.mxu0 0
        %1969 = vmatpush1.bf16.msra.mxu0 0
        %1970 = vmatprep.subr.bf16.mxu0 0
        %1971 = vmatpush1.bf16.msra.mxu0 0
        %1972 = vmatprep.subr.bf16.mxu0 0
        %1973 = vmatpush1.bf16.msra.mxu0 0
        %1974 = vmatprep.mubr.bf16.mxu0 0
        %1975 = vmatmul.mubr.bf16.gmra.mrb[0].mxu0 %v1940
        %v1976 = vpop.f32.mrb[0].mxu0
        %v1977 = vadd.f32 %v1914, %v1976
        %v1978 = vpop.f32.mrb[0].mxu0
        %v1979 = vpop.f32.mrb[0].mxu0
        %v1980 = vadd.f32 %v1914, %v1979
        %v1981 = vpop.f32.mrb[0].mxu0
        %1982 = vdwg.mxu0
        %v1983 = vlaneseq
        %v1984 = vshrl.u32 %v1983, 7
        %v1985 = vsub.s32 3, %v1984
        %v1986 = vrot.slane %v1494, %v1985
        %v1987 = vmul.f32 %v1977, %v1986
        %v1988 = vmul.f32 %v1980, %v1986
        %v1989 = vadd.f32 %v1987, %v1491
        %v1990 = vadd.f32 %v1988, %v1492
        %v1991 = vsel %vm516, %v1989, 0.0
        %1992 = vadd.xlane.f32.xlu0 %v1991
        %v1993 = vpop.xlane.xlu0 %1992
        %v1994 = vsel %vm516, %v1990, 0.0
        %1995 = vadd.xlane.f32.xlu0 %v1994
        %v1996 = vpop.xlane.xlu0 %1995
        %v1997 = vmul.f32 %v1993, %v571
        %v1998 = vmul.f32 %v1996, %v571
        %v1999 = vsub.f32 %v1989, %v1997
        %v2000 = vsub.f32 %v1990, %v1998
        %v2001 = vmul.f32 %v1999, %v1999
        %v2002 = vmul.f32 %v2000, %v2000
        %v2003 = vsel %vm516, %v2001, 0.0
        %2004 = vadd.xlane.f32.xlu0 %v2003
        %v2005 = vpop.xlane.xlu0 %2004
        %v2006 = vsel %vm516, %v2002, 0.0
        %2007 = vadd.xlane.f32.xlu0 %v2006
        %v2008 = vpop.xlane.xlu0 %2007
        %v2009 = vmul.f32 %v2005, %v571
        %v2010 = vmul.f32 %v2008, %v571
        %v2011 = vadd.f32 %v2009, 1e-06
        %v2012 = vadd.f32 %v2010, 1e-06
        %v2013 = vrsqrt.pop %v2011
        %v2014 = vrsqrt.pop %v2012
        %v2015 = vmul.f32 %v1999, %v2013
        %v2016 = vmul.f32 %v2000, %v2014
        %v2017 = vlaneseq
        %v2018 = vshrl.u32 %v2017, 7
        %v2019 = vsub.s32 4, %v2018
        %v2020 = vrot.slane %v1494, %v2019
        %v2021 = vmul.f32 %v2015, %v2020
        %v2022 = vmul.f32 %v2016, %v2020
        %v2023 = vlaneseq
        %v2024 = vshrl.u32 %v2023, 7
        %v2025 = vsub.s32 5, %v2024
        %v2026 = vrot.slane %v1494, %v2025
        %v2027 = vadd.f32 %v2021, %v2026
        %v2028 = vadd.f32 %v2022, %v2026
        %v2029 = vpack.c.bf16 %v2028, %v2027
        %s2030 = scalar_lea.vmem %s6, 64
        %v2031 = vld [vmem:[%s2030] sm:$0xff]
        %v2032 = vld [vmem:[%s2030 + $0x8] sm:$0xff]
        %v2033 = vld [vmem:[%s2030 + $0x10] sm:$0xff]
        %v2034 = vld [vmem:[%s2030 + $0x18] sm:$0xff]
        %v2035 = vld [vmem:[%s2030 + $0x20] sm:$0xff]
        %v2036 = vld [vmem:[%s2030 + $0x28] sm:$0xff]
        %v2037 = vld [vmem:[%s2030 + $0x30] sm:$0xff]
        %v2038 = vld [vmem:[%s2030 + $0x38] sm:$0xff]
        %s2039 = scalar_lea.vmem %s7, 2
        %v2040 = vld [vmem:[%s2039] sm:$0x3]
        %v2042 = vlaneseq
        %v2043 = vshrl.u32 %v2042, 7
        %v2044 = vsub.s32 0, %v2043
        %v2045 = vrot.slane %v2040, %v2044
        %v2046 = vlaneseq
        %v2047 = vshrl.u32 %v2046, 7
        %v2048 = vsub.s32 1, %v2047
        %v2049 = vrot.slane %v2040, %v2048
        %v2060 = vunpack.c.l.b16 %v2031
        %v2061 = vunpack.c.h.b16 %v2031
        %v2062 = vunpack.c.l.b16 %v2032
        %v2063 = vunpack.c.h.b16 %v2032
        %v2064 = vunpack.c.l.b16 %v2033
        %v2065 = vunpack.c.h.b16 %v2033
        %v2066 = vunpack.c.l.b16 %v2034
        %v2067 = vunpack.c.h.b16 %v2034
        %v2068 = vunpack.c.l.b16 %v2035
        %v2069 = vunpack.c.h.b16 %v2035
        %v2070 = vunpack.c.l.b16 %v2036
        %v2071 = vunpack.c.h.b16 %v2036
        %v2072 = vunpack.c.l.b16 %v2037
        %v2073 = vunpack.c.h.b16 %v2037
        %v2074 = vunpack.c.l.b16 %v2038
        %v2075 = vunpack.c.h.b16 %v2038
        %v2076 = vpack.c.b16 %v2062, %v2060
        %v2077 = vpack.c.b16 %v2063, %v2061
        %v2078 = vpack.c.b16 %v2066, %v2064
        %v2079 = vpack.c.b16 %v2067, %v2065
        %v2080 = vpack.c.b16 %v2070, %v2068
        %v2081 = vpack.c.b16 %v2071, %v2069
        %v2082 = vpack.c.b16 %v2074, %v2072
        %v2083 = vpack.c.b16 %v2075, %v2073
        %v2093 = vsel %vm516, %v2029, 0
        %2095 = vmatprep.subr.bf16.mxu0 %v2077
        %2096 = vmatpush1.bf16.msra.mxu0 %v2076
        %2097 = vmatprep.subr.bf16.mxu0 %v2079
        %2098 = vmatpush1.bf16.msra.mxu0 %v2078
        %2099 = vmatprep.subr.bf16.mxu0 %v2081
        %2100 = vmatpush1.bf16.msra.mxu0 %v2080
        %2101 = vmatprep.subr.bf16.mxu0 %v2083
        %2102 = vmatpush1.bf16.msra.mxu0 %v2082
        %2103 = vmatprep.subr.bf16.mxu0 0
        %2104 = vmatpush1.bf16.msra.mxu0 0
        %2105 = vmatprep.subr.bf16.mxu0 0
        %2106 = vmatpush1.bf16.msra.mxu0 0
        %2107 = vmatprep.subr.bf16.mxu0 0
        %2108 = vmatpush1.bf16.msra.mxu0 0
        %2109 = vmatprep.subr.bf16.mxu0 0
        %2110 = vmatpush1.bf16.msra.mxu0 0
        %2111 = vmatprep.subr.bf16.mxu0 0
        %2112 = vmatpush1.bf16.msra.mxu0 0
        %2113 = vmatprep.subr.bf16.mxu0 0
        %2114 = vmatpush1.bf16.msra.mxu0 0
        %2115 = vmatprep.subr.bf16.mxu0 0
        %2116 = vmatpush1.bf16.msra.mxu0 0
        %2117 = vmatprep.subr.bf16.mxu0 0
        %2118 = vmatpush1.bf16.msra.mxu0 0
        %2119 = vmatprep.subr.bf16.mxu0 0
        %2120 = vmatpush1.bf16.msra.mxu0 0
        %2121 = vmatprep.subr.bf16.mxu0 0
        %2122 = vmatpush1.bf16.msra.mxu0 0
        %2123 = vmatprep.subr.bf16.mxu0 0
        %2124 = vmatpush1.bf16.msra.mxu0 0
        %2125 = vmatprep.subr.bf16.mxu0 0
        %2126 = vmatpush1.bf16.msra.mxu0 0
        %2127 = vmatprep.mubr.bf16.mxu0 0
        %2128 = vmatmul.mubr.bf16.gmra.mrb[0].mxu0 %v2093
        %v2129 = vpop.f32.mrb[0].mxu0
        %v2130 = vadd.f32 %v2045, %v2129
        %v2131 = vpop.f32.mrb[0].mxu0
        %v2132 = vadd.f32 %v2049, %v2131
        %v2133 = vpop.f32.mrb[0].mxu0
        %v2134 = vadd.f32 %v2045, %v2133
        %v2135 = vpop.f32.mrb[0].mxu0
        %v2136 = vadd.f32 %v2049, %v2135
        %2137 = vdwg.mxu0
        %v2138 = vmul.f32 %v2130, 0.70710677
        %v2139 = vmul.f32 %v2132, 0.70710677
        %v2140 = vmul.f32 %v2134, 0.70710677
        %v2141 = vmul.f32 %v2136, 0.70710677
        %v2142 = vand.u32 2147483647, %v2138
        %v2143 = vand.u32 2147483647, %v2139
        %v2144 = vand.u32 2147483647, %v2140
        %v2145 = vand.u32 2147483647, %v2141
        %v2146 = vmul.f32 %v2142, 0.3275911
        %v2147 = vmul.f32 %v2143, 0.3275911
        %v2148 = vmul.f32 %v2144, 0.3275911
        %v2149 = vmul.f32 %v2145, 0.3275911
        %v2150 = vadd.f32 %v2146, 1.0
        %v2151 = vadd.f32 %v2147, 1.0
        %v2152 = vadd.f32 %v2148, 1.0
        %v2153 = vadd.f32 %v2149, 1.0
        %v2154 = vrcp.pop %v2150
        %v2155 = vrcp.pop %v2151
        %v2156 = vrcp.pop %v2152
        %v2157 = vrcp.pop %v2153
        %v2158 = vmul.f32 %v2154, 1.0614054
        %v2159 = vmul.f32 %v2155, 1.0614054
        %v2160 = vmul.f32 %v2156, 1.0614054
        %v2161 = vmul.f32 %v2157, 1.0614054
        %v2162 = vadd.f32 %v2158, -1.4531521
        %v2163 = vadd.f32 %v2159, -1.4531521
        %v2164 = vadd.f32 %v2160, -1.4531521
        %v2165 = vadd.f32 %v2161, -1.4531521
        %v2166 = vmul.f32 %v2154, %v2162
        %v2167 = vmul.f32 %v2155, %v2163
        %v2168 = vmul.f32 %v2156, %v2164
        %v2169 = vmul.f32 %v2157, %v2165
        %v2170 = vadd.f32 %v2166, 1.4214138
        %v2171 = vadd.f32 %v2167, 1.4214138
        %v2172 = vadd.f32 %v2168, 1.4214138
        %v2173 = vadd.f32 %v2169, 1.4214138
        %v2174 = vmul.f32 %v2154, %v2170
        %v2175 = vmul.f32 %v2155, %v2171
        %v2176 = vmul.f32 %v2156, %v2172
        %v2177 = vmul.f32 %v2157, %v2173
        %v2178 = vadd.f32 %v2174, -0.28449672
        %v2179 = vadd.f32 %v2175, -0.28449672
        %v2180 = vadd.f32 %v2176, -0.28449672
        %v2181 = vadd.f32 %v2177, -0.28449672
        %v2182 = vmul.f32 %v2154, %v2178
        %v2183 = vmul.f32 %v2155, %v2179
        %v2184 = vmul.f32 %v2156, %v2180
        %v2185 = vmul.f32 %v2157, %v2181
        %v2186 = vadd.f32 %v2182, 0.2548296
        %v2187 = vadd.f32 %v2183, 0.2548296
        %v2188 = vadd.f32 %v2184, 0.2548296
        %v2189 = vadd.f32 %v2185, 0.2548296
        %v2190 = vmul.f32 %v2154, %v2186
        %v2191 = vmul.f32 %v2155, %v2187
        %v2192 = vmul.f32 %v2156, %v2188
        %v2193 = vmul.f32 %v2157, %v2189
        %v2194 = vsub.f32 0.0, %v2142
        %v2195 = vsub.f32 0.0, %v2143
        %v2196 = vsub.f32 0.0, %v2144
        %v2197 = vsub.f32 0.0, %v2145
        %v2198 = vmul.f32 %v2194, %v2142
        %v2199 = vmul.f32 %v2195, %v2143
        %v2200 = vmul.f32 %v2196, %v2144
        %v2201 = vmul.f32 %v2197, %v2145
        %v2202 = vmul.f32 %v2198, 1.442695
        %v2203 = vpow.pop %v2202
        %v2204 = vmul.f32 %v2199, 1.442695
        %v2205 = vpow.pop %v2204
        %v2206 = vmul.f32 %v2200, 1.442695
        %v2207 = vpow.pop %v2206
        %v2208 = vmul.f32 %v2201, 1.442695
        %v2209 = vpow.pop %v2208
        %v2210 = vmul.f32 %v2190, %v2203
        %v2211 = vmul.f32 %v2191, %v2205
        %v2212 = vmul.f32 %v2192, %v2207
        %v2213 = vmul.f32 %v2193, %v2209
        %v2214 = vsub.f32 1.0, %v2210
        %v2215 = vsub.f32 1.0, %v2211
        %v2216 = vsub.f32 1.0, %v2212
        %v2217 = vsub.f32 1.0, %v2213
        %vm2218 = vcmp.ge.f32.partialorder %v2138, 0.0
        %vm2219 = vcmp.ge.f32.partialorder %v2139, 0.0
        %vm2220 = vcmp.ge.f32.partialorder %v2140, 0.0
        %vm2221 = vcmp.ge.f32.partialorder %v2141, 0.0
        %v2222 = vsub.f32 0.0, %v2214
        %v2223 = vsub.f32 0.0, %v2215
        %v2224 = vsub.f32 0.0, %v2216
        %v2225 = vsub.f32 0.0, %v2217
        %v2226 = vsel %vm2218, %v2214, %v2222
        %v2227 = vsel %vm2219, %v2215, %v2223
        %v2228 = vsel %vm2220, %v2216, %v2224
        %v2229 = vsel %vm2221, %v2217, %v2225
        %v2230 = vmul.f32 %v2130, 0.5
        %v2231 = vmul.f32 %v2132, 0.5
        %v2232 = vmul.f32 %v2134, 0.5
        %v2233 = vmul.f32 %v2136, 0.5
        %v2234 = vadd.f32 %v2226, 1.0
        %v2235 = vadd.f32 %v2227, 1.0
        %v2236 = vadd.f32 %v2228, 1.0
        %v2237 = vadd.f32 %v2229, 1.0
        %v2238 = vmul.f32 %v2230, %v2234
        %v2239 = vmul.f32 %v2231, %v2235
        %v2240 = vmul.f32 %v2232, %v2236
        %v2241 = vmul.f32 %v2233, %v2237
        %v2242 = vpack.c.bf16 %v2240, %v2238
        %v2243 = vpack.c.bf16 %v2241, %v2239
        %s2244 = scalar_lea.vmem %s8, 128
        %v2245 = vld [vmem:[%s2244] sm:$0xf]
        %v2246 = vld [vmem:[%s2244 + $0x4] sm:$0xf]
        %v2247 = vld [vmem:[%s2244 + $0x8] sm:$0xf]
        %v2248 = vld [vmem:[%s2244 + $0xc] sm:$0xf]
        %v2249 = vld [vmem:[%s2244 + $0x10] sm:$0xf]
        %v2250 = vld [vmem:[%s2244 + $0x14] sm:$0xf]
        %v2251 = vld [vmem:[%s2244 + $0x18] sm:$0xf]
        %v2252 = vld [vmem:[%s2244 + $0x1c] sm:$0xf]
        %v2253 = vld [vmem:[%s2244 + $0x20] sm:$0xf]
        %v2254 = vld [vmem:[%s2244 + $0x24] sm:$0xf]
        %v2255 = vld [vmem:[%s2244 + $0x28] sm:$0xf]
        %v2256 = vld [vmem:[%s2244 + $0x2c] sm:$0xf]
        %v2257 = vld [vmem:[%s2244 + $0x30] sm:$0xf]
        %v2258 = vld [vmem:[%s2244 + $0x34] sm:$0xf]
        %v2259 = vld [vmem:[%s2244 + $0x38] sm:$0xf]
        %v2260 = vld [vmem:[%s2244 + $0x3c] sm:$0xf]
        %v2261 = vld [vmem:[%s2244 + $0x40] sm:$0xf]
        %v2262 = vld [vmem:[%s2244 + $0x44] sm:$0xf]
        %v2263 = vld [vmem:[%s2244 + $0x48] sm:$0xf]
        %v2264 = vld [vmem:[%s2244 + $0x4c] sm:$0xf]
        %v2265 = vld [vmem:[%s2244 + $0x50] sm:$0xf]
        %v2266 = vld [vmem:[%s2244 + $0x54] sm:$0xf]
        %v2267 = vld [vmem:[%s2244 + $0x58] sm:$0xf]
        %v2268 = vld [vmem:[%s2244 + $0x5c] sm:$0xf]
        %v2269 = vld [vmem:[%s2244 + $0x60] sm:$0xf]
        %v2270 = vld [vmem:[%s2244 + $0x64] sm:$0xf]
        %v2271 = vld [vmem:[%s2244 + $0x68] sm:$0xf]
        %v2272 = vld [vmem:[%s2244 + $0x6c] sm:$0xf]
        %v2273 = vld [vmem:[%s2244 + $0x70] sm:$0xf]
        %v2274 = vld [vmem:[%s2244 + $0x74] sm:$0xf]
        %v2275 = vld [vmem:[%s2244 + $0x78] sm:$0xf]
        %v2276 = vld [vmem:[%s2244 + $0x7c] sm:$0xf]
        %v2277 = vlaneseq
        %v2278 = vshrl.u32 %v2277, 7
        %v2279 = vsub.s32 6, %v2278
        %v2280 = vrot.slane %v1494, %v2279
        %v2313 = vunpack.c.l.b16 %v2245
        %v2314 = vunpack.c.l.b16 %v2246
        %v2315 = vunpack.c.l.b16 %v2247
        %v2316 = vunpack.c.l.b16 %v2248
        %v2317 = vunpack.c.l.b16 %v2249
        %v2318 = vunpack.c.l.b16 %v2250
        %v2319 = vunpack.c.l.b16 %v2251
        %v2320 = vunpack.c.l.b16 %v2252
        %v2321 = vunpack.c.l.b16 %v2253
        %v2322 = vunpack.c.l.b16 %v2254
        %v2323 = vunpack.c.l.b16 %v2255
        %v2324 = vunpack.c.l.b16 %v2256
        %v2325 = vunpack.c.l.b16 %v2257
        %v2326 = vunpack.c.l.b16 %v2258
        %v2327 = vunpack.c.l.b16 %v2259
        %v2328 = vunpack.c.l.b16 %v2260
        %v2329 = vunpack.c.l.b16 %v2261
        %v2330 = vunpack.c.l.b16 %v2262
        %v2331 = vunpack.c.l.b16 %v2263
        %v2332 = vunpack.c.l.b16 %v2264
        %v2333 = vunpack.c.l.b16 %v2265
        %v2334 = vunpack.c.l.b16 %v2266
        %v2335 = vunpack.c.l.b16 %v2267
        %v2336 = vunpack.c.l.b16 %v2268
        %v2337 = vunpack.c.l.b16 %v2269
        %v2338 = vunpack.c.l.b16 %v2270
        %v2339 = vunpack.c.l.b16 %v2271
        %v2340 = vunpack.c.l.b16 %v2272
        %v2341 = vunpack.c.l.b16 %v2273
        %v2342 = vunpack.c.l.b16 %v2274
        %v2343 = vunpack.c.l.b16 %v2275
        %v2344 = vunpack.c.l.b16 %v2276
        %v2345 = vpack.c.b16 %v2314, %v2313
        %v2346 = vpack.c.b16 %v2316, %v2315
        %v2347 = vpack.c.b16 %v2318, %v2317
        %v2348 = vpack.c.b16 %v2320, %v2319
        %v2349 = vpack.c.b16 %v2322, %v2321
        %v2350 = vpack.c.b16 %v2324, %v2323
        %v2351 = vpack.c.b16 %v2326, %v2325
        %v2352 = vpack.c.b16 %v2328, %v2327
        %v2353 = vpack.c.b16 %v2330, %v2329
        %v2354 = vpack.c.b16 %v2332, %v2331
        %v2355 = vpack.c.b16 %v2334, %v2333
        %v2356 = vpack.c.b16 %v2336, %v2335
        %v2357 = vpack.c.b16 %v2338, %v2337
        %v2358 = vpack.c.b16 %v2340, %v2339
        %v2359 = vpack.c.b16 %v2342, %v2341
        %v2360 = vpack.c.b16 %v2344, %v2343
        %2377 = vmatprep.subr.bf16.mxu0 0
        %2378 = vmatpush1.bf16.msra.mxu0 %v2345
        %2379 = vmatprep.subr.bf16.mxu0 0
        %2380 = vmatpush1.bf16.msra.mxu0 %v2346
        %2381 = vmatprep.subr.bf16.mxu0 0
        %2382 = vmatpush1.bf16.msra.mxu0 %v2347
        %2383 = vmatprep.subr.bf16.mxu0 0
        %2384 = vmatpush1.bf16.msra.mxu0 %v2348
        %2385 = vmatprep.subr.bf16.mxu0 0
        %2386 = vmatpush1.bf16.msra.mxu0 %v2349
        %2387 = vmatprep.subr.bf16.mxu0 0
        %2388 = vmatpush1.bf16.msra.mxu0 %v2350
        %2389 = vmatprep.subr.bf16.mxu0 0
        %2390 = vmatpush1.bf16.msra.mxu0 %v2351
        %2391 = vmatprep.subr.bf16.mxu0 0
        %2392 = vmatpush1.bf16.msra.mxu0 %v2352
        %2393 = vmatprep.subr.bf16.mxu0 0
        %2394 = vmatpush1.bf16.msra.mxu0 %v2353
        %2395 = vmatprep.subr.bf16.mxu0 0
        %2396 = vmatpush1.bf16.msra.mxu0 %v2354
        %2397 = vmatprep.subr.bf16.mxu0 0
        %2398 = vmatpush1.bf16.msra.mxu0 %v2355
        %2399 = vmatprep.subr.bf16.mxu0 0
        %2400 = vmatpush1.bf16.msra.mxu0 %v2356
        %2401 = vmatprep.subr.bf16.mxu0 0
        %2402 = vmatpush1.bf16.msra.mxu0 %v2357
        %2403 = vmatprep.subr.bf16.mxu0 0
        %2404 = vmatpush1.bf16.msra.mxu0 %v2358
        %2405 = vmatprep.subr.bf16.mxu0 0
        %2406 = vmatpush1.bf16.msra.mxu0 %v2359
        %2407 = vmatprep.subr.bf16.mxu0 0
        %2408 = vmatpush1.bf16.msra.mxu0 %v2360
        %2409 = vmatprep.mubr.bf16.mxu0 %v2243
        %2410 = vmatmul.mubr.bf16.gmra.mrb[0].mxu0 %v2242
        %v2411 = vpop.f32.mrb[0].mxu0
        %v2412 = vadd.f32 %v2280, %v2411
        %v2413 = vpop.f32.mrb[0].mxu0
        %v2414 = vpop.f32.mrb[0].mxu0
        %v2415 = vpop.f32.mrb[0].mxu0
        %2416 = vdwg.mxu0
        %v2417 = vlaneseq
        %v2418 = vshrl.u32 %v2417, 7
        %v2419 = vsub.s32 7, %v2418
        %v2420 = vrot.slane %v1494, %v2419
        %v2421 = vmul.f32 %v2412, %v2420
        %v2422 = vadd.f32 %v2421, %v1989
        %v2423 = vld [vmem:[%s10] sm:$0x3]
        %vm2424 = vcmask 516096
        %v2425 = vsel %vm2424, %v2422, 0.0
        %2426 = vadd.xlane.f32.xlu0 %v2425
        %v2427 = vpop.xlane.xlu0 %2426
        %v2428 = vmul.f32 %v2427, %v571
        %v2429 = vsub.f32 %v2422, %v2428
        %v2430 = vmul.f32 %v2429, %v2429
        %v2431 = vsel %vm2424, %v2430, 0.0
        %2432 = vadd.xlane.f32.xlu0 %v2431
        %v2433 = vpop.xlane.xlu0 %2432
        %v2434 = vmul.f32 %v2433, %v571
        %v2435 = vadd.f32 %v2434, 1e-06
        %v2436 = vrsqrt.pop %v2435
        %v2437 = vmul.f32 %v2429, %v2436
        %v2438 = vmul.f32 %v2437, %v2423
        %v2440 = vrot.slane %v2423, 1
        %v2442 = vadd.f32 %v2438, %v2440
        %v2443 = vpack.c.bf16 %v2442, %v2442
        %v2444 = vld [vmem:[%s11] sm:$0xf]
        %v2445 = vld [vmem:[%s11 + $0x4] sm:$0xf]
        %v2446 = vld [vmem:[%s11 + $0x8] sm:$0xf]
        %v2447 = vld [vmem:[%s11 + $0xc] sm:$0xf]
        %v2448 = vld [vmem:[%s11 + $0x10] sm:$0xf]
        %v2449 = vld [vmem:[%s11 + $0x14] sm:$0xf]
        %v2450 = vld [vmem:[%s11 + $0x18] sm:$0xf]
        %v2451 = vld [vmem:[%s11 + $0x1c] sm:$0xf]
        %v2460 = vunpack.c.l.b16 %v2444
        %v2461 = vunpack.c.l.b16 %v2445
        %v2462 = vunpack.c.l.b16 %v2446
        %v2463 = vunpack.c.l.b16 %v2447
        %v2464 = vunpack.c.l.b16 %v2448
        %v2465 = vunpack.c.l.b16 %v2449
        %v2466 = vunpack.c.l.b16 %v2450
        %v2467 = vunpack.c.l.b16 %v2451
        %v2468 = vpack.c.b16 %v2461, %v2460
        %v2469 = vpack.c.b16 %v2463, %v2462
        %v2470 = vpack.c.b16 %v2465, %v2464
        %v2471 = vpack.c.b16 %v2467, %v2466
        %v2477 = vsel %vm516, %v2443, 0
        %2479 = vmatprep.subr.bf16.mxu0 0
        %2480 = vmatpush1.bf16.msra.mxu0 %v2468
        %2481 = vmatprep.subr.bf16.mxu0 0
        %2482 = vmatpush1.bf16.msra.mxu0 %v2469
        %2483 = vmatprep.subr.bf16.mxu0 0
        %2484 = vmatpush1.bf16.msra.mxu0 %v2470
        %2485 = vmatprep.subr.bf16.mxu0 0
        %2486 = vmatpush1.bf16.msra.mxu0 %v2471
        %2487 = vmatprep.subr.bf16.mxu0 0
        %2488 = vmatpush1.bf16.msra.mxu0 0
        %2489 = vmatprep.subr.bf16.mxu0 0
        %2490 = vmatpush1.bf16.msra.mxu0 0
        %2491 = vmatprep.subr.bf16.mxu0 0
        %2492 = vmatpush1.bf16.msra.mxu0 0
        %2493 = vmatprep.subr.bf16.mxu0 0
        %2494 = vmatpush1.bf16.msra.mxu0 0
        %2495 = vmatprep.subr.bf16.mxu0 0
        %2496 = vmatpush1.bf16.msra.mxu0 0
        %2497 = vmatprep.subr.bf16.mxu0 0
        %2498 = vmatpush1.bf16.msra.mxu0 0
        %2499 = vmatprep.subr.bf16.mxu0 0
        %2500 = vmatpush1.bf16.msra.mxu0 0
        %2501 = vmatprep.subr.bf16.mxu0 0
        %2502 = vmatpush1.bf16.msra.mxu0 0
        %2503 = vmatprep.subr.bf16.mxu0 0
        %2504 = vmatpush1.bf16.msra.mxu0 0
        %2505 = vmatprep.subr.bf16.mxu0 0
        %2506 = vmatpush1.bf16.msra.mxu0 0
        %2507 = vmatprep.subr.bf16.mxu0 0
        %2508 = vmatpush1.bf16.msra.mxu0 0
        %2509 = vmatprep.subr.bf16.mxu0 0
        %2510 = vmatpush1.bf16.msra.mxu0 0
        %2511 = vmatprep.mubr.bf16.mxu0 0
        %2512 = vmatmul.mubr.bf16.gmra.mrb[0].mxu0 %v2477
        %v2513 = vpop.f32.mrb[0].mxu0
        %v2514 = vadd.f32 0.0, %v2513
        %v2515 = vpop.f32.mrb[0].mxu0
        %v2516 = vpop.f32.mrb[0].mxu0
        %v2517 = vpop.f32.mrb[0].mxu0
        %2518 = vdwg.mxu0
        %2519 = vst [vmem:[%s405] sm:$0x1] %v2514
        %s2520 = sand.u32 %s291, 1
        %s2521 = scalar_lea.sflag [#allocation3], %s2520
        %s2522 = sand.u32 %s291, 1
        %s2523 = scalar_lea.vmem [#allocation2], %s2522
        // Predicated region
        $region69: #{dinov2_forward.1} parent=67 // pred_check
          %p2524 = pneg %p301
        $region70: #{dinov2_forward.1} parent=67 // pred_check_branch
          %2526 = sbr.rel (%p2524) target = $region72
        $region71: #{dinov2_forward.1} parent=67 // pred_region
          %s2528 = ssub.s32 16, 16
          %2529 = vsyncadd %s2521, %s2528
          %s2530 = smul.addr %s26, 16
          %s2531 = scalar_lea.hbm %s12, %s2530
          %s2533 = sshll.u32 %s2523, 4
          %s2534 = int_to_ptr.vmem [resolvable:$true] %s2533
          %2536 = dma.vmem_to_hbm [thread:$0]  %s2534, 16, %s2531, %s2521
        $region72: #{dinov2_forward.1} parent=67 // pred_fallthru
          _
      $region68: #{dinov2_forward.1} parent=5 // pred_fallthru
        _
      %p2537 = scmp.le.s32.totalorder 2, %s21
      // Predicated region
      $region73: #{dinov2_forward.1} parent=5 // pred_check
        %p2538 = pneg %p2537
      $region74: #{dinov2_forward.1} parent=5 // pred_check_branch
        %2540 = sbr.rel (%p2538) target = $region76
      $region75: #{dinov2_forward.1} parent=5 // pred_region
        %s2541 = ssub.s32 %s21, 2
        // Predicated region
        $region77: #{dinov2_forward.1} parent=75 // pred_check
          %p2542 = pneg %p307
        $region78: #{dinov2_forward.1} parent=75 // pred_check_branch
          %2544 = sbr.rel (%p2542) target = $region80
        $region79: #{dinov2_forward.1} parent=75 // pred_region
          %s2545 = sand.u32 %s292, 1
          %s2546 = scalar_lea.sflag [#allocation3], %s2545
          %s2547 = sand.u32 %s292, 1
          %s2548 = scalar_lea.vmem [#allocation2], %s2547
          %2549 = dma.done %s2546, 16
        $region80: #{dinov2_forward.1} parent=75 // pred_fallthru
          _
      $region76: #{dinov2_forward.1} parent=5 // pred_fallthru
        _
    $region6: #{dinov2_forward.1} parent=1 // loop_footer
      %s25 = sadd.s32 1, %s21
    $region7: #{dinov2_forward.1} parent=1 // loop_footer_branch
      %20 = sbr.rel target = $region3
    $region8: #{dinov2_forward.1} parent=1 // loop_exit
      _
    %2550 = vsyncpa [#allocation3], 1
    %s2551 = scalar_lea.sflag [#allocation3], 1
    %2552 = vsyncpa %s2551, 1

</llo_original>
